<compile_context>
chip_gen: v7x
topology: tpu7x:2x2x1
jax: 0.10.0
libtpu: 0.0.40
codegen_flags: <defaults>
</compile_context>

<pallas_src>
import jax
import jax.numpy as jnp
from jax.experimental import pallas as pl
from jax.experimental.pallas import tpu as pltpu

N_INPUT = 784
N_H1 = 1024
N_H2 = 512
N_H3 = 512
N_H4 = 512
N_OUTPUT = 10

N_OUTPUT_PAD = 128   # lane-dense output store; padded lanes masked via b5 bias
NEG_BIG = -1e30      # bf16-representable "minus infinity" baked into padded b5 lanes


def _round_up(x, m):
    return (x + m - 1) // m * m


def _dmlp_kernel(x_ref,
                 w1_ref, b1_ref, w2_ref, b2_ref, w3_ref, b3_ref,
                 w4_ref, b4_ref, w5_ref, b5_ref,
                 out_ref):
    def layer(h_bf16, w_ref, b_ref):
        acc = jnp.dot(h_bf16, w_ref[...], preferred_element_type=jnp.float32)
        acc = acc + b_ref[...].astype(jnp.float32)
        return jnp.maximum(acc, 0.0).astype(jnp.bfloat16)

    h = x_ref[...].astype(jnp.bfloat16)   # in-kernel cast; no wrapper-side pad/cast pass
    h = layer(h, w1_ref, b1_ref)          # fc1 + ReLU  (K = 784, Mosaic masks lanes)
    h = layer(h, w2_ref, b2_ref)          # fc2 + ReLU
    h = layer(h, w3_ref, b3_ref)          # fc3 + ReLU
    h = layer(h, w4_ref, b4_ref)          # fc4 + ReLU

    # fc5 + Softmax(dim=1). Lanes 10..127 carry a -1e30 bias (mask baked into b5),
    # so no iota/where epilogue is needed.
    logits = jnp.dot(h, w5_ref[...], preferred_element_type=jnp.float32)
    logits = logits + b5_ref[...].astype(jnp.float32)

    m = jnp.max(logits, axis=-1, keepdims=True)
    e = jnp.exp(logits - m)
    denom = jnp.sum(e, axis=-1, keepdims=True)
    out_ref[...] = e * pl.reciprocal(denom, approx=True)


def prepare_params(params_f32):
    """Pad w5/b5 output dim 10->128 (b5 pad value = -1e30 -> softmax mask) and cast to bf16."""
    w1, b1, w2, b2, w3, b3, w4, b4, w5, b5 = params_f32
    w5 = jnp.pad(w5, ((0, 0), (0, N_OUTPUT_PAD - N_OUTPUT)))
    b5 = jnp.pad(b5, ((0, 0), (0, N_OUTPUT_PAD - N_OUTPUT)), constant_values=NEG_BIG)
    prepped = [w1, b1, w2, b2, w3, b3, w4, b4, w5, b5]
    return [p.astype(jnp.bfloat16) for p in prepped]


def _pick_batch_tile(b_rows):
    """b_rows: batch already rounded up to 16."""
    if b_rows <= 256:
        return b_rows                                   # single small tile
    # Large batch: 256..1024 rows per tile, >= 2 grid steps so v7x's two
    # TensorCores both get work on the "parallel" batch axis.
    half = _round_up((b_rows + 1) // 2, 16)
    return int(min(1024, max(256, half)))


def dmlp_forward(x, params):
    """x: (B, 784) float32; params: output of prepare_params (bf16, w5/b5 lane-padded)."""
    B = x.shape[0]
    b_rows = _round_up(B, 16)
    b_tile = _pick_batch_tile(b_rows)
    b_pad = _round_up(b_rows, b_tile)
    if b_pad != B:
        x = jnp.pad(x, ((0, b_pad - B), (0, 0)))        # batch-only pad, stays f32

    # Batch-tiled activations; weights/biases stay VMEM-resident (constant block
    # index) and are single-buffered to free ~4 MiB of VMEM.
    resident = pl.Buffered(buffer_count=1)
    in_specs = [pl.BlockSpec((b_tile, N_INPUT), lambda i: (i, 0))]
    for p in params:
        in_specs.append(pl.BlockSpec(p.shape, lambda i: (0, 0), pipeline_mode=resident))
    out_spec = pl.BlockSpec((b_tile, N_OUTPUT_PAD), lambda i: (i, 0))

    flops = 2 * b_pad * (N_INPUT * N_H1 + N_H1 * N_H2 + N_H2 * N_H3
                         + N_H3 * N_H4 + N_H4 * N_OUTPUT_PAD)
    param_bytes = sum(int(p.size) * p.dtype.itemsize for p in params)
    bytes_accessed = param_bytes + b_pad * N_INPUT * 4 + b_pad * N_OUTPUT_PAD * 4

    out = pl.pallas_call(
        _dmlp_kernel,
        out_shape=jax.ShapeDtypeStruct((b_pad, N_OUTPUT_PAD), jnp.float32),
        grid=(b_pad // b_tile,),
        in_specs=in_specs,
        out_specs=out_spec,
        compiler_params=pltpu.CompilerParams(
            dimension_semantics=("parallel",),
            vmem_limit_bytes=32 * 1024 * 1024,   # fits v7x (64 MiB physical) too
        ),
        cost_estimate=pl.CostEstimate(
            flops=flops,
            transcendentals=b_pad * N_OUTPUT_PAD,
            bytes_accessed=bytes_accessed,
        ),
    )(x, *params)

    return out[:B, :N_OUTPUT]


def init_params(key):
    """nn.Linear-style init U(-1/sqrt(fan_in), 1/sqrt(fan_in)); weights stored (in, out)."""
    dims = [(N_INPUT, N_H1), (N_H1, N_H2), (N_H2, N_H3), (N_H3, N_H4), (N_H4, N_OUTPUT)]
    params = []
    for fan_in, fan_out in dims:
        key, kw, kb = jax.random.split(key, 3)
        bound = 1.0 / jnp.sqrt(float(fan_in))
        w = jax.random.uniform(kw, (fan_in, fan_out), jnp.float32, -bound, bound)
        b = jax.random.uniform(kb, (1, fan_out), jnp.float32, -bound, bound)
        params += [w, b]
    return params


def reference_forward(x, params_f32):
    """Pure-JAX reference emulating the kernel's bf16 weight/activation quantization."""
    h = x.astype(jnp.bfloat16)
    for i in range(4):
        w = params_f32[2 * i].astype(jnp.bfloat16)
        b = params_f32[2 * i + 1].astype(jnp.bfloat16).astype(jnp.float32)
        h = jnp.dot(h, w, preferred_element_type=jnp.float32) + b
        h = jnp.maximum(h, 0.0).astype(jnp.bfloat16)
    w5 = params_f32[8].astype(jnp.bfloat16)
    b5 = params_f32[9].astype(jnp.bfloat16).astype(jnp.float32)
    logits = jnp.dot(h, w5, preferred_element_type=jnp.float32) + b5
    return jax.nn.softmax(logits, axis=1)


if __name__ == "__main__":
    key = jax.random.PRNGKey(0)
    key, kx = jax.random.split(key)
    B = 8
    x = jax.random.normal(kx, (B, N_INPUT), jnp.float32)
    params = init_params(key)
    kernel_params = prepare_params(params)

    out = dmlp_forward(x, kernel_params)
    out = jax.block_until_ready(out)

    ref = reference_forward(x, params)

    assert out.shape == (B, N_OUTPUT)
    assert jnp.allclose(jnp.sum(out, axis=1), 1.0, atol=1e-2)
    assert jnp.allclose(out, ref, atol=1e-2), float(jnp.max(jnp.abs(out - ref)))

    print("KERNEL_OK")
</pallas_src>

<mosaic_0001>
module attributes {stable_mosaic.version = 11 : i64} {
  func.func @_dmlp_kernel(%arg0: i32, %arg1: memref<16x784xf32, #tpu.memory_space<vmem>>, %arg2: memref<784x1024xbf16, #tpu.memory_space<vmem>>, %arg3: memref<1x1024xbf16, #tpu.memory_space<vmem>>, %arg4: memref<1024x512xbf16, #tpu.memory_space<vmem>>, %arg5: memref<1x512xbf16, #tpu.memory_space<vmem>>, %arg6: memref<512x512xbf16, #tpu.memory_space<vmem>>, %arg7: memref<1x512xbf16, #tpu.memory_space<vmem>>, %arg8: memref<512x512xbf16, #tpu.memory_space<vmem>>, %arg9: memref<1x512xbf16, #tpu.memory_space<vmem>>, %arg10: memref<512x128xbf16, #tpu.memory_space<vmem>>, %arg11: memref<1x128xbf16, #tpu.memory_space<vmem>>, %arg12: memref<16x128xf32, #tpu.memory_space<vmem>>) attributes {dimension_semantics = [#tpu.dimension_semantics<parallel>], iteration_bounds = array<i64: 1>, scalar_prefetch = 0 : i64, scratch_operands = 0 : i64, tpu.core_type = #tpu.core_type<tc>, window_params = [{transform_indices = @transform_0, window_bounds = array<i64: 16, 784>}, {pipeline_mode = #tpu.pipeline_mode<synchronous>, transform_indices = @transform_1, window_bounds = array<i64: 784, 1024>}, {pipeline_mode = #tpu.pipeline_mode<synchronous>, transform_indices = @transform_2, window_bounds = array<i64: 1, 1024>}, {pipeline_mode = #tpu.pipeline_mode<synchronous>, transform_indices = @transform_3, window_bounds = array<i64: 1024, 512>}, {pipeline_mode = #tpu.pipeline_mode<synchronous>, transform_indices = @transform_4, window_bounds = array<i64: 1, 512>}, {pipeline_mode = #tpu.pipeline_mode<synchronous>, transform_indices = @transform_5, window_bounds = array<i64: 512, 512>}, {pipeline_mode = #tpu.pipeline_mode<synchronous>, transform_indices = @transform_6, window_bounds = array<i64: 1, 512>}, {pipeline_mode = #tpu.pipeline_mode<synchronous>, transform_indices = @transform_7, window_bounds = array<i64: 512, 512>}, {pipeline_mode = #tpu.pipeline_mode<synchronous>, transform_indices = @transform_8, window_bounds = array<i64: 1, 512>}, {pipeline_mode = #tpu.pipeline_mode<synchronous>, transform_indices = @transform_9, window_bounds = array<i64: 512, 128>}, {pipeline_mode = #tpu.pipeline_mode<synchronous>, transform_indices = @transform_10, window_bounds = array<i64: 1, 128>}, {transform_indices = @transform_11, window_bounds = array<i64: 16, 128>}]} {
    %c0 = arith.constant 0 : index
    %c0_0 = arith.constant 0 : index
    %0 = vector.load %arg1[%c0, %c0_0] : memref<16x784xf32, #tpu.memory_space<vmem>>, vector<16x784xf32>
    %1 = arith.truncf %0 : vector<16x784xf32> to vector<16x784xbf16>
    %c0_1 = arith.constant 0 : index
    %c0_2 = arith.constant 0 : index
    %2 = vector.load %arg2[%c0_1, %c0_2] : memref<784x1024xbf16, #tpu.memory_space<vmem>>, vector<784x1024xbf16>
    %cst = arith.constant dense<0.000000e+00> : vector<16x1024xf32>
    %3 = tpu.matmul %1, %2, %cst {dimension_numbers = #tpu.dot_dimension_numbers<[1], [0], [0], [1], [0, 0, 1, 1], [], []>} : vector<16x784xbf16>, vector<784x1024xbf16>, vector<16x1024xf32> -> vector<16x1024xf32>
    %c0_3 = arith.constant 0 : index
    %c0_4 = arith.constant 0 : index
    %4 = vector.load %arg3[%c0_3, %c0_4] : memref<1x1024xbf16, #tpu.memory_space<vmem>>, vector<1x1024xbf16>
    %5 = arith.extf %4 : vector<1x1024xbf16> to vector<1x1024xf32>
    %6 = vector.broadcast %5 : vector<1x1024xf32> to vector<16x1024xf32>
    %7 = arith.addf %3, %6 : vector<16x1024xf32>
    %cst_5 = arith.constant 0.000000e+00 : f32
    %8 = vector.broadcast %cst_5 : f32 to vector<16x1024xf32>
    %9 = arith.maximumf %7, %8 : vector<16x1024xf32>
    %10 = arith.truncf %9 : vector<16x1024xf32> to vector<16x1024xbf16>
    %c0_6 = arith.constant 0 : index
    %c0_7 = arith.constant 0 : index
    %11 = vector.load %arg4[%c0_6, %c0_7] : memref<1024x512xbf16, #tpu.memory_space<vmem>>, vector<1024x512xbf16>
    %cst_8 = arith.constant dense<0.000000e+00> : vector<16x512xf32>
    %12 = tpu.matmul %10, %11, %cst_8 {dimension_numbers = #tpu.dot_dimension_numbers<[1], [0], [0], [1], [0, 0, 1, 1], [], []>} : vector<16x1024xbf16>, vector<1024x512xbf16>, vector<16x512xf32> -> vector<16x512xf32>
    %c0_9 = arith.constant 0 : index
    %c0_10 = arith.constant 0 : index
    %13 = vector.load %arg5[%c0_9, %c0_10] : memref<1x512xbf16, #tpu.memory_space<vmem>>, vector<1x512xbf16>
    %14 = arith.extf %13 : vector<1x512xbf16> to vector<1x512xf32>
    %15 = vector.broadcast %14 : vector<1x512xf32> to vector<16x512xf32>
    %16 = arith.addf %12, %15 : vector<16x512xf32>
    %cst_11 = arith.constant 0.000000e+00 : f32
    %17 = vector.broadcast %cst_11 : f32 to vector<16x512xf32>
    %18 = arith.maximumf %16, %17 : vector<16x512xf32>
    %19 = arith.truncf %18 : vector<16x512xf32> to vector<16x512xbf16>
    %c0_12 = arith.constant 0 : index
    %c0_13 = arith.constant 0 : index
    %20 = vector.load %arg6[%c0_12, %c0_13] : memref<512x512xbf16, #tpu.memory_space<vmem>>, vector<512x512xbf16>
    %cst_14 = arith.constant dense<0.000000e+00> : vector<16x512xf32>
    %21 = tpu.matmul %19, %20, %cst_14 {dimension_numbers = #tpu.dot_dimension_numbers<[1], [0], [0], [1], [0, 0, 1, 1], [], []>} : vector<16x512xbf16>, vector<512x512xbf16>, vector<16x512xf32> -> vector<16x512xf32>
    %c0_15 = arith.constant 0 : index
    %c0_16 = arith.constant 0 : index
    %22 = vector.load %arg7[%c0_15, %c0_16] : memref<1x512xbf16, #tpu.memory_space<vmem>>, vector<1x512xbf16>
    %23 = arith.extf %22 : vector<1x512xbf16> to vector<1x512xf32>
    %24 = vector.broadcast %23 : vector<1x512xf32> to vector<16x512xf32>
    %25 = arith.addf %21, %24 : vector<16x512xf32>
    %cst_17 = arith.constant 0.000000e+00 : f32
    %26 = vector.broadcast %cst_17 : f32 to vector<16x512xf32>
    %27 = arith.maximumf %25, %26 : vector<16x512xf32>
    %28 = arith.truncf %27 : vector<16x512xf32> to vector<16x512xbf16>
    %c0_18 = arith.constant 0 : index
    %c0_19 = arith.constant 0 : index
    %29 = vector.load %arg8[%c0_18, %c0_19] : memref<512x512xbf16, #tpu.memory_space<vmem>>, vector<512x512xbf16>
    %cst_20 = arith.constant dense<0.000000e+00> : vector<16x512xf32>
    %30 = tpu.matmul %28, %29, %cst_20 {dimension_numbers = #tpu.dot_dimension_numbers<[1], [0], [0], [1], [0, 0, 1, 1], [], []>} : vector<16x512xbf16>, vector<512x512xbf16>, vector<16x512xf32> -> vector<16x512xf32>
    %c0_21 = arith.constant 0 : index
    %c0_22 = arith.constant 0 : index
    %31 = vector.load %arg9[%c0_21, %c0_22] : memref<1x512xbf16, #tpu.memory_space<vmem>>, vector<1x512xbf16>
    %32 = arith.extf %31 : vector<1x512xbf16> to vector<1x512xf32>
    %33 = vector.broadcast %32 : vector<1x512xf32> to vector<16x512xf32>
    %34 = arith.addf %30, %33 : vector<16x512xf32>
    %cst_23 = arith.constant 0.000000e+00 : f32
    %35 = vector.broadcast %cst_23 : f32 to vector<16x512xf32>
    %36 = arith.maximumf %34, %35 : vector<16x512xf32>
    %37 = arith.truncf %36 : vector<16x512xf32> to vector<16x512xbf16>
    %c0_24 = arith.constant 0 : index
    %c0_25 = arith.constant 0 : index
    %38 = vector.load %arg10[%c0_24, %c0_25] : memref<512x128xbf16, #tpu.memory_space<vmem>>, vector<512x128xbf16>
    %cst_26 = arith.constant dense<0.000000e+00> : vector<16x128xf32>
    %39 = tpu.matmul %37, %38, %cst_26 {dimension_numbers = #tpu.dot_dimension_numbers<[1], [0], [0], [1], [0, 0, 1, 1], [], []>} : vector<16x512xbf16>, vector<512x128xbf16>, vector<16x128xf32> -> vector<16x128xf32>
    %c0_27 = arith.constant 0 : index
    %c0_28 = arith.constant 0 : index
    %40 = vector.load %arg11[%c0_27, %c0_28] : memref<1x128xbf16, #tpu.memory_space<vmem>>, vector<1x128xbf16>
    %41 = arith.extf %40 : vector<1x128xbf16> to vector<1x128xf32>
    %42 = vector.broadcast %41 : vector<1x128xf32> to vector<16x128xf32>
    %43 = arith.addf %39, %42 : vector<16x128xf32>
    %cst_29 = arith.constant dense<0xFF800000> : vector<16xf32>
    %44 = vector.multi_reduction <maximumf>, %43, %cst_29 [1] : vector<16x128xf32> to vector<16xf32>
    %45 = vector.shape_cast %44 : vector<16xf32> to vector<16x1xf32>
    %46 = vector.broadcast %45 : vector<16x1xf32> to vector<16x128xf32>
    %47 = arith.subf %43, %46 : vector<16x128xf32>
    %48 = math.exp %47 : vector<16x128xf32>
    %cst_30 = arith.constant dense<0.000000e+00> : vector<16xf32>
    %49 = vector.multi_reduction <add>, %48, %cst_30 [1] : vector<16x128xf32> to vector<16xf32>
    %50 = vector.shape_cast %49 : vector<16xf32> to vector<16x1xf32>
    %51 = tpu.reciprocal %50 {approx = true} : vector<16x1xf32> -> vector<16x1xf32>
    %52 = vector.broadcast %51 : vector<16x1xf32> to vector<16x128xf32>
    %53 = arith.mulf %48, %52 : vector<16x128xf32>
    %c0_31 = arith.constant 0 : index
    %c0_32 = arith.constant 0 : index
    %54 = vector.load %arg12[%c0_31, %c0_32] : memref<16x128xf32, #tpu.memory_space<vmem>>, vector<16x128xf32>
    tpu.vector_store %arg12[%c0_31, %c0_32], %53 {strides = array<i32>} : memref<16x128xf32, #tpu.memory_space<vmem>>, vector<16x128xf32>,
    return
  }
  func.func @transform_0(%arg0: i32) -> (i32, i32) {
    %c0_i32 = arith.constant 0 : i32
    %c0_i32_0 = arith.constant 0 : i32
    return %arg0, %c0_i32 : i32, i32
  }
  func.func @transform_1(%arg0: i32) -> (i32, i32) {
    %c0_i32 = arith.constant 0 : i32
    %c0_i32_0 = arith.constant 0 : i32
    %c0_i32_1 = arith.constant 0 : i32
    return %c0_i32, %c0_i32_0 : i32, i32
  }
  func.func @transform_2(%arg0: i32) -> (i32, i32) {
    %c0_i32 = arith.constant 0 : i32
    %c0_i32_0 = arith.constant 0 : i32
    %c0_i32_1 = arith.constant 0 : i32
    return %c0_i32, %c0_i32_0 : i32, i32
  }
  func.func @transform_3(%arg0: i32) -> (i32, i32) {
    %c0_i32 = arith.constant 0 : i32
    %c0_i32_0 = arith.constant 0 : i32
    %c0_i32_1 = arith.constant 0 : i32
    return %c0_i32, %c0_i32_0 : i32, i32
  }
  func.func @transform_4(%arg0: i32) -> (i32, i32) {
    %c0_i32 = arith.constant 0 : i32
    %c0_i32_0 = arith.constant 0 : i32
    %c0_i32_1 = arith.constant 0 : i32
    return %c0_i32, %c0_i32_0 : i32, i32
  }
  func.func @transform_5(%arg0: i32) -> (i32, i32) {
    %c0_i32 = arith.constant 0 : i32
    %c0_i32_0 = arith.constant 0 : i32
    %c0_i32_1 = arith.constant 0 : i32
    return %c0_i32, %c0_i32_0 : i32, i32
  }
  func.func @transform_6(%arg0: i32) -> (i32, i32) {
    %c0_i32 = arith.constant 0 : i32
    %c0_i32_0 = arith.constant 0 : i32
    %c0_i32_1 = arith.constant 0 : i32
    return %c0_i32, %c0_i32_0 : i32, i32
  }
  func.func @transform_7(%arg0: i32) -> (i32, i32) {
    %c0_i32 = arith.constant 0 : i32
    %c0_i32_0 = arith.constant 0 : i32
    %c0_i32_1 = arith.constant 0 : i32
    return %c0_i32, %c0_i32_0 : i32, i32
  }
  func.func @transform_8(%arg0: i32) -> (i32, i32) {
    %c0_i32 = arith.constant 0 : i32
    %c0_i32_0 = arith.constant 0 : i32
    %c0_i32_1 = arith.constant 0 : i32
    return %c0_i32, %c0_i32_0 : i32, i32
  }
  func.func @transform_9(%arg0: i32) -> (i32, i32) {
    %c0_i32 = arith.constant 0 : i32
    %c0_i32_0 = arith.constant 0 : i32
    %c0_i32_1 = arith.constant 0 : i32
    return %c0_i32, %c0_i32_0 : i32, i32
  }
  func.func @transform_10(%arg0: i32) -> (i32, i32) {
    %c0_i32 = arith.constant 0 : i32
    %c0_i32_0 = arith.constant 0 : i32
    %c0_i32_1 = arith.constant 0 : i32
    return %c0_i32, %c0_i32_0 : i32, i32
  }
  func.func @transform_11(%arg0: i32) -> (i32, i32) {
    %c0_i32 = arith.constant 0 : i32
    %c0_i32_0 = arith.constant 0 : i32
    return %arg0, %c0_i32 : i32, i32
  }
}

</mosaic_0001>

<llo_original>
// kernel: tpu_custom_call.1
$region0: #{tpu_custom_call.1}
  #allocation0 [shape = 'u32[]', space=smem, size = 0x4, offset = 0x4, fixed_abs, tag = 'smem constant byte address 0x4 - core index']
  #allocation1 [shape = 'u32[144,128]{1,0:T(1,128)}', space=vmem, size = 0x12000, scoped, tag = 'internal scratch']
  %s0 = inlined_call_operand.hbm [shape: f32[16,784], index: 0, kind: input, shape index: {}]
  %s1 = inlined_call_operand.hbm [shape: bf16[784,1024], index: 1, kind: input, shape index: {}]
  %s2 = inlined_call_operand.hbm [shape: bf16[1,1024], index: 2, kind: input, shape index: {}]
  %s3 = inlined_call_operand.hbm [shape: bf16[1024,512], index: 3, kind: input, shape index: {}]
  %s4 = inlined_call_operand.hbm [shape: bf16[1,512], index: 4, kind: input, shape index: {}]
  %s5 = inlined_call_operand.hbm [shape: bf16[512,512], index: 5, kind: input, shape index: {}]
  %s6 = inlined_call_operand.hbm [shape: bf16[1,512], index: 6, kind: input, shape index: {}]
  %s7 = inlined_call_operand.hbm [shape: bf16[512,512], index: 7, kind: input, shape index: {}]
  %s8 = inlined_call_operand.hbm [shape: bf16[1,512], index: 8, kind: input, shape index: {}]
  %s9 = inlined_call_operand.hbm [shape: bf16[512,128], index: 9, kind: input, shape index: {}]
  %s10 = inlined_call_operand.hbm [shape: bf16[1,128], index: 10, kind: input, shape index: {}]
  %s11 = inlined_call_operand.hbm [shape: f32[16,128], index: 11, kind: output, shape index: {}]
  %s12 = sld [smem:[#allocation0]]
  $region98: #{tpu_custom_call.1} parent=0
    _
  %s14 = ssub.s32 1, %s12
  %s15 = scalar_select 0, %s14, %s12
  $region1: #{tpu_custom_call.1} parent=0
    #allocation2 [shape = 'u8[57344]{0}', space=vmem, size = 0xe000, scoped, tag = 'input window, operand 0, single buffered']
    #allocation3 [shape = 's32[1]{0}', space=sflag, size = 0x4, scoped, tag = 'scoped memory for tpu_custom_call.1']
    #allocation4 [shape = 's32[1]{0}', space=sflag, size = 0x4, scoped, tag = 'scoped memory for tpu_custom_call.1']
    #allocation5 [shape = 'u8[1605632]{0}', space=vmem, size = 0x188000, scoped, tag = 'input window, operand 1, single buffered']
    #allocation6 [shape = 's32[1]{0}', space=sflag, size = 0x4, scoped, tag = 'scoped memory for tpu_custom_call.1']
    #allocation7 [shape = 'u8[4096]{0}', space=vmem, size = 0x1000, scoped, tag = 'input window, operand 2, single buffered']
    #allocation8 [shape = 'u8[1048576]{0}', space=vmem, size = 0x100000, scoped, tag = 'input window, operand 3, single buffered']
    #allocation9 [shape = 's32[1]{0}', space=sflag, size = 0x4, scoped, tag = 'scoped memory for tpu_custom_call.1']
    #allocation10 [shape = 'u8[2048]{0}', space=vmem, size = 0x800, scoped, tag = 'input window, operand 4, single buffered']
    #allocation11 [shape = 'u8[524288]{0}', space=vmem, size = 0x80000, scoped, tag = 'input window, operand 5, single buffered']
    #allocation12 [shape = 's32[1]{0}', space=sflag, size = 0x4, scoped, tag = 'scoped memory for tpu_custom_call.1']
    #allocation13 [shape = 'u8[2048]{0}', space=vmem, size = 0x800, scoped, tag = 'input window, operand 6, single buffered']
    #allocation14 [shape = 'u8[524288]{0}', space=vmem, size = 0x80000, scoped, tag = 'input window, operand 7, single buffered']
    #allocation15 [shape = 's32[1]{0}', space=sflag, size = 0x4, scoped, tag = 'scoped memory for tpu_custom_call.1']
    #allocation16 [shape = 'u8[2048]{0}', space=vmem, size = 0x800, scoped, tag = 'input window, operand 8, single buffered']
    #allocation17 [shape = 'u8[131072]{0}', space=vmem, size = 0x20000, scoped, tag = 'input window, operand 9, single buffered']
    #allocation18 [shape = 's32[1]{0}', space=sflag, size = 0x4, scoped, tag = 'scoped memory for tpu_custom_call.1']
    #allocation19 [shape = 'u8[512]{0}', space=vmem, size = 0x400, scoped, tag = 'input window, operand 10, single buffered']
    #allocation20 [shape = 'u8[8192]{0}', space=vmem, size = 0x2000, scoped, tag = 'output window, operand 0, single buffered']
    %16 = vsyncpa [#allocation3], 0
    %17 = vsyncpa [#allocation6], 0
    %18 = vsyncpa [#allocation9], 0
    %19 = vsyncpa [#allocation12], 0
    %20 = vsyncpa [#allocation15], 0
    %21 = vsyncpa [#allocation18], 0
    %22 = vsyncpa [#allocation4], 0
    // Predicated region
    $region2: #{tpu_custom_call.1} parent=1 // pred_check
      _
    $region3: #{tpu_custom_call.1} parent=1 // pred_check_branch
      %24 = sbr.rel (0) target = $region5
    $region4: #{tpu_custom_call.1} parent=1 // pred_region
      %s26 = ssub.s32 1792, 1792
      %27 = vsyncadd [#allocation3], %s26
      %s28 = sshll.u32 [#allocation2], 4
      %s29 = int_to_ptr.vmem [resolvable:$true] %s28
      %34 = dma.hbm_to_vmem [thread:$0]  %s0, 1792, %s29, [#allocation3], 896, 896, 56
    $region5: #{tpu_custom_call.1} parent=1 // pred_fallthru
      _
    // Predicated region
    $region6: #{tpu_custom_call.1} parent=1 // pred_check
      _
    $region7: #{tpu_custom_call.1} parent=1 // pred_check_branch
      %36 = sbr.rel (0) target = $region9
    $region8: #{tpu_custom_call.1} parent=1 // pred_region
      %s38 = ssub.s32 50176, 50176
      %39 = vsyncadd [#allocation6], %s38
      %s40 = sshll.u32 [#allocation5], 4
      %s41 = int_to_ptr.vmem [resolvable:$true] %s40
      %46 = dma.hbm_to_vmem [thread:$0]  %s1, 50176, %s41, [#allocation6], 512, 512, 32
    $region9: #{tpu_custom_call.1} parent=1 // pred_fallthru
      _
    // Predicated region
    $region10: #{tpu_custom_call.1} parent=1 // pred_check
      _
    $region11: #{tpu_custom_call.1} parent=1 // pred_check_branch
      %48 = sbr.rel (0) target = $region13
    $region12: #{tpu_custom_call.1} parent=1 // pred_region
      %s50 = ssub.s32 128, 128
      %51 = vsyncadd [#allocation6], %s50
      %s53 = sshll.u32 [#allocation7], 4
      %s54 = int_to_ptr.vmem [resolvable:$true] %s53
      %56 = dma.hbm_to_vmem [thread:$0]  %s2, 128, %s54, [#allocation6]
    $region13: #{tpu_custom_call.1} parent=1 // pred_fallthru
      _
    // Predicated region
    $region14: #{tpu_custom_call.1} parent=1 // pred_check
      _
    $region15: #{tpu_custom_call.1} parent=1 // pred_check_branch
      %58 = sbr.rel (0) target = $region17
    $region16: #{tpu_custom_call.1} parent=1 // pred_region
      %s60 = ssub.s32 32768, 32768
      %61 = vsyncadd [#allocation9], %s60
      %s62 = sshll.u32 [#allocation8], 4
      %s63 = int_to_ptr.vmem [resolvable:$true] %s62
      %68 = dma.hbm_to_vmem [thread:$0]  %s3, 32768, %s63, [#allocation9], 256, 256, 16
    $region17: #{tpu_custom_call.1} parent=1 // pred_fallthru
      _
    // Predicated region
    $region18: #{tpu_custom_call.1} parent=1 // pred_check
      _
    $region19: #{tpu_custom_call.1} parent=1 // pred_check_branch
      %70 = sbr.rel (0) target = $region21
    $region20: #{tpu_custom_call.1} parent=1 // pred_region
      %s72 = ssub.s32 64, 64
      %73 = vsyncadd [#allocation9], %s72
      %s75 = sshll.u32 [#allocation10], 4
      %s76 = int_to_ptr.vmem [resolvable:$true] %s75
      %78 = dma.hbm_to_vmem [thread:$0]  %s4, 64, %s76, [#allocation9]
    $region21: #{tpu_custom_call.1} parent=1 // pred_fallthru
      _
    // Predicated region
    $region22: #{tpu_custom_call.1} parent=1 // pred_check
      _
    $region23: #{tpu_custom_call.1} parent=1 // pred_check_branch
      %80 = sbr.rel (0) target = $region25
    $region24: #{tpu_custom_call.1} parent=1 // pred_region
      %s82 = ssub.s32 16384, 16384
      %83 = vsyncadd [#allocation12], %s82
      %s84 = sshll.u32 [#allocation11], 4
      %s85 = int_to_ptr.vmem [resolvable:$true] %s84
      %90 = dma.hbm_to_vmem [thread:$0]  %s5, 16384, %s85, [#allocation12], 256, 256, 16
    $region25: #{tpu_custom_call.1} parent=1 // pred_fallthru
      _
    // Predicated region
    $region26: #{tpu_custom_call.1} parent=1 // pred_check
      _
    $region27: #{tpu_custom_call.1} parent=1 // pred_check_branch
      %92 = sbr.rel (0) target = $region29
    $region28: #{tpu_custom_call.1} parent=1 // pred_region
      %s94 = ssub.s32 64, 64
      %95 = vsyncadd [#allocation12], %s94
      %s97 = sshll.u32 [#allocation13], 4
      %s98 = int_to_ptr.vmem [resolvable:$true] %s97
      %100 = dma.hbm_to_vmem [thread:$0]  %s6, 64, %s98, [#allocation12]
    $region29: #{tpu_custom_call.1} parent=1 // pred_fallthru
      _
    // Predicated region
    $region30: #{tpu_custom_call.1} parent=1 // pred_check
      _
    $region31: #{tpu_custom_call.1} parent=1 // pred_check_branch
      %102 = sbr.rel (0) target = $region33
    $region32: #{tpu_custom_call.1} parent=1 // pred_region
      %s104 = ssub.s32 16384, 16384
      %105 = vsyncadd [#allocation15], %s104
      %s106 = sshll.u32 [#allocation14], 4
      %s107 = int_to_ptr.vmem [resolvable:$true] %s106
      %112 = dma.hbm_to_vmem [thread:$0]  %s7, 16384, %s107, [#allocation15], 256, 256, 16
    $region33: #{tpu_custom_call.1} parent=1 // pred_fallthru
      _
    // Predicated region
    $region34: #{tpu_custom_call.1} parent=1 // pred_check
      _
    $region35: #{tpu_custom_call.1} parent=1 // pred_check_branch
      %114 = sbr.rel (0) target = $region37
    $region36: #{tpu_custom_call.1} parent=1 // pred_region
      %s116 = ssub.s32 64, 64
      %117 = vsyncadd [#allocation15], %s116
      %s119 = sshll.u32 [#allocation16], 4
      %s120 = int_to_ptr.vmem [resolvable:$true] %s119
      %122 = dma.hbm_to_vmem [thread:$0]  %s8, 64, %s120, [#allocation15]
    $region37: #{tpu_custom_call.1} parent=1 // pred_fallthru
      _
    // Predicated region
    $region38: #{tpu_custom_call.1} parent=1 // pred_check
      _
    $region39: #{tpu_custom_call.1} parent=1 // pred_check_branch
      %124 = sbr.rel (0) target = $region41
    $region40: #{tpu_custom_call.1} parent=1 // pred_region
      %s126 = ssub.s32 4096, 4096
      %127 = vsyncadd [#allocation18], %s126
      %s128 = sshll.u32 [#allocation17], 4
      %s129 = int_to_ptr.vmem [resolvable:$true] %s128
      %134 = dma.hbm_to_vmem [thread:$0]  %s9, 4096, %s129, [#allocation18], 64, 64, 4
    $region41: #{tpu_custom_call.1} parent=1 // pred_fallthru
      _
    // Predicated region
    $region42: #{tpu_custom_call.1} parent=1 // pred_check
      _
    $region43: #{tpu_custom_call.1} parent=1 // pred_check_branch
      %136 = sbr.rel (0) target = $region45
    $region44: #{tpu_custom_call.1} parent=1 // pred_region
      %s138 = ssub.s32 16, 16
      %139 = vsyncadd [#allocation18], %s138
      %s141 = sshll.u32 [#allocation19], 4
      %s142 = int_to_ptr.vmem [resolvable:$true] %s141
      %144 = dma.hbm_to_vmem [thread:$0]  %s10, 16, %s142, [#allocation18]
    $region45: #{tpu_custom_call.1} parent=1 // pred_fallthru
      _
    // Predicated region
    $region46: #{tpu_custom_call.1} parent=1 // pred_check
      _
    $region47: #{tpu_custom_call.1} parent=1 // pred_check_branch
      %146 = sbr.rel (0) target = $region49
    $region48: #{tpu_custom_call.1} parent=1 // pred_region
      %147 = dma.done [#allocation3], 1792
    $region49: #{tpu_custom_call.1} parent=1 // pred_fallthru
      _
    // Predicated region
    $region50: #{tpu_custom_call.1} parent=1 // pred_check
      _
    $region51: #{tpu_custom_call.1} parent=1 // pred_check_branch
      %149 = sbr.rel (0) target = $region53
    $region52: #{tpu_custom_call.1} parent=1 // pred_region
      %150 = dma.done [#allocation6], 50176
    $region53: #{tpu_custom_call.1} parent=1 // pred_fallthru
      _
    // Predicated region
    $region54: #{tpu_custom_call.1} parent=1 // pred_check
      _
    $region55: #{tpu_custom_call.1} parent=1 // pred_check_branch
      %152 = sbr.rel (0) target = $region57
    $region56: #{tpu_custom_call.1} parent=1 // pred_region
      %153 = dma.done [#allocation6], 128
    $region57: #{tpu_custom_call.1} parent=1 // pred_fallthru
      _
    // Predicated region
    $region58: #{tpu_custom_call.1} parent=1 // pred_check
      _
    $region59: #{tpu_custom_call.1} parent=1 // pred_check_branch
      %155 = sbr.rel (0) target = $region61
    $region60: #{tpu_custom_call.1} parent=1 // pred_region
      %156 = dma.done [#allocation9], 32768
    $region61: #{tpu_custom_call.1} parent=1 // pred_fallthru
      _
    // Predicated region
    $region62: #{tpu_custom_call.1} parent=1 // pred_check
      _
    $region63: #{tpu_custom_call.1} parent=1 // pred_check_branch
      %158 = sbr.rel (0) target = $region65
    $region64: #{tpu_custom_call.1} parent=1 // pred_region
      %159 = dma.done [#allocation9], 64
    $region65: #{tpu_custom_call.1} parent=1 // pred_fallthru
      _
    // Predicated region
    $region66: #{tpu_custom_call.1} parent=1 // pred_check
      _
    $region67: #{tpu_custom_call.1} parent=1 // pred_check_branch
      %161 = sbr.rel (0) target = $region69
    $region68: #{tpu_custom_call.1} parent=1 // pred_region
      %162 = dma.done [#allocation12], 16384
    $region69: #{tpu_custom_call.1} parent=1 // pred_fallthru
      _
    // Predicated region
    $region70: #{tpu_custom_call.1} parent=1 // pred_check
      _
    $region71: #{tpu_custom_call.1} parent=1 // pred_check_branch
      %164 = sbr.rel (0) target = $region73
    $region72: #{tpu_custom_call.1} parent=1 // pred_region
      %165 = dma.done [#allocation12], 64
    $region73: #{tpu_custom_call.1} parent=1 // pred_fallthru
      _
    // Predicated region
    $region74: #{tpu_custom_call.1} parent=1 // pred_check
      _
    $region75: #{tpu_custom_call.1} parent=1 // pred_check_branch
      %167 = sbr.rel (0) target = $region77
    $region76: #{tpu_custom_call.1} parent=1 // pred_region
      %168 = dma.done [#allocation15], 16384
    $region77: #{tpu_custom_call.1} parent=1 // pred_fallthru
      _
    // Predicated region
    $region78: #{tpu_custom_call.1} parent=1 // pred_check
      _
    $region79: #{tpu_custom_call.1} parent=1 // pred_check_branch
      %170 = sbr.rel (0) target = $region81
    $region80: #{tpu_custom_call.1} parent=1 // pred_region
      %171 = dma.done [#allocation15], 64
    $region81: #{tpu_custom_call.1} parent=1 // pred_fallthru
      _
    // Predicated region
    $region82: #{tpu_custom_call.1} parent=1 // pred_check
      _
    $region83: #{tpu_custom_call.1} parent=1 // pred_check_branch
      %173 = sbr.rel (0) target = $region85
    $region84: #{tpu_custom_call.1} parent=1 // pred_region
      %174 = dma.done [#allocation18], 4096
    $region85: #{tpu_custom_call.1} parent=1 // pred_fallthru
      _
    // Predicated region
    $region86: #{tpu_custom_call.1} parent=1 // pred_check
      _
    $region87: #{tpu_custom_call.1} parent=1 // pred_check_branch
      %176 = sbr.rel (0) target = $region89
    $region88: #{tpu_custom_call.1} parent=1 // pred_region
      %177 = dma.done [#allocation18], 16
    $region89: #{tpu_custom_call.1} parent=1 // pred_fallthru
      _
    %v179 = vld [vmem:[#allocation2] sm:$0xff]
    %v180 = vld [vmem:[#allocation2 + $0x8] sm:$0xff]
    %v181 = vld [vmem:[#allocation2 + $0x10] sm:$0xff]
    %v182 = vld [vmem:[#allocation2 + $0x18] sm:$0xff]
    %v183 = vld [vmem:[#allocation2 + $0x20] sm:$0xff]
    %v184 = vld [vmem:[#allocation2 + $0x28] sm:$0xff]
    %v185 = vld [vmem:[#allocation2 + $0x30] sm:$0xff]
    %v186 = vld [vmem:[#allocation2 + $0x38] sm:$0xff]
    %v187 = vld [vmem:[#allocation2 + $0x40] sm:$0xff]
    %v188 = vld [vmem:[#allocation2 + $0x48] sm:$0xff]
    %v189 = vld [vmem:[#allocation2 + $0x50] sm:$0xff]
    %v190 = vld [vmem:[#allocation2 + $0x58] sm:$0xff]
    %v191 = vld [vmem:[#allocation2 + $0x60] sm:$0xff]
    %v192 = vld [vmem:[#allocation2 + $0x68] sm:$0xff]
    %v193 = vpack.c.bf16 %v186, %v179
    %v194 = vpack.c.bf16 %v187, %v180
    %v195 = vpack.c.bf16 %v188, %v181
    %v196 = vpack.c.bf16 %v189, %v182
    %v197 = vpack.c.bf16 %v190, %v183
    %v198 = vpack.c.bf16 %v191, %v184
    %v199 = vpack.c.bf16 %v192, %v185
    %v200 = vld [vmem:[#allocation5] sm:$0xff]
    %v201 = vld [vmem:[#allocation5 + $0x8] sm:$0xff]
    %v202 = vld [vmem:[#allocation5 + $0x10] sm:$0xff]
    %v203 = vld [vmem:[#allocation5 + $0x18] sm:$0xff]
    %v204 = vld [vmem:[#allocation5 + $0x20] sm:$0xff]
    %v205 = vld [vmem:[#allocation5 + $0x28] sm:$0xff]
    %v206 = vld [vmem:[#allocation5 + $0x30] sm:$0xff]
    %v207 = vld [vmem:[#allocation5 + $0x38] sm:$0xff]
    %v208 = vld [vmem:[#allocation5 + $0x40] sm:$0xff]
    %v209 = vld [vmem:[#allocation5 + $0x48] sm:$0xff]
    %v210 = vld [vmem:[#allocation5 + $0x50] sm:$0xff]
    %v211 = vld [vmem:[#allocation5 + $0x58] sm:$0xff]
    %v212 = vld [vmem:[#allocation5 + $0x60] sm:$0xff]
    %v213 = vld [vmem:[#allocation5 + $0x68] sm:$0xff]
    %v214 = vld [vmem:[#allocation5 + $0x70] sm:$0xff]
    %v215 = vld [vmem:[#allocation5 + $0x78] sm:$0xff]
    %v216 = vld [vmem:[#allocation5 + $0x80] sm:$0xff]
    %v217 = vld [vmem:[#allocation5 + $0x88] sm:$0xff]
    %v218 = vld [vmem:[#allocation5 + $0x90] sm:$0xff]
    %v219 = vld [vmem:[#allocation5 + $0x98] sm:$0xff]
    %v220 = vld [vmem:[#allocation5 + $0xa0] sm:$0xff]
    %v221 = vld [vmem:[#allocation5 + $0xa8] sm:$0xff]
    %v222 = vld [vmem:[#allocation5 + $0xb0] sm:$0xff]
    %v223 = vld [vmem:[#allocation5 + $0xb8] sm:$0xff]
    %v224 = vld [vmem:[#allocation5 + $0xc0] sm:$0xff]
    %v225 = vld [vmem:[#allocation5 + $0xc8] sm:$0xff]
    %v226 = vld [vmem:[#allocation5 + $0xd0] sm:$0xff]
    %v227 = vld [vmem:[#allocation5 + $0xd8] sm:$0xff]
    %v228 = vld [vmem:[#allocation5 + $0xe0] sm:$0xff]
    %v229 = vld [vmem:[#allocation5 + $0xe8] sm:$0xff]
    %v230 = vld [vmem:[#allocation5 + $0xf0] sm:$0xff]
    %v231 = vld [vmem:[#allocation5 + $0xf8] sm:$0xff]
    %v232 = vld [vmem:[#allocation5 + $0x100] sm:$0xff]
    %v233 = vld [vmem:[#allocation5 + $0x108] sm:$0xff]
    %v234 = vld [vmem:[#allocation5 + $0x110] sm:$0xff]
    %v235 = vld [vmem:[#allocation5 + $0x118] sm:$0xff]
    %v236 = vld [vmem:[#allocation5 + $0x120] sm:$0xff]
    %v237 = vld [vmem:[#allocation5 + $0x128] sm:$0xff]
    %v238 = vld [vmem:[#allocation5 + $0x130] sm:$0xff]
    %v239 = vld [vmem:[#allocation5 + $0x138] sm:$0xff]
    %v240 = vld [vmem:[#allocation5 + $0x140] sm:$0xff]
    %v241 = vld [vmem:[#allocation5 + $0x148] sm:$0xff]
    %v242 = vld [vmem:[#allocation5 + $0x150] sm:$0xff]
    %v243 = vld [vmem:[#allocation5 + $0x158] sm:$0xff]
    %v244 = vld [vmem:[#allocation5 + $0x160] sm:$0xff]
    %v245 = vld [vmem:[#allocation5 + $0x168] sm:$0xff]
    %v246 = vld [vmem:[#allocation5 + $0x170] sm:$0xff]
    %v247 = vld [vmem:[#allocation5 + $0x178] sm:$0xff]
    %v248 = vld [vmem:[#allocation5 + $0x180] sm:$0xff]
    %v249 = vld [vmem:[#allocation5 + $0x188] sm:$0xff]
    %v250 = vld [vmem:[#allocation5 + $0x190] sm:$0xff]
    %v251 = vld [vmem:[#allocation5 + $0x198] sm:$0xff]
    %v252 = vld [vmem:[#allocation5 + $0x1a0] sm:$0xff]
    %v253 = vld [vmem:[#allocation5 + $0x1a8] sm:$0xff]
    %v254 = vld [vmem:[#allocation5 + $0x1b0] sm:$0xff]
    %v255 = vld [vmem:[#allocation5 + $0x1b8] sm:$0xff]
    %v256 = vld [vmem:[#allocation5 + $0x1c0] sm:$0xff]
    %v257 = vld [vmem:[#allocation5 + $0x1c8] sm:$0xff]
    %v258 = vld [vmem:[#allocation5 + $0x1d0] sm:$0xff]
    %v259 = vld [vmem:[#allocation5 + $0x1d8] sm:$0xff]
    %v260 = vld [vmem:[#allocation5 + $0x1e0] sm:$0xff]
    %v261 = vld [vmem:[#allocation5 + $0x1e8] sm:$0xff]
    %v262 = vld [vmem:[#allocation5 + $0x1f0] sm:$0xff]
    %v263 = vld [vmem:[#allocation5 + $0x1f8] sm:$0xff]
    %v264 = vld [vmem:[#allocation5 + $0x200] sm:$0xff]
    %v265 = vld [vmem:[#allocation5 + $0x208] sm:$0xff]
    %v266 = vld [vmem:[#allocation5 + $0x210] sm:$0xff]
    %v267 = vld [vmem:[#allocation5 + $0x218] sm:$0xff]
    %v268 = vld [vmem:[#allocation5 + $0x220] sm:$0xff]
    %v269 = vld [vmem:[#allocation5 + $0x228] sm:$0xff]
    %v270 = vld [vmem:[#allocation5 + $0x230] sm:$0xff]
    %v271 = vld [vmem:[#allocation5 + $0x238] sm:$0xff]
    %v272 = vld [vmem:[#allocation5 + $0x240] sm:$0xff]
    %v273 = vld [vmem:[#allocation5 + $0x248] sm:$0xff]
    %v274 = vld [vmem:[#allocation5 + $0x250] sm:$0xff]
    %v275 = vld [vmem:[#allocation5 + $0x258] sm:$0xff]
    %v276 = vld [vmem:[#allocation5 + $0x260] sm:$0xff]
    %v277 = vld [vmem:[#allocation5 + $0x268] sm:$0xff]
    %v278 = vld [vmem:[#allocation5 + $0x270] sm:$0xff]
    %v279 = vld [vmem:[#allocation5 + $0x278] sm:$0xff]
    %v280 = vld [vmem:[#allocation5 + $0x280] sm:$0xff]
    %v281 = vld [vmem:[#allocation5 + $0x288] sm:$0xff]
    %v282 = vld [vmem:[#allocation5 + $0x290] sm:$0xff]
    %v283 = vld [vmem:[#allocation5 + $0x298] sm:$0xff]
    %v284 = vld [vmem:[#allocation5 + $0x2a0] sm:$0xff]
    %v285 = vld [vmem:[#allocation5 + $0x2a8] sm:$0xff]
    %v286 = vld [vmem:[#allocation5 + $0x2b0] sm:$0xff]
    %v287 = vld [vmem:[#allocation5 + $0x2b8] sm:$0xff]
    %v288 = vld [vmem:[#allocation5 + $0x2c0] sm:$0xff]
    %v289 = vld [vmem:[#allocation5 + $0x2c8] sm:$0xff]
    %v290 = vld [vmem:[#allocation5 + $0x2d0] sm:$0xff]
    %v291 = vld [vmem:[#allocation5 + $0x2d8] sm:$0xff]
    %v292 = vld [vmem:[#allocation5 + $0x2e0] sm:$0xff]
    %v293 = vld [vmem:[#allocation5 + $0x2e8] sm:$0xff]
    %v294 = vld [vmem:[#allocation5 + $0x2f0] sm:$0xff]
    %v295 = vld [vmem:[#allocation5 + $0x2f8] sm:$0xff]
    %v296 = vld [vmem:[#allocation5 + $0x300] sm:$0xff]
    %v297 = vld [vmem:[#allocation5 + $0x308] sm:$0xff]
    %v298 = vld [vmem:[#allocation5 + $0x310] sm:$0xff]
    %v299 = vld [vmem:[#allocation5 + $0x318] sm:$0xff]
    %v300 = vld [vmem:[#allocation5 + $0x320] sm:$0xff]
    %v301 = vld [vmem:[#allocation5 + $0x328] sm:$0xff]
    %v302 = vld [vmem:[#allocation5 + $0x330] sm:$0xff]
    %v303 = vld [vmem:[#allocation5 + $0x338] sm:$0xff]
    %v304 = vld [vmem:[#allocation5 + $0x340] sm:$0xff]
    %v305 = vld [vmem:[#allocation5 + $0x348] sm:$0xff]
    %v306 = vld [vmem:[#allocation5 + $0x350] sm:$0xff]
    %v307 = vld [vmem:[#allocation5 + $0x358] sm:$0xff]
    %v308 = vld [vmem:[#allocation5 + $0x360] sm:$0xff]
    %v309 = vld [vmem:[#allocation5 + $0x368] sm:$0xff]
    %v310 = vld [vmem:[#allocation5 + $0x370] sm:$0xff]
    %v311 = vld [vmem:[#allocation5 + $0x378] sm:$0xff]
    %v312 = vld [vmem:[#allocation5 + $0x380] sm:$0xff]
    %v313 = vld [vmem:[#allocation5 + $0x388] sm:$0xff]
    %v314 = vld [vmem:[#allocation5 + $0x390] sm:$0xff]
    %v315 = vld [vmem:[#allocation5 + $0x398] sm:$0xff]
    %v316 = vld [vmem:[#allocation5 + $0x3a0] sm:$0xff]
    %v317 = vld [vmem:[#allocation5 + $0x3a8] sm:$0xff]
    %v318 = vld [vmem:[#allocation5 + $0x3b0] sm:$0xff]
    %v319 = vld [vmem:[#allocation5 + $0x3b8] sm:$0xff]
    %v320 = vld [vmem:[#allocation5 + $0x3c0] sm:$0xff]
    %v321 = vld [vmem:[#allocation5 + $0x3c8] sm:$0xff]
    %v322 = vld [vmem:[#allocation5 + $0x3d0] sm:$0xff]
    %v323 = vld [vmem:[#allocation5 + $0x3d8] sm:$0xff]
    %v324 = vld [vmem:[#allocation5 + $0x3e0] sm:$0xff]
    %v325 = vld [vmem:[#allocation5 + $0x3e8] sm:$0xff]
    %v326 = vld [vmem:[#allocation5 + $0x3f0] sm:$0xff]
    %v327 = vld [vmem:[#allocation5 + $0x3f8] sm:$0xff]
    %v328 = vld [vmem:[#allocation5 + $0x400] sm:$0xff]
    %v329 = vld [vmem:[#allocation5 + $0x408] sm:$0xff]
    %v330 = vld [vmem:[#allocation5 + $0x410] sm:$0xff]
    %v331 = vld [vmem:[#allocation5 + $0x418] sm:$0xff]
    %v332 = vld [vmem:[#allocation5 + $0x420] sm:$0xff]
    %v333 = vld [vmem:[#allocation5 + $0x428] sm:$0xff]
    %v334 = vld [vmem:[#allocation5 + $0x430] sm:$0xff]
    %v335 = vld [vmem:[#allocation5 + $0x438] sm:$0xff]
    %v336 = vld [vmem:[#allocation5 + $0x440] sm:$0xff]
    %v337 = vld [vmem:[#allocation5 + $0x448] sm:$0xff]
    %v338 = vld [vmem:[#allocation5 + $0x450] sm:$0xff]
    %v339 = vld [vmem:[#allocation5 + $0x458] sm:$0xff]
    %v340 = vld [vmem:[#allocation5 + $0x460] sm:$0xff]
    %v341 = vld [vmem:[#allocation5 + $0x468] sm:$0xff]
    %v342 = vld [vmem:[#allocation5 + $0x470] sm:$0xff]
    %v343 = vld [vmem:[#allocation5 + $0x478] sm:$0xff]
    %v344 = vld [vmem:[#allocation5 + $0x480] sm:$0xff]
    %v345 = vld [vmem:[#allocation5 + $0x488] sm:$0xff]
    %v346 = vld [vmem:[#allocation5 + $0x490] sm:$0xff]
    %v347 = vld [vmem:[#allocation5 + $0x498] sm:$0xff]
    %v348 = vld [vmem:[#allocation5 + $0x4a0] sm:$0xff]
    %v349 = vld [vmem:[#allocation5 + $0x4a8] sm:$0xff]
    %v350 = vld [vmem:[#allocation5 + $0x4b0] sm:$0xff]
    %v351 = vld [vmem:[#allocation5 + $0x4b8] sm:$0xff]
    %v352 = vld [vmem:[#allocation5 + $0x4c0] sm:$0xff]
    %v353 = vld [vmem:[#allocation5 + $0x4c8] sm:$0xff]
    %v354 = vld [vmem:[#allocation5 + $0x4d0] sm:$0xff]
    %v355 = vld [vmem:[#allocation5 + $0x4d8] sm:$0xff]
    %v356 = vld [vmem:[#allocation5 + $0x4e0] sm:$0xff]
    %v357 = vld [vmem:[#allocation5 + $0x4e8] sm:$0xff]
    %v358 = vld [vmem:[#allocation5 + $0x4f0] sm:$0xff]
    %v359 = vld [vmem:[#allocation5 + $0x4f8] sm:$0xff]
    %v360 = vld [vmem:[#allocation5 + $0x500] sm:$0xff]
    %v361 = vld [vmem:[#allocation5 + $0x508] sm:$0xff]
    %v362 = vld [vmem:[#allocation5 + $0x510] sm:$0xff]
    %v363 = vld [vmem:[#allocation5 + $0x518] sm:$0xff]
    %v364 = vld [vmem:[#allocation5 + $0x520] sm:$0xff]
    %v365 = vld [vmem:[#allocation5 + $0x528] sm:$0xff]
    %v366 = vld [vmem:[#allocation5 + $0x530] sm:$0xff]
    %v367 = vld [vmem:[#allocation5 + $0x538] sm:$0xff]
    %v368 = vld [vmem:[#allocation5 + $0x540] sm:$0xff]
    %v369 = vld [vmem:[#allocation5 + $0x548] sm:$0xff]
    %v370 = vld [vmem:[#allocation5 + $0x550] sm:$0xff]
    %v371 = vld [vmem:[#allocation5 + $0x558] sm:$0xff]
    %v372 = vld [vmem:[#allocation5 + $0x560] sm:$0xff]
    %v373 = vld [vmem:[#allocation5 + $0x568] sm:$0xff]
    %v374 = vld [vmem:[#allocation5 + $0x570] sm:$0xff]
    %v375 = vld [vmem:[#allocation5 + $0x578] sm:$0xff]
    %v376 = vld [vmem:[#allocation5 + $0x580] sm:$0xff]
    %v377 = vld [vmem:[#allocation5 + $0x588] sm:$0xff]
    %v378 = vld [vmem:[#allocation5 + $0x590] sm:$0xff]
    %v379 = vld [vmem:[#allocation5 + $0x598] sm:$0xff]
    %v380 = vld [vmem:[#allocation5 + $0x5a0] sm:$0xff]
    %v381 = vld [vmem:[#allocation5 + $0x5a8] sm:$0xff]
    %v382 = vld [vmem:[#allocation5 + $0x5b0] sm:$0xff]
    %v383 = vld [vmem:[#allocation5 + $0x5b8] sm:$0xff]
    %v384 = vld [vmem:[#allocation5 + $0x5c0] sm:$0xff]
    %v385 = vld [vmem:[#allocation5 + $0x5c8] sm:$0xff]
    %v386 = vld [vmem:[#allocation5 + $0x5d0] sm:$0xff]
    %v387 = vld [vmem:[#allocation5 + $0x5d8] sm:$0xff]
    %v388 = vld [vmem:[#allocation5 + $0x5e0] sm:$0xff]
    %v389 = vld [vmem:[#allocation5 + $0x5e8] sm:$0xff]
    %v390 = vld [vmem:[#allocation5 + $0x5f0] sm:$0xff]
    %v391 = vld [vmem:[#allocation5 + $0x5f8] sm:$0xff]
    %v392 = vld [vmem:[#allocation5 + $0x600] sm:$0xff]
    %v393 = vld [vmem:[#allocation5 + $0x608] sm:$0xff]
    %v394 = vld [vmem:[#allocation5 + $0x610] sm:$0xff]
    %v395 = vld [vmem:[#allocation5 + $0x618] sm:$0xff]
    %v396 = vld [vmem:[#allocation5 + $0x620] sm:$0xff]
    %v397 = vld [vmem:[#allocation5 + $0x628] sm:$0xff]
    %v398 = vld [vmem:[#allocation5 + $0x630] sm:$0xff]
    %v399 = vld [vmem:[#allocation5 + $0x638] sm:$0xff]
    %v400 = vld [vmem:[#allocation5 + $0x640] sm:$0xff]
    %v401 = vld [vmem:[#allocation5 + $0x648] sm:$0xff]
    %v402 = vld [vmem:[#allocation5 + $0x650] sm:$0xff]
    %v403 = vld [vmem:[#allocation5 + $0x658] sm:$0xff]
    %v404 = vld [vmem:[#allocation5 + $0x660] sm:$0xff]
    %v405 = vld [vmem:[#allocation5 + $0x668] sm:$0xff]
    %v406 = vld [vmem:[#allocation5 + $0x670] sm:$0xff]
    %v407 = vld [vmem:[#allocation5 + $0x678] sm:$0xff]
    %v408 = vld [vmem:[#allocation5 + $0x680] sm:$0xff]
    %v409 = vld [vmem:[#allocation5 + $0x688] sm:$0xff]
    %v410 = vld [vmem:[#allocation5 + $0x690] sm:$0xff]
    %v411 = vld [vmem:[#allocation5 + $0x698] sm:$0xff]
    %v412 = vld [vmem:[#allocation5 + $0x6a0] sm:$0xff]
    %v413 = vld [vmem:[#allocation5 + $0x6a8] sm:$0xff]
    %v414 = vld [vmem:[#allocation5 + $0x6b0] sm:$0xff]
    %v415 = vld [vmem:[#allocation5 + $0x6b8] sm:$0xff]
    %v416 = vld [vmem:[#allocation5 + $0x6c0] sm:$0xff]
    %v417 = vld [vmem:[#allocation5 + $0x6c8] sm:$0xff]
    %v418 = vld [vmem:[#allocation5 + $0x6d0] sm:$0xff]
    %v419 = vld [vmem:[#allocation5 + $0x6d8] sm:$0xff]
    %v420 = vld [vmem:[#allocation5 + $0x6e0] sm:$0xff]
    %v421 = vld [vmem:[#allocation5 + $0x6e8] sm:$0xff]
    %v422 = vld [vmem:[#allocation5 + $0x6f0] sm:$0xff]
    %v423 = vld [vmem:[#allocation5 + $0x6f8] sm:$0xff]
    %v424 = vld [vmem:[#allocation5 + $0x700] sm:$0xff]
    %v425 = vld [vmem:[#allocation5 + $0x708] sm:$0xff]
    %v426 = vld [vmem:[#allocation5 + $0x710] sm:$0xff]
    %v427 = vld [vmem:[#allocation5 + $0x718] sm:$0xff]
    %v428 = vld [vmem:[#allocation5 + $0x720] sm:$0xff]
    %v429 = vld [vmem:[#allocation5 + $0x728] sm:$0xff]
    %v430 = vld [vmem:[#allocation5 + $0x730] sm:$0xff]
    %v431 = vld [vmem:[#allocation5 + $0x738] sm:$0xff]
    %v432 = vld [vmem:[#allocation5 + $0x740] sm:$0xff]
    %v433 = vld [vmem:[#allocation5 + $0x748] sm:$0xff]
    %v434 = vld [vmem:[#allocation5 + $0x750] sm:$0xff]
    %v435 = vld [vmem:[#allocation5 + $0x758] sm:$0xff]
    %v436 = vld [vmem:[#allocation5 + $0x760] sm:$0xff]
    %v437 = vld [vmem:[#allocation5 + $0x768] sm:$0xff]
    %v438 = vld [vmem:[#allocation5 + $0x770] sm:$0xff]
    %v439 = vld [vmem:[#allocation5 + $0x778] sm:$0xff]
    %v440 = vld [vmem:[#allocation5 + $0x780] sm:$0xff]
    %v441 = vld [vmem:[#allocation5 + $0x788] sm:$0xff]
    %v442 = vld [vmem:[#allocation5 + $0x790] sm:$0xff]
    %v443 = vld [vmem:[#allocation5 + $0x798] sm:$0xff]
    %v444 = vld [vmem:[#allocation5 + $0x7a0] sm:$0xff]
    %v445 = vld [vmem:[#allocation5 + $0x7a8] sm:$0xff]
    %v446 = vld [vmem:[#allocation5 + $0x7b0] sm:$0xff]
    %v447 = vld [vmem:[#allocation5 + $0x7b8] sm:$0xff]
    %v448 = vld [vmem:[#allocation5 + $0x7c0] sm:$0xff]
    %v449 = vld [vmem:[#allocation5 + $0x7c8] sm:$0xff]
    %v450 = vld [vmem:[#allocation5 + $0x7d0] sm:$0xff]
    %v451 = vld [vmem:[#allocation5 + $0x7d8] sm:$0xff]
    %v452 = vld [vmem:[#allocation5 + $0x7e0] sm:$0xff]
    %v453 = vld [vmem:[#allocation5 + $0x7e8] sm:$0xff]
    %v454 = vld [vmem:[#allocation5 + $0x7f0] sm:$0xff]
    %v455 = vld [vmem:[#allocation5 + $0x7f8] sm:$0xff]
    %v456 = vld [vmem:[#allocation5 + $0x800] sm:$0xff]
    %v457 = vld [vmem:[#allocation5 + $0x808] sm:$0xff]
    %v458 = vld [vmem:[#allocation5 + $0x810] sm:$0xff]
    %v459 = vld [vmem:[#allocation5 + $0x818] sm:$0xff]
    %v460 = vld [vmem:[#allocation5 + $0x820] sm:$0xff]
    %v461 = vld [vmem:[#allocation5 + $0x828] sm:$0xff]
    %v462 = vld [vmem:[#allocation5 + $0x830] sm:$0xff]
    %v463 = vld [vmem:[#allocation5 + $0x838] sm:$0xff]
    %v464 = vld [vmem:[#allocation5 + $0x840] sm:$0xff]
    %v465 = vld [vmem:[#allocation5 + $0x848] sm:$0xff]
    %v466 = vld [vmem:[#allocation5 + $0x850] sm:$0xff]
    %v467 = vld [vmem:[#allocation5 + $0x858] sm:$0xff]
    %v468 = vld [vmem:[#allocation5 + $0x860] sm:$0xff]
    %v469 = vld [vmem:[#allocation5 + $0x868] sm:$0xff]
    %v470 = vld [vmem:[#allocation5 + $0x870] sm:$0xff]
    %v471 = vld [vmem:[#allocation5 + $0x878] sm:$0xff]
    %v472 = vld [vmem:[#allocation5 + $0x880] sm:$0xff]
    %v473 = vld [vmem:[#allocation5 + $0x888] sm:$0xff]
    %v474 = vld [vmem:[#allocation5 + $0x890] sm:$0xff]
    %v475 = vld [vmem:[#allocation5 + $0x898] sm:$0xff]
    %v476 = vld [vmem:[#allocation5 + $0x8a0] sm:$0xff]
    %v477 = vld [vmem:[#allocation5 + $0x8a8] sm:$0xff]
    %v478 = vld [vmem:[#allocation5 + $0x8b0] sm:$0xff]
    %v479 = vld [vmem:[#allocation5 + $0x8b8] sm:$0xff]
    %v480 = vld [vmem:[#allocation5 + $0x8c0] sm:$0xff]
    %v481 = vld [vmem:[#allocation5 + $0x8c8] sm:$0xff]
    %v482 = vld [vmem:[#allocation5 + $0x8d0] sm:$0xff]
    %v483 = vld [vmem:[#allocation5 + $0x8d8] sm:$0xff]
    %v484 = vld [vmem:[#allocation5 + $0x8e0] sm:$0xff]
    %v485 = vld [vmem:[#allocation5 + $0x8e8] sm:$0xff]
    %v486 = vld [vmem:[#allocation5 + $0x8f0] sm:$0xff]
    %v487 = vld [vmem:[#allocation5 + $0x8f8] sm:$0xff]
    %v488 = vld [vmem:[#allocation5 + $0x900] sm:$0xff]
    %v489 = vld [vmem:[#allocation5 + $0x908] sm:$0xff]
    %v490 = vld [vmem:[#allocation5 + $0x910] sm:$0xff]
    %v491 = vld [vmem:[#allocation5 + $0x918] sm:$0xff]
    %v492 = vld [vmem:[#allocation5 + $0x920] sm:$0xff]
    %v493 = vld [vmem:[#allocation5 + $0x928] sm:$0xff]
    %v494 = vld [vmem:[#allocation5 + $0x930] sm:$0xff]
    %v495 = vld [vmem:[#allocation5 + $0x938] sm:$0xff]
    %v496 = vld [vmem:[#allocation5 + $0x940] sm:$0xff]
    %v497 = vld [vmem:[#allocation5 + $0x948] sm:$0xff]
    %v498 = vld [vmem:[#allocation5 + $0x950] sm:$0xff]
    %v499 = vld [vmem:[#allocation5 + $0x958] sm:$0xff]
    %v500 = vld [vmem:[#allocation5 + $0x960] sm:$0xff]
    %v501 = vld [vmem:[#allocation5 + $0x968] sm:$0xff]
    %v502 = vld [vmem:[#allocation5 + $0x970] sm:$0xff]
    %v503 = vld [vmem:[#allocation5 + $0x978] sm:$0xff]
    %v504 = vld [vmem:[#allocation5 + $0x980] sm:$0xff]
    %v505 = vld [vmem:[#allocation5 + $0x988] sm:$0xff]
    %v506 = vld [vmem:[#allocation5 + $0x990] sm:$0xff]
    %v507 = vld [vmem:[#allocation5 + $0x998] sm:$0xff]
    %v508 = vld [vmem:[#allocation5 + $0x9a0] sm:$0xff]
    %v509 = vld [vmem:[#allocation5 + $0x9a8] sm:$0xff]
    %v510 = vld [vmem:[#allocation5 + $0x9b0] sm:$0xff]
    %v511 = vld [vmem:[#allocation5 + $0x9b8] sm:$0xff]
    %v512 = vld [vmem:[#allocation5 + $0x9c0] sm:$0xff]
    %v513 = vld [vmem:[#allocation5 + $0x9c8] sm:$0xff]
    %v514 = vld [vmem:[#allocation5 + $0x9d0] sm:$0xff]
    %v515 = vld [vmem:[#allocation5 + $0x9d8] sm:$0xff]
    %v516 = vld [vmem:[#allocation5 + $0x9e0] sm:$0xff]
    %v517 = vld [vmem:[#allocation5 + $0x9e8] sm:$0xff]
    %v518 = vld [vmem:[#allocation5 + $0x9f0] sm:$0xff]
    %v519 = vld [vmem:[#allocation5 + $0x9f8] sm:$0xff]
    %v520 = vld [vmem:[#allocation5 + $0xa00] sm:$0xff]
    %v521 = vld [vmem:[#allocation5 + $0xa08] sm:$0xff]
    %v522 = vld [vmem:[#allocation5 + $0xa10] sm:$0xff]
    %v523 = vld [vmem:[#allocation5 + $0xa18] sm:$0xff]
    %v524 = vld [vmem:[#allocation5 + $0xa20] sm:$0xff]
    %v525 = vld [vmem:[#allocation5 + $0xa28] sm:$0xff]
    %v526 = vld [vmem:[#allocation5 + $0xa30] sm:$0xff]
    %v527 = vld [vmem:[#allocation5 + $0xa38] sm:$0xff]
    %v528 = vld [vmem:[#allocation5 + $0xa40] sm:$0xff]
    %v529 = vld [vmem:[#allocation5 + $0xa48] sm:$0xff]
    %v530 = vld [vmem:[#allocation5 + $0xa50] sm:$0xff]
    %v531 = vld [vmem:[#allocation5 + $0xa58] sm:$0xff]
    %v532 = vld [vmem:[#allocation5 + $0xa60] sm:$0xff]
    %v533 = vld [vmem:[#allocation5 + $0xa68] sm:$0xff]
    %v534 = vld [vmem:[#allocation5 + $0xa70] sm:$0xff]
    %v535 = vld [vmem:[#allocation5 + $0xa78] sm:$0xff]
    %v536 = vld [vmem:[#allocation5 + $0xa80] sm:$0xff]
    %v537 = vld [vmem:[#allocation5 + $0xa88] sm:$0xff]
    %v538 = vld [vmem:[#allocation5 + $0xa90] sm:$0xff]
    %v539 = vld [vmem:[#allocation5 + $0xa98] sm:$0xff]
    %v540 = vld [vmem:[#allocation5 + $0xaa0] sm:$0xff]
    %v541 = vld [vmem:[#allocation5 + $0xaa8] sm:$0xff]
    %v542 = vld [vmem:[#allocation5 + $0xab0] sm:$0xff]
    %v543 = vld [vmem:[#allocation5 + $0xab8] sm:$0xff]
    %v544 = vld [vmem:[#allocation5 + $0xac0] sm:$0xff]
    %v545 = vld [vmem:[#allocation5 + $0xac8] sm:$0xff]
    %v546 = vld [vmem:[#allocation5 + $0xad0] sm:$0xff]
    %v547 = vld [vmem:[#allocation5 + $0xad8] sm:$0xff]
    %v548 = vld [vmem:[#allocation5 + $0xae0] sm:$0xff]
    %v549 = vld [vmem:[#allocation5 + $0xae8] sm:$0xff]
    %v550 = vld [vmem:[#allocation5 + $0xaf0] sm:$0xff]
    %v551 = vld [vmem:[#allocation5 + $0xaf8] sm:$0xff]
    %v552 = vld [vmem:[#allocation5 + $0xb00] sm:$0xff]
    %v553 = vld [vmem:[#allocation5 + $0xb08] sm:$0xff]
    %v554 = vld [vmem:[#allocation5 + $0xb10] sm:$0xff]
    %v555 = vld [vmem:[#allocation5 + $0xb18] sm:$0xff]
    %v556 = vld [vmem:[#allocation5 + $0xb20] sm:$0xff]
    %v557 = vld [vmem:[#allocation5 + $0xb28] sm:$0xff]
    %v558 = vld [vmem:[#allocation5 + $0xb30] sm:$0xff]
    %v559 = vld [vmem:[#allocation5 + $0xb38] sm:$0xff]
    %v560 = vld [vmem:[#allocation5 + $0xb40] sm:$0xff]
    %v561 = vld [vmem:[#allocation5 + $0xb48] sm:$0xff]
    %v562 = vld [vmem:[#allocation5 + $0xb50] sm:$0xff]
    %v563 = vld [vmem:[#allocation5 + $0xb58] sm:$0xff]
    %v564 = vld [vmem:[#allocation5 + $0xb60] sm:$0xff]
    %v565 = vld [vmem:[#allocation5 + $0xb68] sm:$0xff]
    %v566 = vld [vmem:[#allocation5 + $0xb70] sm:$0xff]
    %v567 = vld [vmem:[#allocation5 + $0xb78] sm:$0xff]
    %v568 = vld [vmem:[#allocation5 + $0xb80] sm:$0xff]
    %v569 = vld [vmem:[#allocation5 + $0xb88] sm:$0xff]
    %v570 = vld [vmem:[#allocation5 + $0xb90] sm:$0xff]
    %v571 = vld [vmem:[#allocation5 + $0xb98] sm:$0xff]
    %v572 = vld [vmem:[#allocation5 + $0xba0] sm:$0xff]
    %v573 = vld [vmem:[#allocation5 + $0xba8] sm:$0xff]
    %v574 = vld [vmem:[#allocation5 + $0xbb0] sm:$0xff]
    %v575 = vld [vmem:[#allocation5 + $0xbb8] sm:$0xff]
    %v576 = vld [vmem:[#allocation5 + $0xbc0] sm:$0xff]
    %v577 = vld [vmem:[#allocation5 + $0xbc8] sm:$0xff]
    %v578 = vld [vmem:[#allocation5 + $0xbd0] sm:$0xff]
    %v579 = vld [vmem:[#allocation5 + $0xbd8] sm:$0xff]
    %v580 = vld [vmem:[#allocation5 + $0xbe0] sm:$0xff]
    %v581 = vld [vmem:[#allocation5 + $0xbe8] sm:$0xff]
    %v582 = vld [vmem:[#allocation5 + $0xbf0] sm:$0xff]
    %v583 = vld [vmem:[#allocation5 + $0xbf8] sm:$0xff]
    %v584 = vld [vmem:[#allocation5 + $0xc00] sm:$0xff]
    %v585 = vld [vmem:[#allocation5 + $0xc08] sm:$0xff]
    %v586 = vld [vmem:[#allocation5 + $0xc10] sm:$0xff]
    %v587 = vld [vmem:[#allocation5 + $0xc18] sm:$0xff]
    %v588 = vld [vmem:[#allocation5 + $0xc20] sm:$0xff]
    %v589 = vld [vmem:[#allocation5 + $0xc28] sm:$0xff]
    %v590 = vld [vmem:[#allocation5 + $0xc30] sm:$0xff]
    %v591 = vld [vmem:[#allocation5 + $0xc38] sm:$0xff]
    %v592 = vld [vmem:[#allocation7] sm:$0xff]
    %v593 = vunpack.c.l.bf16 %v592
    %v594 = vunpack.c.h.bf16 %v592
    %v597 = vlaneseq
    %v598 = vshrl.u32 %v597, 7
    %v599 = vsub.s32 0, %v598
    %v600 = vrot.slane %v593, %v599
    %v601 = vlaneseq
    %v602 = vshrl.u32 %v601, 7
    %v603 = vsub.s32 2, %v602
    %v604 = vrot.slane %v593, %v603
    %v605 = vlaneseq
    %v606 = vshrl.u32 %v605, 7
    %v607 = vsub.s32 4, %v606
    %v608 = vrot.slane %v593, %v607
    %v609 = vlaneseq
    %v610 = vshrl.u32 %v609, 7
    %v611 = vsub.s32 6, %v610
    %v612 = vrot.slane %v593, %v611
    %v613 = vlaneseq
    %v614 = vshrl.u32 %v613, 7
    %v615 = vsub.s32 0, %v614
    %v616 = vrot.slane %v594, %v615
    %v617 = vlaneseq
    %v618 = vshrl.u32 %v617, 7
    %v619 = vsub.s32 2, %v618
    %v620 = vrot.slane %v594, %v619
    %v621 = vlaneseq
    %v622 = vshrl.u32 %v621, 7
    %v623 = vsub.s32 4, %v622
    %v624 = vrot.slane %v594, %v623
    %v625 = vlaneseq
    %v626 = vshrl.u32 %v625, 7
    %v627 = vsub.s32 6, %v626
    %v628 = vrot.slane %v594, %v627
    %v637 = vlaneseq
    %v638 = vshrl.u32 %v637, 7
    %v639 = vsub.s32 0, %v638
    %v640 = vrot.slane %v600, %v639
    %v641 = vlaneseq
    %v642 = vshrl.u32 %v641, 7
    %v643 = vsub.s32 0, %v642
    %v644 = vrot.slane %v604, %v643
    %v645 = vlaneseq
    %v646 = vshrl.u32 %v645, 7
    %v647 = vsub.s32 0, %v646
    %v648 = vrot.slane %v608, %v647
    %v649 = vlaneseq
    %v650 = vshrl.u32 %v649, 7
    %v651 = vsub.s32 0, %v650
    %v652 = vrot.slane %v612, %v651
    %v653 = vlaneseq
    %v654 = vshrl.u32 %v653, 7
    %v655 = vsub.s32 0, %v654
    %v656 = vrot.slane %v616, %v655
    %v657 = vlaneseq
    %v658 = vshrl.u32 %v657, 7
    %v659 = vsub.s32 0, %v658
    %v660 = vrot.slane %v620, %v659
    %v661 = vlaneseq
    %v662 = vshrl.u32 %v661, 7
    %v663 = vsub.s32 0, %v662
    %v664 = vrot.slane %v624, %v663
    %v665 = vlaneseq
    %v666 = vshrl.u32 %v665, 7
    %v667 = vsub.s32 0, %v666
    %v668 = vrot.slane %v628, %v667
    %v1061 = vunpack.c.l.b16 %v200
    %v1062 = vunpack.c.h.b16 %v200
    %v1063 = vunpack.c.l.b16 %v201
    %v1064 = vunpack.c.h.b16 %v201
    %v1065 = vunpack.c.l.b16 %v202
    %v1066 = vunpack.c.h.b16 %v202
    %v1067 = vunpack.c.l.b16 %v203
    %v1068 = vunpack.c.h.b16 %v203
    %v1069 = vunpack.c.l.b16 %v204
    %v1070 = vunpack.c.h.b16 %v204
    %v1071 = vunpack.c.l.b16 %v205
    %v1072 = vunpack.c.h.b16 %v205
    %v1073 = vunpack.c.l.b16 %v206
    %v1074 = vunpack.c.h.b16 %v206
    %v1075 = vunpack.c.l.b16 %v207
    %v1076 = vunpack.c.h.b16 %v207
    %v1077 = vunpack.c.l.b16 %v208
    %v1078 = vunpack.c.h.b16 %v208
    %v1079 = vunpack.c.l.b16 %v209
    %v1080 = vunpack.c.h.b16 %v209
    %v1081 = vunpack.c.l.b16 %v210
    %v1082 = vunpack.c.h.b16 %v210
    %v1083 = vunpack.c.l.b16 %v211
    %v1084 = vunpack.c.h.b16 %v211
    %v1085 = vunpack.c.l.b16 %v212
    %v1086 = vunpack.c.h.b16 %v212
    %v1087 = vunpack.c.l.b16 %v213
    %v1088 = vunpack.c.h.b16 %v213
    %v1089 = vunpack.c.l.b16 %v214
    %v1090 = vunpack.c.h.b16 %v214
    %v1091 = vunpack.c.l.b16 %v215
    %v1092 = vunpack.c.h.b16 %v215
    %v1093 = vunpack.c.l.b16 %v216
    %v1094 = vunpack.c.h.b16 %v216
    %v1095 = vunpack.c.l.b16 %v217
    %v1096 = vunpack.c.h.b16 %v217
    %v1097 = vunpack.c.l.b16 %v218
    %v1098 = vunpack.c.h.b16 %v218
    %v1099 = vunpack.c.l.b16 %v219
    %v1100 = vunpack.c.h.b16 %v219
    %v1101 = vunpack.c.l.b16 %v220
    %v1102 = vunpack.c.h.b16 %v220
    %v1103 = vunpack.c.l.b16 %v221
    %v1104 = vunpack.c.h.b16 %v221
    %v1105 = vunpack.c.l.b16 %v222
    %v1106 = vunpack.c.h.b16 %v222
    %v1107 = vunpack.c.l.b16 %v223
    %v1108 = vunpack.c.h.b16 %v223
    %v1109 = vunpack.c.l.b16 %v224
    %v1110 = vunpack.c.h.b16 %v224
    %v1111 = vunpack.c.l.b16 %v225
    %v1112 = vunpack.c.h.b16 %v225
    %v1113 = vunpack.c.l.b16 %v226
    %v1114 = vunpack.c.h.b16 %v226
    %v1115 = vunpack.c.l.b16 %v227
    %v1116 = vunpack.c.h.b16 %v227
    %v1117 = vunpack.c.l.b16 %v228
    %v1118 = vunpack.c.h.b16 %v228
    %v1119 = vunpack.c.l.b16 %v229
    %v1120 = vunpack.c.h.b16 %v229
    %v1121 = vunpack.c.l.b16 %v230
    %v1122 = vunpack.c.h.b16 %v230
    %v1123 = vunpack.c.l.b16 %v231
    %v1124 = vunpack.c.h.b16 %v231
    %v1125 = vunpack.c.l.b16 %v232
    %v1126 = vunpack.c.h.b16 %v232
    %v1127 = vunpack.c.l.b16 %v233
    %v1128 = vunpack.c.h.b16 %v233
    %v1129 = vunpack.c.l.b16 %v234
    %v1130 = vunpack.c.h.b16 %v234
    %v1131 = vunpack.c.l.b16 %v235
    %v1132 = vunpack.c.h.b16 %v235
    %v1133 = vunpack.c.l.b16 %v236
    %v1134 = vunpack.c.h.b16 %v236
    %v1135 = vunpack.c.l.b16 %v237
    %v1136 = vunpack.c.h.b16 %v237
    %v1137 = vunpack.c.l.b16 %v238
    %v1138 = vunpack.c.h.b16 %v238
    %v1139 = vunpack.c.l.b16 %v239
    %v1140 = vunpack.c.h.b16 %v239
    %v1141 = vunpack.c.l.b16 %v240
    %v1142 = vunpack.c.h.b16 %v240
    %v1143 = vunpack.c.l.b16 %v241
    %v1144 = vunpack.c.h.b16 %v241
    %v1145 = vunpack.c.l.b16 %v242
    %v1146 = vunpack.c.h.b16 %v242
    %v1147 = vunpack.c.l.b16 %v243
    %v1148 = vunpack.c.h.b16 %v243
    %v1149 = vunpack.c.l.b16 %v244
    %v1150 = vunpack.c.h.b16 %v244
    %v1151 = vunpack.c.l.b16 %v245
    %v1152 = vunpack.c.h.b16 %v245
    %v1153 = vunpack.c.l.b16 %v246
    %v1154 = vunpack.c.h.b16 %v246
    %v1155 = vunpack.c.l.b16 %v247
    %v1156 = vunpack.c.h.b16 %v247
    %v1157 = vunpack.c.l.b16 %v248
    %v1158 = vunpack.c.h.b16 %v248
    %v1159 = vunpack.c.l.b16 %v249
    %v1160 = vunpack.c.h.b16 %v249
    %v1161 = vunpack.c.l.b16 %v250
    %v1162 = vunpack.c.h.b16 %v250
    %v1163 = vunpack.c.l.b16 %v251
    %v1164 = vunpack.c.h.b16 %v251
    %v1165 = vunpack.c.l.b16 %v252
    %v1166 = vunpack.c.h.b16 %v252
    %v1167 = vunpack.c.l.b16 %v253
    %v1168 = vunpack.c.h.b16 %v253
    %v1169 = vunpack.c.l.b16 %v254
    %v1170 = vunpack.c.h.b16 %v254
    %v1171 = vunpack.c.l.b16 %v255
    %v1172 = vunpack.c.h.b16 %v255
    %v1173 = vunpack.c.l.b16 %v256
    %v1174 = vunpack.c.h.b16 %v256
    %v1175 = vunpack.c.l.b16 %v257
    %v1176 = vunpack.c.h.b16 %v257
    %v1177 = vunpack.c.l.b16 %v258
    %v1178 = vunpack.c.h.b16 %v258
    %v1179 = vunpack.c.l.b16 %v259
    %v1180 = vunpack.c.h.b16 %v259
    %v1181 = vunpack.c.l.b16 %v260
    %v1182 = vunpack.c.h.b16 %v260
    %v1183 = vunpack.c.l.b16 %v261
    %v1184 = vunpack.c.h.b16 %v261
    %v1185 = vunpack.c.l.b16 %v262
    %v1186 = vunpack.c.h.b16 %v262
    %v1187 = vunpack.c.l.b16 %v263
    %v1188 = vunpack.c.h.b16 %v263
    %v1189 = vunpack.c.l.b16 %v264
    %v1190 = vunpack.c.h.b16 %v264
    %v1191 = vunpack.c.l.b16 %v265
    %v1192 = vunpack.c.h.b16 %v265
    %v1193 = vunpack.c.l.b16 %v266
    %v1194 = vunpack.c.h.b16 %v266
    %v1195 = vunpack.c.l.b16 %v267
    %v1196 = vunpack.c.h.b16 %v267
    %v1197 = vunpack.c.l.b16 %v268
    %v1198 = vunpack.c.h.b16 %v268
    %v1199 = vunpack.c.l.b16 %v269
    %v1200 = vunpack.c.h.b16 %v269
    %v1201 = vunpack.c.l.b16 %v270
    %v1202 = vunpack.c.h.b16 %v270
    %v1203 = vunpack.c.l.b16 %v271
    %v1204 = vunpack.c.h.b16 %v271
    %v1205 = vunpack.c.l.b16 %v272
    %v1206 = vunpack.c.h.b16 %v272
    %v1207 = vunpack.c.l.b16 %v273
    %v1208 = vunpack.c.h.b16 %v273
    %v1209 = vunpack.c.l.b16 %v274
    %v1210 = vunpack.c.h.b16 %v274
    %v1211 = vunpack.c.l.b16 %v275
    %v1212 = vunpack.c.h.b16 %v275
    %v1213 = vunpack.c.l.b16 %v276
    %v1214 = vunpack.c.h.b16 %v276
    %v1215 = vunpack.c.l.b16 %v277
    %v1216 = vunpack.c.h.b16 %v277
    %v1217 = vunpack.c.l.b16 %v278
    %v1218 = vunpack.c.h.b16 %v278
    %v1219 = vunpack.c.l.b16 %v279
    %v1220 = vunpack.c.h.b16 %v279
    %v1221 = vunpack.c.l.b16 %v280
    %v1222 = vunpack.c.h.b16 %v280
    %v1223 = vunpack.c.l.b16 %v281
    %v1224 = vunpack.c.h.b16 %v281
    %v1225 = vunpack.c.l.b16 %v282
    %v1226 = vunpack.c.h.b16 %v282
    %v1227 = vunpack.c.l.b16 %v283
    %v1228 = vunpack.c.h.b16 %v283
    %v1229 = vunpack.c.l.b16 %v284
    %v1230 = vunpack.c.h.b16 %v284
    %v1231 = vunpack.c.l.b16 %v285
    %v1232 = vunpack.c.h.b16 %v285
    %v1233 = vunpack.c.l.b16 %v286
    %v1234 = vunpack.c.h.b16 %v286
    %v1235 = vunpack.c.l.b16 %v287
    %v1236 = vunpack.c.h.b16 %v287
    %v1237 = vunpack.c.l.b16 %v288
    %v1238 = vunpack.c.h.b16 %v288
    %v1239 = vunpack.c.l.b16 %v289
    %v1240 = vunpack.c.h.b16 %v289
    %v1241 = vunpack.c.l.b16 %v290
    %v1242 = vunpack.c.h.b16 %v290
    %v1243 = vunpack.c.l.b16 %v291
    %v1244 = vunpack.c.h.b16 %v291
    %v1245 = vunpack.c.l.b16 %v292
    %v1246 = vunpack.c.h.b16 %v292
    %v1247 = vunpack.c.l.b16 %v293
    %v1248 = vunpack.c.h.b16 %v293
    %v1249 = vunpack.c.l.b16 %v294
    %v1250 = vunpack.c.h.b16 %v294
    %v1251 = vunpack.c.l.b16 %v295
    %v1252 = vunpack.c.h.b16 %v295
    %v1253 = vunpack.c.l.b16 %v296
    %v1254 = vunpack.c.h.b16 %v296
    %v1255 = vunpack.c.l.b16 %v297
    %v1256 = vunpack.c.h.b16 %v297
    %v1257 = vunpack.c.l.b16 %v298
    %v1258 = vunpack.c.h.b16 %v298
    %v1259 = vunpack.c.l.b16 %v299
    %v1260 = vunpack.c.h.b16 %v299
    %v1261 = vunpack.c.l.b16 %v300
    %v1262 = vunpack.c.h.b16 %v300
    %v1263 = vunpack.c.l.b16 %v301
    %v1264 = vunpack.c.h.b16 %v301
    %v1265 = vunpack.c.l.b16 %v302
    %v1266 = vunpack.c.h.b16 %v302
    %v1267 = vunpack.c.l.b16 %v303
    %v1268 = vunpack.c.h.b16 %v303
    %v1269 = vunpack.c.l.b16 %v304
    %v1270 = vunpack.c.h.b16 %v304
    %v1271 = vunpack.c.l.b16 %v305
    %v1272 = vunpack.c.h.b16 %v305
    %v1273 = vunpack.c.l.b16 %v306
    %v1274 = vunpack.c.h.b16 %v306
    %v1275 = vunpack.c.l.b16 %v307
    %v1276 = vunpack.c.h.b16 %v307
    %v1277 = vunpack.c.l.b16 %v308
    %v1278 = vunpack.c.h.b16 %v308
    %v1279 = vunpack.c.l.b16 %v309
    %v1280 = vunpack.c.h.b16 %v309
    %v1281 = vunpack.c.l.b16 %v310
    %v1282 = vunpack.c.h.b16 %v310
    %v1283 = vunpack.c.l.b16 %v311
    %v1284 = vunpack.c.h.b16 %v311
    %v1285 = vunpack.c.l.b16 %v312
    %v1286 = vunpack.c.h.b16 %v312
    %v1287 = vunpack.c.l.b16 %v313
    %v1288 = vunpack.c.h.b16 %v313
    %v1289 = vunpack.c.l.b16 %v314
    %v1290 = vunpack.c.h.b16 %v314
    %v1291 = vunpack.c.l.b16 %v315
    %v1292 = vunpack.c.h.b16 %v315
    %v1293 = vunpack.c.l.b16 %v316
    %v1294 = vunpack.c.h.b16 %v316
    %v1295 = vunpack.c.l.b16 %v317
    %v1296 = vunpack.c.h.b16 %v317
    %v1297 = vunpack.c.l.b16 %v318
    %v1298 = vunpack.c.h.b16 %v318
    %v1299 = vunpack.c.l.b16 %v319
    %v1300 = vunpack.c.h.b16 %v319
    %v1301 = vunpack.c.l.b16 %v320
    %v1302 = vunpack.c.h.b16 %v320
    %v1303 = vunpack.c.l.b16 %v321
    %v1304 = vunpack.c.h.b16 %v321
    %v1305 = vunpack.c.l.b16 %v322
    %v1306 = vunpack.c.h.b16 %v322
    %v1307 = vunpack.c.l.b16 %v323
    %v1308 = vunpack.c.h.b16 %v323
    %v1309 = vunpack.c.l.b16 %v324
    %v1310 = vunpack.c.h.b16 %v324
    %v1311 = vunpack.c.l.b16 %v325
    %v1312 = vunpack.c.h.b16 %v325
    %v1313 = vunpack.c.l.b16 %v326
    %v1314 = vunpack.c.h.b16 %v326
    %v1315 = vunpack.c.l.b16 %v327
    %v1316 = vunpack.c.h.b16 %v327
    %v1317 = vunpack.c.l.b16 %v328
    %v1318 = vunpack.c.h.b16 %v328
    %v1319 = vunpack.c.l.b16 %v329
    %v1320 = vunpack.c.h.b16 %v329
    %v1321 = vunpack.c.l.b16 %v330
    %v1322 = vunpack.c.h.b16 %v330
    %v1323 = vunpack.c.l.b16 %v331
    %v1324 = vunpack.c.h.b16 %v331
    %v1325 = vunpack.c.l.b16 %v332
    %v1326 = vunpack.c.h.b16 %v332
    %v1327 = vunpack.c.l.b16 %v333
    %v1328 = vunpack.c.h.b16 %v333
    %v1329 = vunpack.c.l.b16 %v334
    %v1330 = vunpack.c.h.b16 %v334
    %v1331 = vunpack.c.l.b16 %v335
    %v1332 = vunpack.c.h.b16 %v335
    %v1333 = vunpack.c.l.b16 %v336
    %v1334 = vunpack.c.h.b16 %v336
    %v1335 = vunpack.c.l.b16 %v337
    %v1336 = vunpack.c.h.b16 %v337
    %v1337 = vunpack.c.l.b16 %v338
    %v1338 = vunpack.c.h.b16 %v338
    %v1339 = vunpack.c.l.b16 %v339
    %v1340 = vunpack.c.h.b16 %v339
    %v1341 = vunpack.c.l.b16 %v340
    %v1342 = vunpack.c.h.b16 %v340
    %v1343 = vunpack.c.l.b16 %v341
    %v1344 = vunpack.c.h.b16 %v341
    %v1345 = vunpack.c.l.b16 %v342
    %v1346 = vunpack.c.h.b16 %v342
    %v1347 = vunpack.c.l.b16 %v343
    %v1348 = vunpack.c.h.b16 %v343
    %v1349 = vunpack.c.l.b16 %v344
    %v1350 = vunpack.c.h.b16 %v344
    %v1351 = vunpack.c.l.b16 %v345
    %v1352 = vunpack.c.h.b16 %v345
    %v1353 = vunpack.c.l.b16 %v346
    %v1354 = vunpack.c.h.b16 %v346
    %v1355 = vunpack.c.l.b16 %v347
    %v1356 = vunpack.c.h.b16 %v347
    %v1357 = vunpack.c.l.b16 %v348
    %v1358 = vunpack.c.h.b16 %v348
    %v1359 = vunpack.c.l.b16 %v349
    %v1360 = vunpack.c.h.b16 %v349
    %v1361 = vunpack.c.l.b16 %v350
    %v1362 = vunpack.c.h.b16 %v350
    %v1363 = vunpack.c.l.b16 %v351
    %v1364 = vunpack.c.h.b16 %v351
    %v1365 = vunpack.c.l.b16 %v352
    %v1366 = vunpack.c.h.b16 %v352
    %v1367 = vunpack.c.l.b16 %v353
    %v1368 = vunpack.c.h.b16 %v353
    %v1369 = vunpack.c.l.b16 %v354
    %v1370 = vunpack.c.h.b16 %v354
    %v1371 = vunpack.c.l.b16 %v355
    %v1372 = vunpack.c.h.b16 %v355
    %v1373 = vunpack.c.l.b16 %v356
    %v1374 = vunpack.c.h.b16 %v356
    %v1375 = vunpack.c.l.b16 %v357
    %v1376 = vunpack.c.h.b16 %v357
    %v1377 = vunpack.c.l.b16 %v358
    %v1378 = vunpack.c.h.b16 %v358
    %v1379 = vunpack.c.l.b16 %v359
    %v1380 = vunpack.c.h.b16 %v359
    %v1381 = vunpack.c.l.b16 %v360
    %v1382 = vunpack.c.h.b16 %v360
    %v1383 = vunpack.c.l.b16 %v361
    %v1384 = vunpack.c.h.b16 %v361
    %v1385 = vunpack.c.l.b16 %v362
    %v1386 = vunpack.c.h.b16 %v362
    %v1387 = vunpack.c.l.b16 %v363
    %v1388 = vunpack.c.h.b16 %v363
    %v1389 = vunpack.c.l.b16 %v364
    %v1390 = vunpack.c.h.b16 %v364
    %v1391 = vunpack.c.l.b16 %v365
    %v1392 = vunpack.c.h.b16 %v365
    %v1393 = vunpack.c.l.b16 %v366
    %v1394 = vunpack.c.h.b16 %v366
    %v1395 = vunpack.c.l.b16 %v367
    %v1396 = vunpack.c.h.b16 %v367
    %v1397 = vunpack.c.l.b16 %v368
    %v1398 = vunpack.c.h.b16 %v368
    %v1399 = vunpack.c.l.b16 %v369
    %v1400 = vunpack.c.h.b16 %v369
    %v1401 = vunpack.c.l.b16 %v370
    %v1402 = vunpack.c.h.b16 %v370
    %v1403 = vunpack.c.l.b16 %v371
    %v1404 = vunpack.c.h.b16 %v371
    %v1405 = vunpack.c.l.b16 %v372
    %v1406 = vunpack.c.h.b16 %v372
    %v1407 = vunpack.c.l.b16 %v373
    %v1408 = vunpack.c.h.b16 %v373
    %v1409 = vunpack.c.l.b16 %v374
    %v1410 = vunpack.c.h.b16 %v374
    %v1411 = vunpack.c.l.b16 %v375
    %v1412 = vunpack.c.h.b16 %v375
    %v1413 = vunpack.c.l.b16 %v376
    %v1414 = vunpack.c.h.b16 %v376
    %v1415 = vunpack.c.l.b16 %v377
    %v1416 = vunpack.c.h.b16 %v377
    %v1417 = vunpack.c.l.b16 %v378
    %v1418 = vunpack.c.h.b16 %v378
    %v1419 = vunpack.c.l.b16 %v379
    %v1420 = vunpack.c.h.b16 %v379
    %v1421 = vunpack.c.l.b16 %v380
    %v1422 = vunpack.c.h.b16 %v380
    %v1423 = vunpack.c.l.b16 %v381
    %v1424 = vunpack.c.h.b16 %v381
    %v1425 = vunpack.c.l.b16 %v382
    %v1426 = vunpack.c.h.b16 %v382
    %v1427 = vunpack.c.l.b16 %v383
    %v1428 = vunpack.c.h.b16 %v383
    %v1429 = vunpack.c.l.b16 %v384
    %v1430 = vunpack.c.h.b16 %v384
    %v1431 = vunpack.c.l.b16 %v385
    %v1432 = vunpack.c.h.b16 %v385
    %v1433 = vunpack.c.l.b16 %v386
    %v1434 = vunpack.c.h.b16 %v386
    %v1435 = vunpack.c.l.b16 %v387
    %v1436 = vunpack.c.h.b16 %v387
    %v1437 = vunpack.c.l.b16 %v388
    %v1438 = vunpack.c.h.b16 %v388
    %v1439 = vunpack.c.l.b16 %v389
    %v1440 = vunpack.c.h.b16 %v389
    %v1441 = vunpack.c.l.b16 %v390
    %v1442 = vunpack.c.h.b16 %v390
    %v1443 = vunpack.c.l.b16 %v391
    %v1444 = vunpack.c.h.b16 %v391
    %v1445 = vunpack.c.l.b16 %v392
    %v1446 = vunpack.c.h.b16 %v392
    %v1447 = vunpack.c.l.b16 %v393
    %v1448 = vunpack.c.h.b16 %v393
    %v1449 = vunpack.c.l.b16 %v394
    %v1450 = vunpack.c.h.b16 %v394
    %v1451 = vunpack.c.l.b16 %v395
    %v1452 = vunpack.c.h.b16 %v395
    %v1453 = vunpack.c.l.b16 %v396
    %v1454 = vunpack.c.h.b16 %v396
    %v1455 = vunpack.c.l.b16 %v397
    %v1456 = vunpack.c.h.b16 %v397
    %v1457 = vunpack.c.l.b16 %v398
    %v1458 = vunpack.c.h.b16 %v398
    %v1459 = vunpack.c.l.b16 %v399
    %v1460 = vunpack.c.h.b16 %v399
    %v1461 = vunpack.c.l.b16 %v400
    %v1462 = vunpack.c.h.b16 %v400
    %v1463 = vunpack.c.l.b16 %v401
    %v1464 = vunpack.c.h.b16 %v401
    %v1465 = vunpack.c.l.b16 %v402
    %v1466 = vunpack.c.h.b16 %v402
    %v1467 = vunpack.c.l.b16 %v403
    %v1468 = vunpack.c.h.b16 %v403
    %v1469 = vunpack.c.l.b16 %v404
    %v1470 = vunpack.c.h.b16 %v404
    %v1471 = vunpack.c.l.b16 %v405
    %v1472 = vunpack.c.h.b16 %v405
    %v1473 = vunpack.c.l.b16 %v406
    %v1474 = vunpack.c.h.b16 %v406
    %v1475 = vunpack.c.l.b16 %v407
    %v1476 = vunpack.c.h.b16 %v407
    %v1477 = vunpack.c.l.b16 %v408
    %v1478 = vunpack.c.h.b16 %v408
    %v1479 = vunpack.c.l.b16 %v409
    %v1480 = vunpack.c.h.b16 %v409
    %v1481 = vunpack.c.l.b16 %v410
    %v1482 = vunpack.c.h.b16 %v410
    %v1483 = vunpack.c.l.b16 %v411
    %v1484 = vunpack.c.h.b16 %v411
    %v1485 = vunpack.c.l.b16 %v412
    %v1486 = vunpack.c.h.b16 %v412
    %v1487 = vunpack.c.l.b16 %v413
    %v1488 = vunpack.c.h.b16 %v413
    %v1489 = vunpack.c.l.b16 %v414
    %v1490 = vunpack.c.h.b16 %v414
    %v1491 = vunpack.c.l.b16 %v415
    %v1492 = vunpack.c.h.b16 %v415
    %v1493 = vunpack.c.l.b16 %v416
    %v1494 = vunpack.c.h.b16 %v416
    %v1495 = vunpack.c.l.b16 %v417
    %v1496 = vunpack.c.h.b16 %v417
    %v1497 = vunpack.c.l.b16 %v418
    %v1498 = vunpack.c.h.b16 %v418
    %v1499 = vunpack.c.l.b16 %v419
    %v1500 = vunpack.c.h.b16 %v419
    %v1501 = vunpack.c.l.b16 %v420
    %v1502 = vunpack.c.h.b16 %v420
    %v1503 = vunpack.c.l.b16 %v421
    %v1504 = vunpack.c.h.b16 %v421
    %v1505 = vunpack.c.l.b16 %v422
    %v1506 = vunpack.c.h.b16 %v422
    %v1507 = vunpack.c.l.b16 %v423
    %v1508 = vunpack.c.h.b16 %v423
    %v1509 = vunpack.c.l.b16 %v424
    %v1510 = vunpack.c.h.b16 %v424
    %v1511 = vunpack.c.l.b16 %v425
    %v1512 = vunpack.c.h.b16 %v425
    %v1513 = vunpack.c.l.b16 %v426
    %v1514 = vunpack.c.h.b16 %v426
    %v1515 = vunpack.c.l.b16 %v427
    %v1516 = vunpack.c.h.b16 %v427
    %v1517 = vunpack.c.l.b16 %v428
    %v1518 = vunpack.c.h.b16 %v428
    %v1519 = vunpack.c.l.b16 %v429
    %v1520 = vunpack.c.h.b16 %v429
    %v1521 = vunpack.c.l.b16 %v430
    %v1522 = vunpack.c.h.b16 %v430
    %v1523 = vunpack.c.l.b16 %v431
    %v1524 = vunpack.c.h.b16 %v431
    %v1525 = vunpack.c.l.b16 %v432
    %v1526 = vunpack.c.h.b16 %v432
    %v1527 = vunpack.c.l.b16 %v433
    %v1528 = vunpack.c.h.b16 %v433
    %v1529 = vunpack.c.l.b16 %v434
    %v1530 = vunpack.c.h.b16 %v434
    %v1531 = vunpack.c.l.b16 %v435
    %v1532 = vunpack.c.h.b16 %v435
    %v1533 = vunpack.c.l.b16 %v436
    %v1534 = vunpack.c.h.b16 %v436
    %v1535 = vunpack.c.l.b16 %v437
    %v1536 = vunpack.c.h.b16 %v437
    %v1537 = vunpack.c.l.b16 %v438
    %v1538 = vunpack.c.h.b16 %v438
    %v1539 = vunpack.c.l.b16 %v439
    %v1540 = vunpack.c.h.b16 %v439
    %v1541 = vunpack.c.l.b16 %v440
    %v1542 = vunpack.c.h.b16 %v440
    %v1543 = vunpack.c.l.b16 %v441
    %v1544 = vunpack.c.h.b16 %v441
    %v1545 = vunpack.c.l.b16 %v442
    %v1546 = vunpack.c.h.b16 %v442
    %v1547 = vunpack.c.l.b16 %v443
    %v1548 = vunpack.c.h.b16 %v443
    %v1549 = vunpack.c.l.b16 %v444
    %v1550 = vunpack.c.h.b16 %v444
    %v1551 = vunpack.c.l.b16 %v445
    %v1552 = vunpack.c.h.b16 %v445
    %v1553 = vunpack.c.l.b16 %v446
    %v1554 = vunpack.c.h.b16 %v446
    %v1555 = vunpack.c.l.b16 %v447
    %v1556 = vunpack.c.h.b16 %v447
    %v1557 = vunpack.c.l.b16 %v448
    %v1558 = vunpack.c.h.b16 %v448
    %v1559 = vunpack.c.l.b16 %v449
    %v1560 = vunpack.c.h.b16 %v449
    %v1561 = vunpack.c.l.b16 %v450
    %v1562 = vunpack.c.h.b16 %v450
    %v1563 = vunpack.c.l.b16 %v451
    %v1564 = vunpack.c.h.b16 %v451
    %v1565 = vunpack.c.l.b16 %v452
    %v1566 = vunpack.c.h.b16 %v452
    %v1567 = vunpack.c.l.b16 %v453
    %v1568 = vunpack.c.h.b16 %v453
    %v1569 = vunpack.c.l.b16 %v454
    %v1570 = vunpack.c.h.b16 %v454
    %v1571 = vunpack.c.l.b16 %v455
    %v1572 = vunpack.c.h.b16 %v455
    %v1573 = vunpack.c.l.b16 %v456
    %v1574 = vunpack.c.h.b16 %v456
    %v1575 = vunpack.c.l.b16 %v457
    %v1576 = vunpack.c.h.b16 %v457
    %v1577 = vunpack.c.l.b16 %v458
    %v1578 = vunpack.c.h.b16 %v458
    %v1579 = vunpack.c.l.b16 %v459
    %v1580 = vunpack.c.h.b16 %v459
    %v1581 = vunpack.c.l.b16 %v460
    %v1582 = vunpack.c.h.b16 %v460
    %v1583 = vunpack.c.l.b16 %v461
    %v1584 = vunpack.c.h.b16 %v461
    %v1585 = vunpack.c.l.b16 %v462
    %v1586 = vunpack.c.h.b16 %v462
    %v1587 = vunpack.c.l.b16 %v463
    %v1588 = vunpack.c.h.b16 %v463
    %v1589 = vunpack.c.l.b16 %v464
    %v1590 = vunpack.c.h.b16 %v464
    %v1591 = vunpack.c.l.b16 %v465
    %v1592 = vunpack.c.h.b16 %v465
    %v1593 = vunpack.c.l.b16 %v466
    %v1594 = vunpack.c.h.b16 %v466
    %v1595 = vunpack.c.l.b16 %v467
    %v1596 = vunpack.c.h.b16 %v467
    %v1597 = vunpack.c.l.b16 %v468
    %v1598 = vunpack.c.h.b16 %v468
    %v1599 = vunpack.c.l.b16 %v469
    %v1600 = vunpack.c.h.b16 %v469
    %v1601 = vunpack.c.l.b16 %v470
    %v1602 = vunpack.c.h.b16 %v470
    %v1603 = vunpack.c.l.b16 %v471
    %v1604 = vunpack.c.h.b16 %v471
    %v1605 = vunpack.c.l.b16 %v472
    %v1606 = vunpack.c.h.b16 %v472
    %v1607 = vunpack.c.l.b16 %v473
    %v1608 = vunpack.c.h.b16 %v473
    %v1609 = vunpack.c.l.b16 %v474
    %v1610 = vunpack.c.h.b16 %v474
    %v1611 = vunpack.c.l.b16 %v475
    %v1612 = vunpack.c.h.b16 %v475
    %v1613 = vunpack.c.l.b16 %v476
    %v1614 = vunpack.c.h.b16 %v476
    %v1615 = vunpack.c.l.b16 %v477
    %v1616 = vunpack.c.h.b16 %v477
    %v1617 = vunpack.c.l.b16 %v478
    %v1618 = vunpack.c.h.b16 %v478
    %v1619 = vunpack.c.l.b16 %v479
    %v1620 = vunpack.c.h.b16 %v479
    %v1621 = vunpack.c.l.b16 %v480
    %v1622 = vunpack.c.h.b16 %v480
    %v1623 = vunpack.c.l.b16 %v481
    %v1624 = vunpack.c.h.b16 %v481
    %v1625 = vunpack.c.l.b16 %v482
    %v1626 = vunpack.c.h.b16 %v482
    %v1627 = vunpack.c.l.b16 %v483
    %v1628 = vunpack.c.h.b16 %v483
    %v1629 = vunpack.c.l.b16 %v484
    %v1630 = vunpack.c.h.b16 %v484
    %v1631 = vunpack.c.l.b16 %v485
    %v1632 = vunpack.c.h.b16 %v485
    %v1633 = vunpack.c.l.b16 %v486
    %v1634 = vunpack.c.h.b16 %v486
    %v1635 = vunpack.c.l.b16 %v487
    %v1636 = vunpack.c.h.b16 %v487
    %v1637 = vunpack.c.l.b16 %v488
    %v1638 = vunpack.c.h.b16 %v488
    %v1639 = vunpack.c.l.b16 %v489
    %v1640 = vunpack.c.h.b16 %v489
    %v1641 = vunpack.c.l.b16 %v490
    %v1642 = vunpack.c.h.b16 %v490
    %v1643 = vunpack.c.l.b16 %v491
    %v1644 = vunpack.c.h.b16 %v491
    %v1645 = vunpack.c.l.b16 %v492
    %v1646 = vunpack.c.h.b16 %v492
    %v1647 = vunpack.c.l.b16 %v493
    %v1648 = vunpack.c.h.b16 %v493
    %v1649 = vunpack.c.l.b16 %v494
    %v1650 = vunpack.c.h.b16 %v494
    %v1651 = vunpack.c.l.b16 %v495
    %v1652 = vunpack.c.h.b16 %v495
    %v1653 = vunpack.c.l.b16 %v496
    %v1654 = vunpack.c.h.b16 %v496
    %v1655 = vunpack.c.l.b16 %v497
    %v1656 = vunpack.c.h.b16 %v497
    %v1657 = vunpack.c.l.b16 %v498
    %v1658 = vunpack.c.h.b16 %v498
    %v1659 = vunpack.c.l.b16 %v499
    %v1660 = vunpack.c.h.b16 %v499
    %v1661 = vunpack.c.l.b16 %v500
    %v1662 = vunpack.c.h.b16 %v500
    %v1663 = vunpack.c.l.b16 %v501
    %v1664 = vunpack.c.h.b16 %v501
    %v1665 = vunpack.c.l.b16 %v502
    %v1666 = vunpack.c.h.b16 %v502
    %v1667 = vunpack.c.l.b16 %v503
    %v1668 = vunpack.c.h.b16 %v503
    %v1669 = vunpack.c.l.b16 %v504
    %v1670 = vunpack.c.h.b16 %v504
    %v1671 = vunpack.c.l.b16 %v505
    %v1672 = vunpack.c.h.b16 %v505
    %v1673 = vunpack.c.l.b16 %v506
    %v1674 = vunpack.c.h.b16 %v506
    %v1675 = vunpack.c.l.b16 %v507
    %v1676 = vunpack.c.h.b16 %v507
    %v1677 = vunpack.c.l.b16 %v508
    %v1678 = vunpack.c.h.b16 %v508
    %v1679 = vunpack.c.l.b16 %v509
    %v1680 = vunpack.c.h.b16 %v509
    %v1681 = vunpack.c.l.b16 %v510
    %v1682 = vunpack.c.h.b16 %v510
    %v1683 = vunpack.c.l.b16 %v511
    %v1684 = vunpack.c.h.b16 %v511
    %v1685 = vunpack.c.l.b16 %v512
    %v1686 = vunpack.c.h.b16 %v512
    %v1687 = vunpack.c.l.b16 %v513
    %v1688 = vunpack.c.h.b16 %v513
    %v1689 = vunpack.c.l.b16 %v514
    %v1690 = vunpack.c.h.b16 %v514
    %v1691 = vunpack.c.l.b16 %v515
    %v1692 = vunpack.c.h.b16 %v515
    %v1693 = vunpack.c.l.b16 %v516
    %v1694 = vunpack.c.h.b16 %v516
    %v1695 = vunpack.c.l.b16 %v517
    %v1696 = vunpack.c.h.b16 %v517
    %v1697 = vunpack.c.l.b16 %v518
    %v1698 = vunpack.c.h.b16 %v518
    %v1699 = vunpack.c.l.b16 %v519
    %v1700 = vunpack.c.h.b16 %v519
    %v1701 = vunpack.c.l.b16 %v520
    %v1702 = vunpack.c.h.b16 %v520
    %v1703 = vunpack.c.l.b16 %v521
    %v1704 = vunpack.c.h.b16 %v521
    %v1705 = vunpack.c.l.b16 %v522
    %v1706 = vunpack.c.h.b16 %v522
    %v1707 = vunpack.c.l.b16 %v523
    %v1708 = vunpack.c.h.b16 %v523
    %v1709 = vunpack.c.l.b16 %v524
    %v1710 = vunpack.c.h.b16 %v524
    %v1711 = vunpack.c.l.b16 %v525
    %v1712 = vunpack.c.h.b16 %v525
    %v1713 = vunpack.c.l.b16 %v526
    %v1714 = vunpack.c.h.b16 %v526
    %v1715 = vunpack.c.l.b16 %v527
    %v1716 = vunpack.c.h.b16 %v527
    %v1717 = vunpack.c.l.b16 %v528
    %v1718 = vunpack.c.h.b16 %v528
    %v1719 = vunpack.c.l.b16 %v529
    %v1720 = vunpack.c.h.b16 %v529
    %v1721 = vunpack.c.l.b16 %v530
    %v1722 = vunpack.c.h.b16 %v530
    %v1723 = vunpack.c.l.b16 %v531
    %v1724 = vunpack.c.h.b16 %v531
    %v1725 = vunpack.c.l.b16 %v532
    %v1726 = vunpack.c.h.b16 %v532
    %v1727 = vunpack.c.l.b16 %v533
    %v1728 = vunpack.c.h.b16 %v533
    %v1729 = vunpack.c.l.b16 %v534
    %v1730 = vunpack.c.h.b16 %v534
    %v1731 = vunpack.c.l.b16 %v535
    %v1732 = vunpack.c.h.b16 %v535
    %v1733 = vunpack.c.l.b16 %v536
    %v1734 = vunpack.c.h.b16 %v536
    %v1735 = vunpack.c.l.b16 %v537
    %v1736 = vunpack.c.h.b16 %v537
    %v1737 = vunpack.c.l.b16 %v538
    %v1738 = vunpack.c.h.b16 %v538
    %v1739 = vunpack.c.l.b16 %v539
    %v1740 = vunpack.c.h.b16 %v539
    %v1741 = vunpack.c.l.b16 %v540
    %v1742 = vunpack.c.h.b16 %v540
    %v1743 = vunpack.c.l.b16 %v541
    %v1744 = vunpack.c.h.b16 %v541
    %v1745 = vunpack.c.l.b16 %v542
    %v1746 = vunpack.c.h.b16 %v542
    %v1747 = vunpack.c.l.b16 %v543
    %v1748 = vunpack.c.h.b16 %v543
    %v1749 = vunpack.c.l.b16 %v544
    %v1750 = vunpack.c.h.b16 %v544
    %v1751 = vunpack.c.l.b16 %v545
    %v1752 = vunpack.c.h.b16 %v545
    %v1753 = vunpack.c.l.b16 %v546
    %v1754 = vunpack.c.h.b16 %v546
    %v1755 = vunpack.c.l.b16 %v547
    %v1756 = vunpack.c.h.b16 %v547
    %v1757 = vunpack.c.l.b16 %v548
    %v1758 = vunpack.c.h.b16 %v548
    %v1759 = vunpack.c.l.b16 %v549
    %v1760 = vunpack.c.h.b16 %v549
    %v1761 = vunpack.c.l.b16 %v550
    %v1762 = vunpack.c.h.b16 %v550
    %v1763 = vunpack.c.l.b16 %v551
    %v1764 = vunpack.c.h.b16 %v551
    %v1765 = vunpack.c.l.b16 %v552
    %v1766 = vunpack.c.h.b16 %v552
    %v1767 = vunpack.c.l.b16 %v553
    %v1768 = vunpack.c.h.b16 %v553
    %v1769 = vunpack.c.l.b16 %v554
    %v1770 = vunpack.c.h.b16 %v554
    %v1771 = vunpack.c.l.b16 %v555
    %v1772 = vunpack.c.h.b16 %v555
    %v1773 = vunpack.c.l.b16 %v556
    %v1774 = vunpack.c.h.b16 %v556
    %v1775 = vunpack.c.l.b16 %v557
    %v1776 = vunpack.c.h.b16 %v557
    %v1777 = vunpack.c.l.b16 %v558
    %v1778 = vunpack.c.h.b16 %v558
    %v1779 = vunpack.c.l.b16 %v559
    %v1780 = vunpack.c.h.b16 %v559
    %v1781 = vunpack.c.l.b16 %v560
    %v1782 = vunpack.c.h.b16 %v560
    %v1783 = vunpack.c.l.b16 %v561
    %v1784 = vunpack.c.h.b16 %v561
    %v1785 = vunpack.c.l.b16 %v562
    %v1786 = vunpack.c.h.b16 %v562
    %v1787 = vunpack.c.l.b16 %v563
    %v1788 = vunpack.c.h.b16 %v563
    %v1789 = vunpack.c.l.b16 %v564
    %v1790 = vunpack.c.h.b16 %v564
    %v1791 = vunpack.c.l.b16 %v565
    %v1792 = vunpack.c.h.b16 %v565
    %v1793 = vunpack.c.l.b16 %v566
    %v1794 = vunpack.c.h.b16 %v566
    %v1795 = vunpack.c.l.b16 %v567
    %v1796 = vunpack.c.h.b16 %v567
    %v1797 = vunpack.c.l.b16 %v568
    %v1798 = vunpack.c.h.b16 %v568
    %v1799 = vunpack.c.l.b16 %v569
    %v1800 = vunpack.c.h.b16 %v569
    %v1801 = vunpack.c.l.b16 %v570
    %v1802 = vunpack.c.h.b16 %v570
    %v1803 = vunpack.c.l.b16 %v571
    %v1804 = vunpack.c.h.b16 %v571
    %v1805 = vunpack.c.l.b16 %v572
    %v1806 = vunpack.c.h.b16 %v572
    %v1807 = vunpack.c.l.b16 %v573
    %v1808 = vunpack.c.h.b16 %v573
    %v1809 = vunpack.c.l.b16 %v574
    %v1810 = vunpack.c.h.b16 %v574
    %v1811 = vunpack.c.l.b16 %v575
    %v1812 = vunpack.c.h.b16 %v575
    %v1813 = vunpack.c.l.b16 %v576
    %v1814 = vunpack.c.h.b16 %v576
    %v1815 = vunpack.c.l.b16 %v577
    %v1816 = vunpack.c.h.b16 %v577
    %v1817 = vunpack.c.l.b16 %v578
    %v1818 = vunpack.c.h.b16 %v578
    %v1819 = vunpack.c.l.b16 %v579
    %v1820 = vunpack.c.h.b16 %v579
    %v1821 = vunpack.c.l.b16 %v580
    %v1822 = vunpack.c.h.b16 %v580
    %v1823 = vunpack.c.l.b16 %v581
    %v1824 = vunpack.c.h.b16 %v581
    %v1825 = vunpack.c.l.b16 %v582
    %v1826 = vunpack.c.h.b16 %v582
    %v1827 = vunpack.c.l.b16 %v583
    %v1828 = vunpack.c.h.b16 %v583
    %v1829 = vunpack.c.l.b16 %v584
    %v1830 = vunpack.c.h.b16 %v584
    %v1831 = vunpack.c.l.b16 %v585
    %v1832 = vunpack.c.h.b16 %v585
    %v1833 = vunpack.c.l.b16 %v586
    %v1834 = vunpack.c.h.b16 %v586
    %v1835 = vunpack.c.l.b16 %v587
    %v1836 = vunpack.c.h.b16 %v587
    %v1837 = vunpack.c.l.b16 %v588
    %v1838 = vunpack.c.h.b16 %v588
    %v1839 = vunpack.c.l.b16 %v589
    %v1840 = vunpack.c.h.b16 %v589
    %v1841 = vunpack.c.l.b16 %v590
    %v1842 = vunpack.c.h.b16 %v590
    %v1843 = vunpack.c.l.b16 %v591
    %v1844 = vunpack.c.h.b16 %v591
    %v1845 = vpack.c.b16 %v1069, %v1061
    %v1846 = vpack.c.b16 %v1070, %v1062
    %v1847 = vpack.c.b16 %v1071, %v1063
    %v1848 = vpack.c.b16 %v1072, %v1064
    %v1849 = vpack.c.b16 %v1073, %v1065
    %v1850 = vpack.c.b16 %v1074, %v1066
    %v1851 = vpack.c.b16 %v1075, %v1067
    %v1852 = vpack.c.b16 %v1076, %v1068
    %v1853 = vpack.c.b16 %v1085, %v1077
    %v1854 = vpack.c.b16 %v1086, %v1078
    %v1855 = vpack.c.b16 %v1087, %v1079
    %v1856 = vpack.c.b16 %v1088, %v1080
    %v1857 = vpack.c.b16 %v1089, %v1081
    %v1858 = vpack.c.b16 %v1090, %v1082
    %v1859 = vpack.c.b16 %v1091, %v1083
    %v1860 = vpack.c.b16 %v1092, %v1084
    %v1861 = vpack.c.b16 %v1101, %v1093
    %v1862 = vpack.c.b16 %v1102, %v1094
    %v1863 = vpack.c.b16 %v1103, %v1095
    %v1864 = vpack.c.b16 %v1104, %v1096
    %v1865 = vpack.c.b16 %v1105, %v1097
    %v1866 = vpack.c.b16 %v1106, %v1098
    %v1867 = vpack.c.b16 %v1107, %v1099
    %v1868 = vpack.c.b16 %v1108, %v1100
    %v1869 = vpack.c.b16 %v1117, %v1109
    %v1870 = vpack.c.b16 %v1118, %v1110
    %v1871 = vpack.c.b16 %v1119, %v1111
    %v1872 = vpack.c.b16 %v1120, %v1112
    %v1873 = vpack.c.b16 %v1121, %v1113
    %v1874 = vpack.c.b16 %v1122, %v1114
    %v1875 = vpack.c.b16 %v1123, %v1115
    %v1876 = vpack.c.b16 %v1124, %v1116
    %v1877 = vpack.c.b16 %v1133, %v1125
    %v1878 = vpack.c.b16 %v1134, %v1126
    %v1879 = vpack.c.b16 %v1135, %v1127
    %v1880 = vpack.c.b16 %v1136, %v1128
    %v1881 = vpack.c.b16 %v1137, %v1129
    %v1882 = vpack.c.b16 %v1138, %v1130
    %v1883 = vpack.c.b16 %v1139, %v1131
    %v1884 = vpack.c.b16 %v1140, %v1132
    %v1885 = vpack.c.b16 %v1149, %v1141
    %v1886 = vpack.c.b16 %v1150, %v1142
    %v1887 = vpack.c.b16 %v1151, %v1143
    %v1888 = vpack.c.b16 %v1152, %v1144
    %v1889 = vpack.c.b16 %v1153, %v1145
    %v1890 = vpack.c.b16 %v1154, %v1146
    %v1891 = vpack.c.b16 %v1155, %v1147
    %v1892 = vpack.c.b16 %v1156, %v1148
    %v1893 = vpack.c.b16 %v1165, %v1157
    %v1894 = vpack.c.b16 %v1166, %v1158
    %v1895 = vpack.c.b16 %v1167, %v1159
    %v1896 = vpack.c.b16 %v1168, %v1160
    %v1897 = vpack.c.b16 %v1169, %v1161
    %v1898 = vpack.c.b16 %v1170, %v1162
    %v1899 = vpack.c.b16 %v1171, %v1163
    %v1900 = vpack.c.b16 %v1172, %v1164
    %v1901 = vpack.c.b16 %v1181, %v1173
    %v1902 = vpack.c.b16 %v1182, %v1174
    %v1903 = vpack.c.b16 %v1183, %v1175
    %v1904 = vpack.c.b16 %v1184, %v1176
    %v1905 = vpack.c.b16 %v1185, %v1177
    %v1906 = vpack.c.b16 %v1186, %v1178
    %v1907 = vpack.c.b16 %v1187, %v1179
    %v1908 = vpack.c.b16 %v1188, %v1180
    %v1909 = vpack.c.b16 %v1197, %v1189
    %v1910 = vpack.c.b16 %v1198, %v1190
    %v1911 = vpack.c.b16 %v1199, %v1191
    %v1912 = vpack.c.b16 %v1200, %v1192
    %v1913 = vpack.c.b16 %v1201, %v1193
    %v1914 = vpack.c.b16 %v1202, %v1194
    %v1915 = vpack.c.b16 %v1203, %v1195
    %v1916 = vpack.c.b16 %v1204, %v1196
    %v1917 = vpack.c.b16 %v1213, %v1205
    %v1918 = vpack.c.b16 %v1214, %v1206
    %v1919 = vpack.c.b16 %v1215, %v1207
    %v1920 = vpack.c.b16 %v1216, %v1208
    %v1921 = vpack.c.b16 %v1217, %v1209
    %v1922 = vpack.c.b16 %v1218, %v1210
    %v1923 = vpack.c.b16 %v1219, %v1211
    %v1924 = vpack.c.b16 %v1220, %v1212
    %v1925 = vpack.c.b16 %v1229, %v1221
    %v1926 = vpack.c.b16 %v1230, %v1222
    %v1927 = vpack.c.b16 %v1231, %v1223
    %v1928 = vpack.c.b16 %v1232, %v1224
    %v1929 = vpack.c.b16 %v1233, %v1225
    %v1930 = vpack.c.b16 %v1234, %v1226
    %v1931 = vpack.c.b16 %v1235, %v1227
    %v1932 = vpack.c.b16 %v1236, %v1228
    %v1933 = vpack.c.b16 %v1245, %v1237
    %v1934 = vpack.c.b16 %v1246, %v1238
    %v1935 = vpack.c.b16 %v1247, %v1239
    %v1936 = vpack.c.b16 %v1248, %v1240
    %v1937 = vpack.c.b16 %v1249, %v1241
    %v1938 = vpack.c.b16 %v1250, %v1242
    %v1939 = vpack.c.b16 %v1251, %v1243
    %v1940 = vpack.c.b16 %v1252, %v1244
    %v1941 = vpack.c.b16 %v1261, %v1253
    %v1942 = vpack.c.b16 %v1262, %v1254
    %v1943 = vpack.c.b16 %v1263, %v1255
    %v1944 = vpack.c.b16 %v1264, %v1256
    %v1945 = vpack.c.b16 %v1265, %v1257
    %v1946 = vpack.c.b16 %v1266, %v1258
    %v1947 = vpack.c.b16 %v1267, %v1259
    %v1948 = vpack.c.b16 %v1268, %v1260
    %v1949 = vpack.c.b16 %v1277, %v1269
    %v1950 = vpack.c.b16 %v1278, %v1270
    %v1951 = vpack.c.b16 %v1279, %v1271
    %v1952 = vpack.c.b16 %v1280, %v1272
    %v1953 = vpack.c.b16 %v1281, %v1273
    %v1954 = vpack.c.b16 %v1282, %v1274
    %v1955 = vpack.c.b16 %v1283, %v1275
    %v1956 = vpack.c.b16 %v1284, %v1276
    %v1957 = vpack.c.b16 %v1293, %v1285
    %v1958 = vpack.c.b16 %v1294, %v1286
    %v1959 = vpack.c.b16 %v1295, %v1287
    %v1960 = vpack.c.b16 %v1296, %v1288
    %v1961 = vpack.c.b16 %v1297, %v1289
    %v1962 = vpack.c.b16 %v1298, %v1290
    %v1963 = vpack.c.b16 %v1299, %v1291
    %v1964 = vpack.c.b16 %v1300, %v1292
    %v1965 = vpack.c.b16 %v1309, %v1301
    %v1966 = vpack.c.b16 %v1310, %v1302
    %v1967 = vpack.c.b16 %v1311, %v1303
    %v1968 = vpack.c.b16 %v1312, %v1304
    %v1969 = vpack.c.b16 %v1313, %v1305
    %v1970 = vpack.c.b16 %v1314, %v1306
    %v1971 = vpack.c.b16 %v1315, %v1307
    %v1972 = vpack.c.b16 %v1316, %v1308
    %v1973 = vpack.c.b16 %v1325, %v1317
    %v1974 = vpack.c.b16 %v1326, %v1318
    %v1975 = vpack.c.b16 %v1327, %v1319
    %v1976 = vpack.c.b16 %v1328, %v1320
    %v1977 = vpack.c.b16 %v1329, %v1321
    %v1978 = vpack.c.b16 %v1330, %v1322
    %v1979 = vpack.c.b16 %v1331, %v1323
    %v1980 = vpack.c.b16 %v1332, %v1324
    %v1981 = vpack.c.b16 %v1341, %v1333
    %v1982 = vpack.c.b16 %v1342, %v1334
    %v1983 = vpack.c.b16 %v1343, %v1335
    %v1984 = vpack.c.b16 %v1344, %v1336
    %v1985 = vpack.c.b16 %v1345, %v1337
    %v1986 = vpack.c.b16 %v1346, %v1338
    %v1987 = vpack.c.b16 %v1347, %v1339
    %v1988 = vpack.c.b16 %v1348, %v1340
    %v1989 = vpack.c.b16 %v1357, %v1349
    %v1990 = vpack.c.b16 %v1358, %v1350
    %v1991 = vpack.c.b16 %v1359, %v1351
    %v1992 = vpack.c.b16 %v1360, %v1352
    %v1993 = vpack.c.b16 %v1361, %v1353
    %v1994 = vpack.c.b16 %v1362, %v1354
    %v1995 = vpack.c.b16 %v1363, %v1355
    %v1996 = vpack.c.b16 %v1364, %v1356
    %v1997 = vpack.c.b16 %v1373, %v1365
    %v1998 = vpack.c.b16 %v1374, %v1366
    %v1999 = vpack.c.b16 %v1375, %v1367
    %v2000 = vpack.c.b16 %v1376, %v1368
    %v2001 = vpack.c.b16 %v1377, %v1369
    %v2002 = vpack.c.b16 %v1378, %v1370
    %v2003 = vpack.c.b16 %v1379, %v1371
    %v2004 = vpack.c.b16 %v1380, %v1372
    %v2005 = vpack.c.b16 %v1389, %v1381
    %v2006 = vpack.c.b16 %v1390, %v1382
    %v2007 = vpack.c.b16 %v1391, %v1383
    %v2008 = vpack.c.b16 %v1392, %v1384
    %v2009 = vpack.c.b16 %v1393, %v1385
    %v2010 = vpack.c.b16 %v1394, %v1386
    %v2011 = vpack.c.b16 %v1395, %v1387
    %v2012 = vpack.c.b16 %v1396, %v1388
    %v2013 = vpack.c.b16 %v1405, %v1397
    %v2014 = vpack.c.b16 %v1406, %v1398
    %v2015 = vpack.c.b16 %v1407, %v1399
    %v2016 = vpack.c.b16 %v1408, %v1400
    %v2017 = vpack.c.b16 %v1409, %v1401
    %v2018 = vpack.c.b16 %v1410, %v1402
    %v2019 = vpack.c.b16 %v1411, %v1403
    %v2020 = vpack.c.b16 %v1412, %v1404
    %v2021 = vpack.c.b16 %v1421, %v1413
    %v2022 = vpack.c.b16 %v1422, %v1414
    %v2023 = vpack.c.b16 %v1423, %v1415
    %v2024 = vpack.c.b16 %v1424, %v1416
    %v2025 = vpack.c.b16 %v1425, %v1417
    %v2026 = vpack.c.b16 %v1426, %v1418
    %v2027 = vpack.c.b16 %v1427, %v1419
    %v2028 = vpack.c.b16 %v1428, %v1420
    %v2029 = vpack.c.b16 %v1437, %v1429
    %v2030 = vpack.c.b16 %v1438, %v1430
    %v2031 = vpack.c.b16 %v1439, %v1431
    %v2032 = vpack.c.b16 %v1440, %v1432
    %v2033 = vpack.c.b16 %v1441, %v1433
    %v2034 = vpack.c.b16 %v1442, %v1434
    %v2035 = vpack.c.b16 %v1443, %v1435
    %v2036 = vpack.c.b16 %v1444, %v1436
    %v2037 = vpack.c.b16 %v1453, %v1445
    %v2038 = vpack.c.b16 %v1454, %v1446
    %v2039 = vpack.c.b16 %v1455, %v1447
    %v2040 = vpack.c.b16 %v1456, %v1448
    %v2041 = vpack.c.b16 %v1457, %v1449
    %v2042 = vpack.c.b16 %v1458, %v1450
    %v2043 = vpack.c.b16 %v1459, %v1451
    %v2044 = vpack.c.b16 %v1460, %v1452
    %v2045 = vpack.c.b16 %v1469, %v1461
    %v2046 = vpack.c.b16 %v1470, %v1462
    %v2047 = vpack.c.b16 %v1471, %v1463
    %v2048 = vpack.c.b16 %v1472, %v1464
    %v2049 = vpack.c.b16 %v1473, %v1465
    %v2050 = vpack.c.b16 %v1474, %v1466
    %v2051 = vpack.c.b16 %v1475, %v1467
    %v2052 = vpack.c.b16 %v1476, %v1468
    %v2053 = vpack.c.b16 %v1485, %v1477
    %v2054 = vpack.c.b16 %v1486, %v1478
    %v2055 = vpack.c.b16 %v1487, %v1479
    %v2056 = vpack.c.b16 %v1488, %v1480
    %v2057 = vpack.c.b16 %v1489, %v1481
    %v2058 = vpack.c.b16 %v1490, %v1482
    %v2059 = vpack.c.b16 %v1491, %v1483
    %v2060 = vpack.c.b16 %v1492, %v1484
    %v2061 = vpack.c.b16 %v1501, %v1493
    %v2062 = vpack.c.b16 %v1502, %v1494
    %v2063 = vpack.c.b16 %v1503, %v1495
    %v2064 = vpack.c.b16 %v1504, %v1496
    %v2065 = vpack.c.b16 %v1505, %v1497
    %v2066 = vpack.c.b16 %v1506, %v1498
    %v2067 = vpack.c.b16 %v1507, %v1499
    %v2068 = vpack.c.b16 %v1508, %v1500
    %v2069 = vpack.c.b16 %v1517, %v1509
    %v2070 = vpack.c.b16 %v1518, %v1510
    %v2071 = vpack.c.b16 %v1519, %v1511
    %v2072 = vpack.c.b16 %v1520, %v1512
    %v2073 = vpack.c.b16 %v1521, %v1513
    %v2074 = vpack.c.b16 %v1522, %v1514
    %v2075 = vpack.c.b16 %v1523, %v1515
    %v2076 = vpack.c.b16 %v1524, %v1516
    %v2077 = vpack.c.b16 %v1533, %v1525
    %v2078 = vpack.c.b16 %v1534, %v1526
    %v2079 = vpack.c.b16 %v1535, %v1527
    %v2080 = vpack.c.b16 %v1536, %v1528
    %v2081 = vpack.c.b16 %v1537, %v1529
    %v2082 = vpack.c.b16 %v1538, %v1530
    %v2083 = vpack.c.b16 %v1539, %v1531
    %v2084 = vpack.c.b16 %v1540, %v1532
    %v2085 = vpack.c.b16 %v1549, %v1541
    %v2086 = vpack.c.b16 %v1550, %v1542
    %v2087 = vpack.c.b16 %v1551, %v1543
    %v2088 = vpack.c.b16 %v1552, %v1544
    %v2089 = vpack.c.b16 %v1553, %v1545
    %v2090 = vpack.c.b16 %v1554, %v1546
    %v2091 = vpack.c.b16 %v1555, %v1547
    %v2092 = vpack.c.b16 %v1556, %v1548
    %v2093 = vpack.c.b16 %v1565, %v1557
    %v2094 = vpack.c.b16 %v1566, %v1558
    %v2095 = vpack.c.b16 %v1567, %v1559
    %v2096 = vpack.c.b16 %v1568, %v1560
    %v2097 = vpack.c.b16 %v1569, %v1561
    %v2098 = vpack.c.b16 %v1570, %v1562
    %v2099 = vpack.c.b16 %v1571, %v1563
    %v2100 = vpack.c.b16 %v1572, %v1564
    %v2101 = vpack.c.b16 %v1581, %v1573
    %v2102 = vpack.c.b16 %v1582, %v1574
    %v2103 = vpack.c.b16 %v1583, %v1575
    %v2104 = vpack.c.b16 %v1584, %v1576
    %v2105 = vpack.c.b16 %v1585, %v1577
    %v2106 = vpack.c.b16 %v1586, %v1578
    %v2107 = vpack.c.b16 %v1587, %v1579
    %v2108 = vpack.c.b16 %v1588, %v1580
    %v2109 = vpack.c.b16 %v1597, %v1589
    %v2110 = vpack.c.b16 %v1598, %v1590
    %v2111 = vpack.c.b16 %v1599, %v1591
    %v2112 = vpack.c.b16 %v1600, %v1592
    %v2113 = vpack.c.b16 %v1601, %v1593
    %v2114 = vpack.c.b16 %v1602, %v1594
    %v2115 = vpack.c.b16 %v1603, %v1595
    %v2116 = vpack.c.b16 %v1604, %v1596
    %v2117 = vpack.c.b16 %v1613, %v1605
    %v2118 = vpack.c.b16 %v1614, %v1606
    %v2119 = vpack.c.b16 %v1615, %v1607
    %v2120 = vpack.c.b16 %v1616, %v1608
    %v2121 = vpack.c.b16 %v1617, %v1609
    %v2122 = vpack.c.b16 %v1618, %v1610
    %v2123 = vpack.c.b16 %v1619, %v1611
    %v2124 = vpack.c.b16 %v1620, %v1612
    %v2125 = vpack.c.b16 %v1629, %v1621
    %v2126 = vpack.c.b16 %v1630, %v1622
    %v2127 = vpack.c.b16 %v1631, %v1623
    %v2128 = vpack.c.b16 %v1632, %v1624
    %v2129 = vpack.c.b16 %v1633, %v1625
    %v2130 = vpack.c.b16 %v1634, %v1626
    %v2131 = vpack.c.b16 %v1635, %v1627
    %v2132 = vpack.c.b16 %v1636, %v1628
    %v2133 = vpack.c.b16 %v1645, %v1637
    %v2134 = vpack.c.b16 %v1646, %v1638
    %v2135 = vpack.c.b16 %v1647, %v1639
    %v2136 = vpack.c.b16 %v1648, %v1640
    %v2137 = vpack.c.b16 %v1649, %v1641
    %v2138 = vpack.c.b16 %v1650, %v1642
    %v2139 = vpack.c.b16 %v1651, %v1643
    %v2140 = vpack.c.b16 %v1652, %v1644
    %v2141 = vpack.c.b16 %v1661, %v1653
    %v2142 = vpack.c.b16 %v1662, %v1654
    %v2143 = vpack.c.b16 %v1663, %v1655
    %v2144 = vpack.c.b16 %v1664, %v1656
    %v2145 = vpack.c.b16 %v1665, %v1657
    %v2146 = vpack.c.b16 %v1666, %v1658
    %v2147 = vpack.c.b16 %v1667, %v1659
    %v2148 = vpack.c.b16 %v1668, %v1660
    %v2149 = vpack.c.b16 %v1677, %v1669
    %v2150 = vpack.c.b16 %v1678, %v1670
    %v2151 = vpack.c.b16 %v1679, %v1671
    %v2152 = vpack.c.b16 %v1680, %v1672
    %v2153 = vpack.c.b16 %v1681, %v1673
    %v2154 = vpack.c.b16 %v1682, %v1674
    %v2155 = vpack.c.b16 %v1683, %v1675
    %v2156 = vpack.c.b16 %v1684, %v1676
    %v2157 = vpack.c.b16 %v1693, %v1685
    %v2158 = vpack.c.b16 %v1694, %v1686
    %v2159 = vpack.c.b16 %v1695, %v1687
    %v2160 = vpack.c.b16 %v1696, %v1688
    %v2161 = vpack.c.b16 %v1697, %v1689
    %v2162 = vpack.c.b16 %v1698, %v1690
    %v2163 = vpack.c.b16 %v1699, %v1691
    %v2164 = vpack.c.b16 %v1700, %v1692
    %v2165 = vpack.c.b16 %v1709, %v1701
    %v2166 = vpack.c.b16 %v1710, %v1702
    %v2167 = vpack.c.b16 %v1711, %v1703
    %v2168 = vpack.c.b16 %v1712, %v1704
    %v2169 = vpack.c.b16 %v1713, %v1705
    %v2170 = vpack.c.b16 %v1714, %v1706
    %v2171 = vpack.c.b16 %v1715, %v1707
    %v2172 = vpack.c.b16 %v1716, %v1708
    %v2173 = vpack.c.b16 %v1725, %v1717
    %v2174 = vpack.c.b16 %v1726, %v1718
    %v2175 = vpack.c.b16 %v1727, %v1719
    %v2176 = vpack.c.b16 %v1728, %v1720
    %v2177 = vpack.c.b16 %v1729, %v1721
    %v2178 = vpack.c.b16 %v1730, %v1722
    %v2179 = vpack.c.b16 %v1731, %v1723
    %v2180 = vpack.c.b16 %v1732, %v1724
    %v2181 = vpack.c.b16 %v1741, %v1733
    %v2182 = vpack.c.b16 %v1742, %v1734
    %v2183 = vpack.c.b16 %v1743, %v1735
    %v2184 = vpack.c.b16 %v1744, %v1736
    %v2185 = vpack.c.b16 %v1745, %v1737
    %v2186 = vpack.c.b16 %v1746, %v1738
    %v2187 = vpack.c.b16 %v1747, %v1739
    %v2188 = vpack.c.b16 %v1748, %v1740
    %v2189 = vpack.c.b16 %v1757, %v1749
    %v2190 = vpack.c.b16 %v1758, %v1750
    %v2191 = vpack.c.b16 %v1759, %v1751
    %v2192 = vpack.c.b16 %v1760, %v1752
    %v2193 = vpack.c.b16 %v1761, %v1753
    %v2194 = vpack.c.b16 %v1762, %v1754
    %v2195 = vpack.c.b16 %v1763, %v1755
    %v2196 = vpack.c.b16 %v1764, %v1756
    %v2197 = vpack.c.b16 %v1773, %v1765
    %v2198 = vpack.c.b16 %v1774, %v1766
    %v2199 = vpack.c.b16 %v1775, %v1767
    %v2200 = vpack.c.b16 %v1776, %v1768
    %v2201 = vpack.c.b16 %v1777, %v1769
    %v2202 = vpack.c.b16 %v1778, %v1770
    %v2203 = vpack.c.b16 %v1779, %v1771
    %v2204 = vpack.c.b16 %v1780, %v1772
    %v2205 = vpack.c.b16 %v1789, %v1781
    %v2206 = vpack.c.b16 %v1790, %v1782
    %v2207 = vpack.c.b16 %v1791, %v1783
    %v2208 = vpack.c.b16 %v1792, %v1784
    %v2209 = vpack.c.b16 %v1793, %v1785
    %v2210 = vpack.c.b16 %v1794, %v1786
    %v2211 = vpack.c.b16 %v1795, %v1787
    %v2212 = vpack.c.b16 %v1796, %v1788
    %v2213 = vpack.c.b16 %v1805, %v1797
    %v2214 = vpack.c.b16 %v1806, %v1798
    %v2215 = vpack.c.b16 %v1807, %v1799
    %v2216 = vpack.c.b16 %v1808, %v1800
    %v2217 = vpack.c.b16 %v1809, %v1801
    %v2218 = vpack.c.b16 %v1810, %v1802
    %v2219 = vpack.c.b16 %v1811, %v1803
    %v2220 = vpack.c.b16 %v1812, %v1804
    %v2221 = vpack.c.b16 %v1821, %v1813
    %v2222 = vpack.c.b16 %v1822, %v1814
    %v2223 = vpack.c.b16 %v1823, %v1815
    %v2224 = vpack.c.b16 %v1824, %v1816
    %v2225 = vpack.c.b16 %v1825, %v1817
    %v2226 = vpack.c.b16 %v1826, %v1818
    %v2227 = vpack.c.b16 %v1827, %v1819
    %v2228 = vpack.c.b16 %v1828, %v1820
    %v2229 = vpack.c.b16 %v1837, %v1829
    %v2230 = vpack.c.b16 %v1838, %v1830
    %v2231 = vpack.c.b16 %v1839, %v1831
    %v2232 = vpack.c.b16 %v1840, %v1832
    %v2233 = vpack.c.b16 %v1841, %v1833
    %v2234 = vpack.c.b16 %v1842, %v1834
    %v2235 = vpack.c.b16 %v1843, %v1835
    %v2236 = vpack.c.b16 %v1844, %v1836
    %vm2629 = vcmask 130048
    %v2631 = vsel %vm2629, %v199, 0
    %2633 = vmatprep.subr.bf16.mxu0 %v1846
    %2634 = vmatpush1.bf16.msra.mxu0 %v1845
    %2635 = vmatprep.subr.bf16.mxu0 %v1854
    %2636 = vmatpush1.bf16.msra.mxu0 %v1853
    %2637 = vmatprep.subr.bf16.mxu0 %v1862
    %2638 = vmatpush1.bf16.msra.mxu0 %v1861
    %2639 = vmatprep.subr.bf16.mxu0 %v1870
    %2640 = vmatpush1.bf16.msra.mxu0 %v1869
    %2641 = vmatprep.subr.bf16.mxu0 %v1878
    %2642 = vmatpush1.bf16.msra.mxu0 %v1877
    %2643 = vmatprep.subr.bf16.mxu0 %v1886
    %2644 = vmatpush1.bf16.msra.mxu0 %v1885
    %2645 = vmatprep.subr.bf16.mxu0 %v1894
    %2646 = vmatpush1.bf16.msra.mxu0 %v1893
    %2647 = vmatprep.subr.bf16.mxu0 %v1902
    %2648 = vmatpush1.bf16.msra.mxu0 %v1901
    %2649 = vmatprep.subr.bf16.mxu0 %v1910
    %2650 = vmatpush1.bf16.msra.mxu0 %v1909
    %2651 = vmatprep.subr.bf16.mxu0 %v1918
    %2652 = vmatpush1.bf16.msra.mxu0 %v1917
    %2653 = vmatprep.subr.bf16.mxu0 %v1926
    %2654 = vmatpush1.bf16.msra.mxu0 %v1925
    %2655 = vmatprep.subr.bf16.mxu0 %v1934
    %2656 = vmatpush1.bf16.msra.mxu0 %v1933
    %2657 = vmatprep.subr.bf16.mxu0 %v1942
    %2658 = vmatpush1.bf16.msra.mxu0 %v1941
    %2659 = vmatprep.subr.bf16.mxu0 %v1950
    %2660 = vmatpush1.bf16.msra.mxu0 %v1949
    %2661 = vmatprep.subr.bf16.mxu0 %v1958
    %2662 = vmatpush1.bf16.msra.mxu0 %v1957
    %2663 = vmatprep.subr.bf16.mxu0 %v1966
    %2664 = vmatpush1.bf16.msra.mxu0 %v1965
    %2665 = vmatprep.mubr.bf16.mxu0 %v194
    %2666 = vmatmul.mubr.bf16.gmra.mrb[0].mxu0 %v193
    %v2667 = vpop.f32.mrb[0].mxu0
    %v2668 = vadd.f32 %v640, %v2667
    %v2669 = vpop.f32.mrb[0].mxu0
    %v2670 = vadd.f32 %v644, %v2669
    %v2671 = vpop.f32.mrb[0].mxu0
    %v2672 = vadd.f32 %v640, %v2671
    %v2673 = vpop.f32.mrb[0].mxu0
    %v2674 = vadd.f32 %v644, %v2673
    %2675 = vdwg.mxu0
    %2676 = vmatprep.subr.bf16.mxu0 %v1974
    %2677 = vmatpush1.bf16.msra.mxu0 %v1973
    %2678 = vmatprep.subr.bf16.mxu0 %v1982
    %2679 = vmatpush1.bf16.msra.mxu0 %v1981
    %2680 = vmatprep.subr.bf16.mxu0 %v1990
    %2681 = vmatpush1.bf16.msra.mxu0 %v1989
    %2682 = vmatprep.subr.bf16.mxu0 %v1998
    %2683 = vmatpush1.bf16.msra.mxu0 %v1997
    %2684 = vmatprep.subr.bf16.mxu0 %v2006
    %2685 = vmatpush1.bf16.msra.mxu0 %v2005
    %2686 = vmatprep.subr.bf16.mxu0 %v2014
    %2687 = vmatpush1.bf16.msra.mxu0 %v2013
    %2688 = vmatprep.subr.bf16.mxu0 %v2022
    %2689 = vmatpush1.bf16.msra.mxu0 %v2021
    %2690 = vmatprep.subr.bf16.mxu0 %v2030
    %2691 = vmatpush1.bf16.msra.mxu0 %v2029
    %2692 = vmatprep.subr.bf16.mxu0 %v2038
    %2693 = vmatpush1.bf16.msra.mxu0 %v2037
    %2694 = vmatprep.subr.bf16.mxu0 %v2046
    %2695 = vmatpush1.bf16.msra.mxu0 %v2045
    %2696 = vmatprep.subr.bf16.mxu0 %v2054
    %2697 = vmatpush1.bf16.msra.mxu0 %v2053
    %2698 = vmatprep.subr.bf16.mxu0 %v2062
    %2699 = vmatpush1.bf16.msra.mxu0 %v2061
    %2700 = vmatprep.subr.bf16.mxu0 %v2070
    %2701 = vmatpush1.bf16.msra.mxu0 %v2069
    %2702 = vmatprep.subr.bf16.mxu0 %v2078
    %2703 = vmatpush1.bf16.msra.mxu0 %v2077
    %2704 = vmatprep.subr.bf16.mxu0 %v2086
    %2705 = vmatpush1.bf16.msra.mxu0 %v2085
    %2706 = vmatprep.subr.bf16.mxu0 %v2094
    %2707 = vmatpush1.bf16.msra.mxu0 %v2093
    %2708 = vmatprep.mubr.bf16.mxu0 %v196
    %2709 = vmatmul.mubr.bf16.gmra.mrb[0].mxu0 %v195
    %v2710 = vpop.f32.mrb[0].mxu0
    %v2711 = vadd.f32 %v2668, %v2710
    %v2712 = vpop.f32.mrb[0].mxu0
    %v2713 = vadd.f32 %v2670, %v2712
    %v2714 = vpop.f32.mrb[0].mxu0
    %v2715 = vadd.f32 %v2672, %v2714
    %v2716 = vpop.f32.mrb[0].mxu0
    %v2717 = vadd.f32 %v2674, %v2716
    %2718 = vdwg.mxu0
    %2719 = vmatprep.subr.bf16.mxu0 %v2102
    %2720 = vmatpush1.bf16.msra.mxu0 %v2101
    %2721 = vmatprep.subr.bf16.mxu0 %v2110
    %2722 = vmatpush1.bf16.msra.mxu0 %v2109
    %2723 = vmatprep.subr.bf16.mxu0 %v2118
    %2724 = vmatpush1.bf16.msra.mxu0 %v2117
    %2725 = vmatprep.subr.bf16.mxu0 %v2126
    %2726 = vmatpush1.bf16.msra.mxu0 %v2125
    %2727 = vmatprep.subr.bf16.mxu0 %v2134
    %2728 = vmatpush1.bf16.msra.mxu0 %v2133
    %2729 = vmatprep.subr.bf16.mxu0 %v2142
    %2730 = vmatpush1.bf16.msra.mxu0 %v2141
    %2731 = vmatprep.subr.bf16.mxu0 %v2150
    %2732 = vmatpush1.bf16.msra.mxu0 %v2149
    %2733 = vmatprep.subr.bf16.mxu0 %v2158
    %2734 = vmatpush1.bf16.msra.mxu0 %v2157
    %2735 = vmatprep.subr.bf16.mxu0 %v2166
    %2736 = vmatpush1.bf16.msra.mxu0 %v2165
    %2737 = vmatprep.subr.bf16.mxu0 %v2174
    %2738 = vmatpush1.bf16.msra.mxu0 %v2173
    %2739 = vmatprep.subr.bf16.mxu0 %v2182
    %2740 = vmatpush1.bf16.msra.mxu0 %v2181
    %2741 = vmatprep.subr.bf16.mxu0 %v2190
    %2742 = vmatpush1.bf16.msra.mxu0 %v2189
    %2743 = vmatprep.subr.bf16.mxu0 %v2198
    %2744 = vmatpush1.bf16.msra.mxu0 %v2197
    %2745 = vmatprep.subr.bf16.mxu0 %v2206
    %2746 = vmatpush1.bf16.msra.mxu0 %v2205
    %2747 = vmatprep.subr.bf16.mxu0 %v2214
    %2748 = vmatpush1.bf16.msra.mxu0 %v2213
    %2749 = vmatprep.subr.bf16.mxu0 %v2222
    %2750 = vmatpush1.bf16.msra.mxu0 %v2221
    %2751 = vmatprep.mubr.bf16.mxu0 %v198
    %2752 = vmatmul.mubr.bf16.gmra.mrb[0].mxu0 %v197
    %v2753 = vpop.f32.mrb[0].mxu0
    %v2754 = vadd.f32 %v2711, %v2753
    %v2755 = vpop.f32.mrb[0].mxu0
    %v2756 = vadd.f32 %v2713, %v2755
    %v2757 = vpop.f32.mrb[0].mxu0
    %v2758 = vadd.f32 %v2715, %v2757
    %v2759 = vpop.f32.mrb[0].mxu0
    %v2760 = vadd.f32 %v2717, %v2759
    %2761 = vdwg.mxu0
    %2762 = vmatprep.subr.bf16.mxu0 %v2230
    %2763 = vmatpush1.bf16.msra.mxu0 %v2229
    %2764 = vmatprep.subr.bf16.mxu0 0
    %2765 = vmatpush1.bf16.msra.mxu0 0
    %2766 = vmatprep.subr.bf16.mxu0 0
    %2767 = vmatpush1.bf16.msra.mxu0 0
    %2768 = vmatprep.subr.bf16.mxu0 0
    %2769 = vmatpush1.bf16.msra.mxu0 0
    %2770 = vmatprep.subr.bf16.mxu0 0
    %2771 = vmatpush1.bf16.msra.mxu0 0
    %2772 = vmatprep.subr.bf16.mxu0 0
    %2773 = vmatpush1.bf16.msra.mxu0 0
    %2774 = vmatprep.subr.bf16.mxu0 0
    %2775 = vmatpush1.bf16.msra.mxu0 0
    %2776 = vmatprep.subr.bf16.mxu0 0
    %2777 = vmatpush1.bf16.msra.mxu0 0
    %2778 = vmatprep.subr.bf16.mxu0 0
    %2779 = vmatpush1.bf16.msra.mxu0 0
    %2780 = vmatprep.subr.bf16.mxu0 0
    %2781 = vmatpush1.bf16.msra.mxu0 0
    %2782 = vmatprep.subr.bf16.mxu0 0
    %2783 = vmatpush1.bf16.msra.mxu0 0
    %2784 = vmatprep.subr.bf16.mxu0 0
    %2785 = vmatpush1.bf16.msra.mxu0 0
    %2786 = vmatprep.subr.bf16.mxu0 0
    %2787 = vmatpush1.bf16.msra.mxu0 0
    %2788 = vmatprep.subr.bf16.mxu0 0
    %2789 = vmatpush1.bf16.msra.mxu0 0
    %2790 = vmatprep.subr.bf16.mxu0 0
    %2791 = vmatpush1.bf16.msra.mxu0 0
    %2792 = vmatprep.subr.bf16.mxu0 0
    %2793 = vmatpush1.bf16.msra.mxu0 0
    %2794 = vmatprep.mubr.bf16.mxu0 0
    %2795 = vmatmul.mubr.bf16.gmra.mrb[0].mxu0 %v2631
    %v2796 = vpop.f32.mrb[0].mxu0
    %v2797 = vadd.f32 %v2754, %v2796
    %v2798 = vpop.f32.mrb[0].mxu0
    %v2799 = vadd.f32 %v2756, %v2798
    %v2800 = vpop.f32.mrb[0].mxu0
    %v2801 = vadd.f32 %v2758, %v2800
    %v2802 = vpop.f32.mrb[0].mxu0
    %v2803 = vadd.f32 %v2760, %v2802
    %2804 = vdwg.mxu0
    %2805 = vmatprep.subr.bf16.mxu0 %v1848
    %2806 = vmatpush1.bf16.msra.mxu0 %v1847
    %2807 = vmatprep.subr.bf16.mxu0 %v1856
    %2808 = vmatpush1.bf16.msra.mxu0 %v1855
    %2809 = vmatprep.subr.bf16.mxu0 %v1864
    %2810 = vmatpush1.bf16.msra.mxu0 %v1863
    %2811 = vmatprep.subr.bf16.mxu0 %v1872
    %2812 = vmatpush1.bf16.msra.mxu0 %v1871
    %2813 = vmatprep.subr.bf16.mxu0 %v1880
    %2814 = vmatpush1.bf16.msra.mxu0 %v1879
    %2815 = vmatprep.subr.bf16.mxu0 %v1888
    %2816 = vmatpush1.bf16.msra.mxu0 %v1887
    %2817 = vmatprep.subr.bf16.mxu0 %v1896
    %2818 = vmatpush1.bf16.msra.mxu0 %v1895
    %2819 = vmatprep.subr.bf16.mxu0 %v1904
    %2820 = vmatpush1.bf16.msra.mxu0 %v1903
    %2821 = vmatprep.subr.bf16.mxu0 %v1912
    %2822 = vmatpush1.bf16.msra.mxu0 %v1911
    %2823 = vmatprep.subr.bf16.mxu0 %v1920
    %2824 = vmatpush1.bf16.msra.mxu0 %v1919
    %2825 = vmatprep.subr.bf16.mxu0 %v1928
    %2826 = vmatpush1.bf16.msra.mxu0 %v1927
    %2827 = vmatprep.subr.bf16.mxu0 %v1936
    %2828 = vmatpush1.bf16.msra.mxu0 %v1935
    %2829 = vmatprep.subr.bf16.mxu0 %v1944
    %2830 = vmatpush1.bf16.msra.mxu0 %v1943
    %2831 = vmatprep.subr.bf16.mxu0 %v1952
    %2832 = vmatpush1.bf16.msra.mxu0 %v1951
    %2833 = vmatprep.subr.bf16.mxu0 %v1960
    %2834 = vmatpush1.bf16.msra.mxu0 %v1959
    %2835 = vmatprep.subr.bf16.mxu0 %v1968
    %2836 = vmatpush1.bf16.msra.mxu0 %v1967
    %2837 = vmatprep.mubr.bf16.mxu0 %v194
    %2838 = vmatmul.mubr.bf16.gmra.mrb[0].mxu0 %v193
    %v2839 = vpop.f32.mrb[0].mxu0
    %v2840 = vadd.f32 %v648, %v2839
    %v2841 = vpop.f32.mrb[0].mxu0
    %v2842 = vadd.f32 %v652, %v2841
    %v2843 = vpop.f32.mrb[0].mxu0
    %v2844 = vadd.f32 %v648, %v2843
    %v2845 = vpop.f32.mrb[0].mxu0
    %v2846 = vadd.f32 %v652, %v2845
    %2847 = vdwg.mxu0
    %2848 = vmatprep.subr.bf16.mxu0 %v1976
    %2849 = vmatpush1.bf16.msra.mxu0 %v1975
    %2850 = vmatprep.subr.bf16.mxu0 %v1984
    %2851 = vmatpush1.bf16.msra.mxu0 %v1983
    %2852 = vmatprep.subr.bf16.mxu0 %v1992
    %2853 = vmatpush1.bf16.msra.mxu0 %v1991
    %2854 = vmatprep.subr.bf16.mxu0 %v2000
    %2855 = vmatpush1.bf16.msra.mxu0 %v1999
    %2856 = vmatprep.subr.bf16.mxu0 %v2008
    %2857 = vmatpush1.bf16.msra.mxu0 %v2007
    %2858 = vmatprep.subr.bf16.mxu0 %v2016
    %2859 = vmatpush1.bf16.msra.mxu0 %v2015
    %2860 = vmatprep.subr.bf16.mxu0 %v2024
    %2861 = vmatpush1.bf16.msra.mxu0 %v2023
    %2862 = vmatprep.subr.bf16.mxu0 %v2032
    %2863 = vmatpush1.bf16.msra.mxu0 %v2031
    %2864 = vmatprep.subr.bf16.mxu0 %v2040
    %2865 = vmatpush1.bf16.msra.mxu0 %v2039
    %2866 = vmatprep.subr.bf16.mxu0 %v2048
    %2867 = vmatpush1.bf16.msra.mxu0 %v2047
    %2868 = vmatprep.subr.bf16.mxu0 %v2056
    %2869 = vmatpush1.bf16.msra.mxu0 %v2055
    %2870 = vmatprep.subr.bf16.mxu0 %v2064
    %2871 = vmatpush1.bf16.msra.mxu0 %v2063
    %2872 = vmatprep.subr.bf16.mxu0 %v2072
    %2873 = vmatpush1.bf16.msra.mxu0 %v2071
    %2874 = vmatprep.subr.bf16.mxu0 %v2080
    %2875 = vmatpush1.bf16.msra.mxu0 %v2079
    %2876 = vmatprep.subr.bf16.mxu0 %v2088
    %2877 = vmatpush1.bf16.msra.mxu0 %v2087
    %2878 = vmatprep.subr.bf16.mxu0 %v2096
    %2879 = vmatpush1.bf16.msra.mxu0 %v2095
    %2880 = vmatprep.mubr.bf16.mxu0 %v196
    %2881 = vmatmul.mubr.bf16.gmra.mrb[0].mxu0 %v195
    %v2882 = vpop.f32.mrb[0].mxu0
    %v2883 = vadd.f32 %v2840, %v2882
    %v2884 = vpop.f32.mrb[0].mxu0
    %v2885 = vadd.f32 %v2842, %v2884
    %v2886 = vpop.f32.mrb[0].mxu0
    %v2887 = vadd.f32 %v2844, %v2886
    %v2888 = vpop.f32.mrb[0].mxu0
    %v2889 = vadd.f32 %v2846, %v2888
    %2890 = vdwg.mxu0
    %2891 = vmatprep.subr.bf16.mxu0 %v2104
    %2892 = vmatpush1.bf16.msra.mxu0 %v2103
    %2893 = vmatprep.subr.bf16.mxu0 %v2112
    %2894 = vmatpush1.bf16.msra.mxu0 %v2111
    %2895 = vmatprep.subr.bf16.mxu0 %v2120
    %2896 = vmatpush1.bf16.msra.mxu0 %v2119
    %2897 = vmatprep.subr.bf16.mxu0 %v2128
    %2898 = vmatpush1.bf16.msra.mxu0 %v2127
    %2899 = vmatprep.subr.bf16.mxu0 %v2136
    %2900 = vmatpush1.bf16.msra.mxu0 %v2135
    %2901 = vmatprep.subr.bf16.mxu0 %v2144
    %2902 = vmatpush1.bf16.msra.mxu0 %v2143
    %2903 = vmatprep.subr.bf16.mxu0 %v2152
    %2904 = vmatpush1.bf16.msra.mxu0 %v2151
    %2905 = vmatprep.subr.bf16.mxu0 %v2160
    %2906 = vmatpush1.bf16.msra.mxu0 %v2159
    %2907 = vmatprep.subr.bf16.mxu0 %v2168
    %2908 = vmatpush1.bf16.msra.mxu0 %v2167
    %2909 = vmatprep.subr.bf16.mxu0 %v2176
    %2910 = vmatpush1.bf16.msra.mxu0 %v2175
    %2911 = vmatprep.subr.bf16.mxu0 %v2184
    %2912 = vmatpush1.bf16.msra.mxu0 %v2183
    %2913 = vmatprep.subr.bf16.mxu0 %v2192
    %2914 = vmatpush1.bf16.msra.mxu0 %v2191
    %2915 = vmatprep.subr.bf16.mxu0 %v2200
    %2916 = vmatpush1.bf16.msra.mxu0 %v2199
    %2917 = vmatprep.subr.bf16.mxu0 %v2208
    %2918 = vmatpush1.bf16.msra.mxu0 %v2207
    %2919 = vmatprep.subr.bf16.mxu0 %v2216
    %2920 = vmatpush1.bf16.msra.mxu0 %v2215
    %2921 = vmatprep.subr.bf16.mxu0 %v2224
    %2922 = vmatpush1.bf16.msra.mxu0 %v2223
    %2923 = vmatprep.mubr.bf16.mxu0 %v198
    %2924 = vmatmul.mubr.bf16.gmra.mrb[0].mxu0 %v197
    %v2925 = vpop.f32.mrb[0].mxu0
    %v2926 = vadd.f32 %v2883, %v2925
    %v2927 = vpop.f32.mrb[0].mxu0
    %v2928 = vadd.f32 %v2885, %v2927
    %v2929 = vpop.f32.mrb[0].mxu0
    %v2930 = vadd.f32 %v2887, %v2929
    %v2931 = vpop.f32.mrb[0].mxu0
    %v2932 = vadd.f32 %v2889, %v2931
    %2933 = vdwg.mxu0
    %2934 = vmatprep.subr.bf16.mxu0 %v2232
    %2935 = vmatpush1.bf16.msra.mxu0 %v2231
    %2936 = vmatprep.subr.bf16.mxu0 0
    %2937 = vmatpush1.bf16.msra.mxu0 0
    %2938 = vmatprep.subr.bf16.mxu0 0
    %2939 = vmatpush1.bf16.msra.mxu0 0
    %2940 = vmatprep.subr.bf16.mxu0 0
    %2941 = vmatpush1.bf16.msra.mxu0 0
    %2942 = vmatprep.subr.bf16.mxu0 0
    %2943 = vmatpush1.bf16.msra.mxu0 0
    %2944 = vmatprep.subr.bf16.mxu0 0
    %2945 = vmatpush1.bf16.msra.mxu0 0
    %2946 = vmatprep.subr.bf16.mxu0 0
    %2947 = vmatpush1.bf16.msra.mxu0 0
    %2948 = vmatprep.subr.bf16.mxu0 0
    %2949 = vmatpush1.bf16.msra.mxu0 0
    %2950 = vmatprep.subr.bf16.mxu0 0
    %2951 = vmatpush1.bf16.msra.mxu0 0
    %2952 = vmatprep.subr.bf16.mxu0 0
    %2953 = vmatpush1.bf16.msra.mxu0 0
    %2954 = vmatprep.subr.bf16.mxu0 0
    %2955 = vmatpush1.bf16.msra.mxu0 0
    %2956 = vmatprep.subr.bf16.mxu0 0
    %2957 = vmatpush1.bf16.msra.mxu0 0
    %2958 = vmatprep.subr.bf16.mxu0 0
    %2959 = vmatpush1.bf16.msra.mxu0 0
    %2960 = vmatprep.subr.bf16.mxu0 0
    %2961 = vmatpush1.bf16.msra.mxu0 0
    %2962 = vmatprep.subr.bf16.mxu0 0
    %2963 = vmatpush1.bf16.msra.mxu0 0
    %2964 = vmatprep.subr.bf16.mxu0 0
    %2965 = vmatpush1.bf16.msra.mxu0 0
    %2966 = vmatprep.mubr.bf16.mxu0 0
    %2967 = vmatmul.mubr.bf16.gmra.mrb[0].mxu0 %v2631
    %v2968 = vpop.f32.mrb[0].mxu0
    %v2969 = vadd.f32 %v2926, %v2968
    %v2970 = vpop.f32.mrb[0].mxu0
    %v2971 = vadd.f32 %v2928, %v2970
    %v2972 = vpop.f32.mrb[0].mxu0
    %v2973 = vadd.f32 %v2930, %v2972
    %v2974 = vpop.f32.mrb[0].mxu0
    %v2975 = vadd.f32 %v2932, %v2974
    %2976 = vdwg.mxu0
    %2977 = vmatprep.subr.bf16.mxu0 %v1850
    %2978 = vmatpush1.bf16.msra.mxu0 %v1849
    %2979 = vmatprep.subr.bf16.mxu0 %v1858
    %2980 = vmatpush1.bf16.msra.mxu0 %v1857
    %2981 = vmatprep.subr.bf16.mxu0 %v1866
    %2982 = vmatpush1.bf16.msra.mxu0 %v1865
    %2983 = vmatprep.subr.bf16.mxu0 %v1874
    %2984 = vmatpush1.bf16.msra.mxu0 %v1873
    %2985 = vmatprep.subr.bf16.mxu0 %v1882
    %2986 = vmatpush1.bf16.msra.mxu0 %v1881
    %2987 = vmatprep.subr.bf16.mxu0 %v1890
    %2988 = vmatpush1.bf16.msra.mxu0 %v1889
    %2989 = vmatprep.subr.bf16.mxu0 %v1898
    %2990 = vmatpush1.bf16.msra.mxu0 %v1897
    %2991 = vmatprep.subr.bf16.mxu0 %v1906
    %2992 = vmatpush1.bf16.msra.mxu0 %v1905
    %2993 = vmatprep.subr.bf16.mxu0 %v1914
    %2994 = vmatpush1.bf16.msra.mxu0 %v1913
    %2995 = vmatprep.subr.bf16.mxu0 %v1922
    %2996 = vmatpush1.bf16.msra.mxu0 %v1921
    %2997 = vmatprep.subr.bf16.mxu0 %v1930
    %2998 = vmatpush1.bf16.msra.mxu0 %v1929
    %2999 = vmatprep.subr.bf16.mxu0 %v1938
    %3000 = vmatpush1.bf16.msra.mxu0 %v1937
    %3001 = vmatprep.subr.bf16.mxu0 %v1946
    %3002 = vmatpush1.bf16.msra.mxu0 %v1945
    %3003 = vmatprep.subr.bf16.mxu0 %v1954
    %3004 = vmatpush1.bf16.msra.mxu0 %v1953
    %3005 = vmatprep.subr.bf16.mxu0 %v1962
    %3006 = vmatpush1.bf16.msra.mxu0 %v1961
    %3007 = vmatprep.subr.bf16.mxu0 %v1970
    %3008 = vmatpush1.bf16.msra.mxu0 %v1969
    %3009 = vmatprep.mubr.bf16.mxu0 %v194
    %3010 = vmatmul.mubr.bf16.gmra.mrb[0].mxu0 %v193
    %v3011 = vpop.f32.mrb[0].mxu0
    %v3012 = vadd.f32 %v656, %v3011
    %v3013 = vpop.f32.mrb[0].mxu0
    %v3014 = vadd.f32 %v660, %v3013
    %v3015 = vpop.f32.mrb[0].mxu0
    %v3016 = vadd.f32 %v656, %v3015
    %v3017 = vpop.f32.mrb[0].mxu0
    %v3018 = vadd.f32 %v660, %v3017
    %3019 = vdwg.mxu0
    %3020 = vmatprep.subr.bf16.mxu0 %v1978
    %3021 = vmatpush1.bf16.msra.mxu0 %v1977
    %3022 = vmatprep.subr.bf16.mxu0 %v1986
    %3023 = vmatpush1.bf16.msra.mxu0 %v1985
    %3024 = vmatprep.subr.bf16.mxu0 %v1994
    %3025 = vmatpush1.bf16.msra.mxu0 %v1993
    %3026 = vmatprep.subr.bf16.mxu0 %v2002
    %3027 = vmatpush1.bf16.msra.mxu0 %v2001
    %3028 = vmatprep.subr.bf16.mxu0 %v2010
    %3029 = vmatpush1.bf16.msra.mxu0 %v2009
    %3030 = vmatprep.subr.bf16.mxu0 %v2018
    %3031 = vmatpush1.bf16.msra.mxu0 %v2017
    %3032 = vmatprep.subr.bf16.mxu0 %v2026
    %3033 = vmatpush1.bf16.msra.mxu0 %v2025
    %3034 = vmatprep.subr.bf16.mxu0 %v2034
    %3035 = vmatpush1.bf16.msra.mxu0 %v2033
    %3036 = vmatprep.subr.bf16.mxu0 %v2042
    %3037 = vmatpush1.bf16.msra.mxu0 %v2041
    %3038 = vmatprep.subr.bf16.mxu0 %v2050
    %3039 = vmatpush1.bf16.msra.mxu0 %v2049
    %3040 = vmatprep.subr.bf16.mxu0 %v2058
    %3041 = vmatpush1.bf16.msra.mxu0 %v2057
    %3042 = vmatprep.subr.bf16.mxu0 %v2066
    %3043 = vmatpush1.bf16.msra.mxu0 %v2065
    %3044 = vmatprep.subr.bf16.mxu0 %v2074
    %3045 = vmatpush1.bf16.msra.mxu0 %v2073
    %3046 = vmatprep.subr.bf16.mxu0 %v2082
    %3047 = vmatpush1.bf16.msra.mxu0 %v2081
    %3048 = vmatprep.subr.bf16.mxu0 %v2090
    %3049 = vmatpush1.bf16.msra.mxu0 %v2089
    %3050 = vmatprep.subr.bf16.mxu0 %v2098
    %3051 = vmatpush1.bf16.msra.mxu0 %v2097
    %3052 = vmatprep.mubr.bf16.mxu0 %v196
    %3053 = vmatmul.mubr.bf16.gmra.mrb[0].mxu0 %v195
    %v3054 = vpop.f32.mrb[0].mxu0
    %v3055 = vadd.f32 %v3012, %v3054
    %v3056 = vpop.f32.mrb[0].mxu0
    %v3057 = vadd.f32 %v3014, %v3056
    %v3058 = vpop.f32.mrb[0].mxu0
    %v3059 = vadd.f32 %v3016, %v3058
    %v3060 = vpop.f32.mrb[0].mxu0
    %v3061 = vadd.f32 %v3018, %v3060
    %3062 = vdwg.mxu0
    %3063 = vmatprep.subr.bf16.mxu0 %v2106
    %3064 = vmatpush1.bf16.msra.mxu0 %v2105
    %3065 = vmatprep.subr.bf16.mxu0 %v2114
    %3066 = vmatpush1.bf16.msra.mxu0 %v2113
    %3067 = vmatprep.subr.bf16.mxu0 %v2122
    %3068 = vmatpush1.bf16.msra.mxu0 %v2121
    %3069 = vmatprep.subr.bf16.mxu0 %v2130
    %3070 = vmatpush1.bf16.msra.mxu0 %v2129
    %3071 = vmatprep.subr.bf16.mxu0 %v2138
    %3072 = vmatpush1.bf16.msra.mxu0 %v2137
    %3073 = vmatprep.subr.bf16.mxu0 %v2146
    %3074 = vmatpush1.bf16.msra.mxu0 %v2145
    %3075 = vmatprep.subr.bf16.mxu0 %v2154
    %3076 = vmatpush1.bf16.msra.mxu0 %v2153
    %3077 = vmatprep.subr.bf16.mxu0 %v2162
    %3078 = vmatpush1.bf16.msra.mxu0 %v2161
    %3079 = vmatprep.subr.bf16.mxu0 %v2170
    %3080 = vmatpush1.bf16.msra.mxu0 %v2169
    %3081 = vmatprep.subr.bf16.mxu0 %v2178
    %3082 = vmatpush1.bf16.msra.mxu0 %v2177
    %3083 = vmatprep.subr.bf16.mxu0 %v2186
    %3084 = vmatpush1.bf16.msra.mxu0 %v2185
    %3085 = vmatprep.subr.bf16.mxu0 %v2194
    %3086 = vmatpush1.bf16.msra.mxu0 %v2193
    %3087 = vmatprep.subr.bf16.mxu0 %v2202
    %3088 = vmatpush1.bf16.msra.mxu0 %v2201
    %3089 = vmatprep.subr.bf16.mxu0 %v2210
    %3090 = vmatpush1.bf16.msra.mxu0 %v2209
    %3091 = vmatprep.subr.bf16.mxu0 %v2218
    %3092 = vmatpush1.bf16.msra.mxu0 %v2217
    %3093 = vmatprep.subr.bf16.mxu0 %v2226
    %3094 = vmatpush1.bf16.msra.mxu0 %v2225
    %3095 = vmatprep.mubr.bf16.mxu0 %v198
    %3096 = vmatmul.mubr.bf16.gmra.mrb[0].mxu0 %v197
    %v3097 = vpop.f32.mrb[0].mxu0
    %v3098 = vadd.f32 %v3055, %v3097
    %v3099 = vpop.f32.mrb[0].mxu0
    %v3100 = vadd.f32 %v3057, %v3099
    %v3101 = vpop.f32.mrb[0].mxu0
    %v3102 = vadd.f32 %v3059, %v3101
    %v3103 = vpop.f32.mrb[0].mxu0
    %v3104 = vadd.f32 %v3061, %v3103
    %3105 = vdwg.mxu0
    %3106 = vmatprep.subr.bf16.mxu0 %v2234
    %3107 = vmatpush1.bf16.msra.mxu0 %v2233
    %3108 = vmatprep.subr.bf16.mxu0 0
    %3109 = vmatpush1.bf16.msra.mxu0 0
    %3110 = vmatprep.subr.bf16.mxu0 0
    %3111 = vmatpush1.bf16.msra.mxu0 0
    %3112 = vmatprep.subr.bf16.mxu0 0
    %3113 = vmatpush1.bf16.msra.mxu0 0
    %3114 = vmatprep.subr.bf16.mxu0 0
    %3115 = vmatpush1.bf16.msra.mxu0 0
    %3116 = vmatprep.subr.bf16.mxu0 0
    %3117 = vmatpush1.bf16.msra.mxu0 0
    %3118 = vmatprep.subr.bf16.mxu0 0
    %3119 = vmatpush1.bf16.msra.mxu0 0
    %3120 = vmatprep.subr.bf16.mxu0 0
    %3121 = vmatpush1.bf16.msra.mxu0 0
    %3122 = vmatprep.subr.bf16.mxu0 0
    %3123 = vmatpush1.bf16.msra.mxu0 0
    %3124 = vmatprep.subr.bf16.mxu0 0
    %3125 = vmatpush1.bf16.msra.mxu0 0
    %3126 = vmatprep.subr.bf16.mxu0 0
    %3127 = vmatpush1.bf16.msra.mxu0 0
    %3128 = vmatprep.subr.bf16.mxu0 0
    %3129 = vmatpush1.bf16.msra.mxu0 0
    %3130 = vmatprep.subr.bf16.mxu0 0
    %3131 = vmatpush1.bf16.msra.mxu0 0
    %3132 = vmatprep.subr.bf16.mxu0 0
    %3133 = vmatpush1.bf16.msra.mxu0 0
    %3134 = vmatprep.subr.bf16.mxu0 0
    %3135 = vmatpush1.bf16.msra.mxu0 0
    %3136 = vmatprep.subr.bf16.mxu0 0
    %3137 = vmatpush1.bf16.msra.mxu0 0
    %3138 = vmatprep.mubr.bf16.mxu0 0
    %3139 = vmatmul.mubr.bf16.gmra.mrb[0].mxu0 %v2631
    %v3140 = vpop.f32.mrb[0].mxu0
    %v3141 = vadd.f32 %v3098, %v3140
    %v3142 = vpop.f32.mrb[0].mxu0
    %v3143 = vadd.f32 %v3100, %v3142
    %v3144 = vpop.f32.mrb[0].mxu0
    %v3145 = vadd.f32 %v3102, %v3144
    %v3146 = vpop.f32.mrb[0].mxu0
    %v3147 = vadd.f32 %v3104, %v3146
    %3148 = vdwg.mxu0
    %3149 = vmatprep.subr.bf16.mxu0 %v1852
    %3150 = vmatpush1.bf16.msra.mxu0 %v1851
    %3151 = vmatprep.subr.bf16.mxu0 %v1860
    %3152 = vmatpush1.bf16.msra.mxu0 %v1859
    %3153 = vmatprep.subr.bf16.mxu0 %v1868
    %3154 = vmatpush1.bf16.msra.mxu0 %v1867
    %3155 = vmatprep.subr.bf16.mxu0 %v1876
    %3156 = vmatpush1.bf16.msra.mxu0 %v1875
    %3157 = vmatprep.subr.bf16.mxu0 %v1884
    %3158 = vmatpush1.bf16.msra.mxu0 %v1883
    %3159 = vmatprep.subr.bf16.mxu0 %v1892
    %3160 = vmatpush1.bf16.msra.mxu0 %v1891
    %3161 = vmatprep.subr.bf16.mxu0 %v1900
    %3162 = vmatpush1.bf16.msra.mxu0 %v1899
    %3163 = vmatprep.subr.bf16.mxu0 %v1908
    %3164 = vmatpush1.bf16.msra.mxu0 %v1907
    %3165 = vmatprep.subr.bf16.mxu0 %v1916
    %3166 = vmatpush1.bf16.msra.mxu0 %v1915
    %3167 = vmatprep.subr.bf16.mxu0 %v1924
    %3168 = vmatpush1.bf16.msra.mxu0 %v1923
    %3169 = vmatprep.subr.bf16.mxu0 %v1932
    %3170 = vmatpush1.bf16.msra.mxu0 %v1931
    %3171 = vmatprep.subr.bf16.mxu0 %v1940
    %3172 = vmatpush1.bf16.msra.mxu0 %v1939
    %3173 = vmatprep.subr.bf16.mxu0 %v1948
    %3174 = vmatpush1.bf16.msra.mxu0 %v1947
    %3175 = vmatprep.subr.bf16.mxu0 %v1956
    %3176 = vmatpush1.bf16.msra.mxu0 %v1955
    %3177 = vmatprep.subr.bf16.mxu0 %v1964
    %3178 = vmatpush1.bf16.msra.mxu0 %v1963
    %3179 = vmatprep.subr.bf16.mxu0 %v1972
    %3180 = vmatpush1.bf16.msra.mxu0 %v1971
    %3181 = vmatprep.mubr.bf16.mxu0 %v194
    %3182 = vmatmul.mubr.bf16.gmra.mrb[0].mxu0 %v193
    %v3183 = vpop.f32.mrb[0].mxu0
    %v3184 = vadd.f32 %v664, %v3183
    %v3185 = vpop.f32.mrb[0].mxu0
    %v3186 = vadd.f32 %v668, %v3185
    %v3187 = vpop.f32.mrb[0].mxu0
    %v3188 = vadd.f32 %v664, %v3187
    %v3189 = vpop.f32.mrb[0].mxu0
    %v3190 = vadd.f32 %v668, %v3189
    %3191 = vdwg.mxu0
    %3192 = vmatprep.subr.bf16.mxu0 %v1980
    %3193 = vmatpush1.bf16.msra.mxu0 %v1979
    %3194 = vmatprep.subr.bf16.mxu0 %v1988
    %3195 = vmatpush1.bf16.msra.mxu0 %v1987
    %3196 = vmatprep.subr.bf16.mxu0 %v1996
    %3197 = vmatpush1.bf16.msra.mxu0 %v1995
    %3198 = vmatprep.subr.bf16.mxu0 %v2004
    %3199 = vmatpush1.bf16.msra.mxu0 %v2003
    %3200 = vmatprep.subr.bf16.mxu0 %v2012
    %3201 = vmatpush1.bf16.msra.mxu0 %v2011
    %3202 = vmatprep.subr.bf16.mxu0 %v2020
    %3203 = vmatpush1.bf16.msra.mxu0 %v2019
    %3204 = vmatprep.subr.bf16.mxu0 %v2028
    %3205 = vmatpush1.bf16.msra.mxu0 %v2027
    %3206 = vmatprep.subr.bf16.mxu0 %v2036
    %3207 = vmatpush1.bf16.msra.mxu0 %v2035
    %3208 = vmatprep.subr.bf16.mxu0 %v2044
    %3209 = vmatpush1.bf16.msra.mxu0 %v2043
    %3210 = vmatprep.subr.bf16.mxu0 %v2052
    %3211 = vmatpush1.bf16.msra.mxu0 %v2051
    %3212 = vmatprep.subr.bf16.mxu0 %v2060
    %3213 = vmatpush1.bf16.msra.mxu0 %v2059
    %3214 = vmatprep.subr.bf16.mxu0 %v2068
    %3215 = vmatpush1.bf16.msra.mxu0 %v2067
    %3216 = vmatprep.subr.bf16.mxu0 %v2076
    %3217 = vmatpush1.bf16.msra.mxu0 %v2075
    %3218 = vmatprep.subr.bf16.mxu0 %v2084
    %3219 = vmatpush1.bf16.msra.mxu0 %v2083
    %3220 = vmatprep.subr.bf16.mxu0 %v2092
    %3221 = vmatpush1.bf16.msra.mxu0 %v2091
    %3222 = vmatprep.subr.bf16.mxu0 %v2100
    %3223 = vmatpush1.bf16.msra.mxu0 %v2099
    %3224 = vmatprep.mubr.bf16.mxu0 %v196
    %3225 = vmatmul.mubr.bf16.gmra.mrb[0].mxu0 %v195
    %v3226 = vpop.f32.mrb[0].mxu0
    %v3227 = vadd.f32 %v3184, %v3226
    %v3228 = vpop.f32.mrb[0].mxu0
    %v3229 = vadd.f32 %v3186, %v3228
    %v3230 = vpop.f32.mrb[0].mxu0
    %v3231 = vadd.f32 %v3188, %v3230
    %v3232 = vpop.f32.mrb[0].mxu0
    %v3233 = vadd.f32 %v3190, %v3232
    %3234 = vdwg.mxu0
    %3235 = vmatprep.subr.bf16.mxu0 %v2108
    %3236 = vmatpush1.bf16.msra.mxu0 %v2107
    %3237 = vmatprep.subr.bf16.mxu0 %v2116
    %3238 = vmatpush1.bf16.msra.mxu0 %v2115
    %3239 = vmatprep.subr.bf16.mxu0 %v2124
    %3240 = vmatpush1.bf16.msra.mxu0 %v2123
    %3241 = vmatprep.subr.bf16.mxu0 %v2132
    %3242 = vmatpush1.bf16.msra.mxu0 %v2131
    %3243 = vmatprep.subr.bf16.mxu0 %v2140
    %3244 = vmatpush1.bf16.msra.mxu0 %v2139
    %3245 = vmatprep.subr.bf16.mxu0 %v2148
    %3246 = vmatpush1.bf16.msra.mxu0 %v2147
    %3247 = vmatprep.subr.bf16.mxu0 %v2156
    %3248 = vmatpush1.bf16.msra.mxu0 %v2155
    %3249 = vmatprep.subr.bf16.mxu0 %v2164
    %3250 = vmatpush1.bf16.msra.mxu0 %v2163
    %3251 = vmatprep.subr.bf16.mxu0 %v2172
    %3252 = vmatpush1.bf16.msra.mxu0 %v2171
    %3253 = vmatprep.subr.bf16.mxu0 %v2180
    %3254 = vmatpush1.bf16.msra.mxu0 %v2179
    %3255 = vmatprep.subr.bf16.mxu0 %v2188
    %3256 = vmatpush1.bf16.msra.mxu0 %v2187
    %3257 = vmatprep.subr.bf16.mxu0 %v2196
    %3258 = vmatpush1.bf16.msra.mxu0 %v2195
    %3259 = vmatprep.subr.bf16.mxu0 %v2204
    %3260 = vmatpush1.bf16.msra.mxu0 %v2203
    %3261 = vmatprep.subr.bf16.mxu0 %v2212
    %3262 = vmatpush1.bf16.msra.mxu0 %v2211
    %3263 = vmatprep.subr.bf16.mxu0 %v2220
    %3264 = vmatpush1.bf16.msra.mxu0 %v2219
    %3265 = vmatprep.subr.bf16.mxu0 %v2228
    %3266 = vmatpush1.bf16.msra.mxu0 %v2227
    %3267 = vmatprep.mubr.bf16.mxu0 %v198
    %3268 = vmatmul.mubr.bf16.gmra.mrb[0].mxu0 %v197
    %v3269 = vpop.f32.mrb[0].mxu0
    %v3270 = vadd.f32 %v3227, %v3269
    %v3271 = vpop.f32.mrb[0].mxu0
    %v3272 = vadd.f32 %v3229, %v3271
    %v3273 = vpop.f32.mrb[0].mxu0
    %v3274 = vadd.f32 %v3231, %v3273
    %v3275 = vpop.f32.mrb[0].mxu0
    %v3276 = vadd.f32 %v3233, %v3275
    %3277 = vdwg.mxu0
    %3278 = vmatprep.subr.bf16.mxu0 %v2236
    %3279 = vmatpush1.bf16.msra.mxu0 %v2235
    %3280 = vmatprep.subr.bf16.mxu0 0
    %3281 = vmatpush1.bf16.msra.mxu0 0
    %3282 = vmatprep.subr.bf16.mxu0 0
    %3283 = vmatpush1.bf16.msra.mxu0 0
    %3284 = vmatprep.subr.bf16.mxu0 0
    %3285 = vmatpush1.bf16.msra.mxu0 0
    %3286 = vmatprep.subr.bf16.mxu0 0
    %3287 = vmatpush1.bf16.msra.mxu0 0
    %3288 = vmatprep.subr.bf16.mxu0 0
    %3289 = vmatpush1.bf16.msra.mxu0 0
    %3290 = vmatprep.subr.bf16.mxu0 0
    %3291 = vmatpush1.bf16.msra.mxu0 0
    %3292 = vmatprep.subr.bf16.mxu0 0
    %3293 = vmatpush1.bf16.msra.mxu0 0
    %3294 = vmatprep.subr.bf16.mxu0 0
    %3295 = vmatpush1.bf16.msra.mxu0 0
    %3296 = vmatprep.subr.bf16.mxu0 0
    %3297 = vmatpush1.bf16.msra.mxu0 0
    %3298 = vmatprep.subr.bf16.mxu0 0
    %3299 = vmatpush1.bf16.msra.mxu0 0
    %3300 = vmatprep.subr.bf16.mxu0 0
    %3301 = vmatpush1.bf16.msra.mxu0 0
    %3302 = vmatprep.subr.bf16.mxu0 0
    %3303 = vmatpush1.bf16.msra.mxu0 0
    %3304 = vmatprep.subr.bf16.mxu0 0
    %3305 = vmatpush1.bf16.msra.mxu0 0
    %3306 = vmatprep.subr.bf16.mxu0 0
    %3307 = vmatpush1.bf16.msra.mxu0 0
    %3308 = vmatprep.subr.bf16.mxu0 0
    %3309 = vmatpush1.bf16.msra.mxu0 0
    %3310 = vmatprep.mubr.bf16.mxu0 0
    %3311 = vmatmul.mubr.bf16.gmra.mrb[0].mxu0 %v2631
    %v3312 = vpop.f32.mrb[0].mxu0
    %v3313 = vadd.f32 %v3270, %v3312
    %v3314 = vpop.f32.mrb[0].mxu0
    %v3315 = vadd.f32 %v3272, %v3314
    %v3316 = vpop.f32.mrb[0].mxu0
    %v3317 = vadd.f32 %v3274, %v3316
    %v3318 = vpop.f32.mrb[0].mxu0
    %v3319 = vadd.f32 %v3276, %v3318
    %3320 = vdwg.mxu0
    %v3321 = vmax.f32 %v2797, 0.0
    %v3322 = vmax.f32 %v2799, 0.0
    %v3323 = vmax.f32 %v2969, 0.0
    %v3324 = vmax.f32 %v2971, 0.0
    %v3325 = vmax.f32 %v3141, 0.0
    %v3326 = vmax.f32 %v3143, 0.0
    %v3327 = vmax.f32 %v3313, 0.0
    %v3328 = vmax.f32 %v3315, 0.0
    %v3329 = vmax.f32 %v2801, 0.0
    %v3330 = vmax.f32 %v2803, 0.0
    %v3331 = vmax.f32 %v2973, 0.0
    %v3332 = vmax.f32 %v2975, 0.0
    %v3333 = vmax.f32 %v3145, 0.0
    %v3334 = vmax.f32 %v3147, 0.0
    %v3335 = vmax.f32 %v3317, 0.0
    %v3336 = vmax.f32 %v3319, 0.0
    %v3337 = vpack.c.bf16 %v3329, %v3321
    %v3338 = vpack.c.bf16 %v3330, %v3322
    %v3339 = vpack.c.bf16 %v3331, %v3323
    %v3340 = vpack.c.bf16 %v3332, %v3324
    %v3341 = vpack.c.bf16 %v3333, %v3325
    %v3342 = vpack.c.bf16 %v3334, %v3326
    %v3343 = vpack.c.bf16 %v3335, %v3327
    %v3344 = vpack.c.bf16 %v3336, %v3328
    %v3345 = vld [vmem:[#allocation8] sm:$0xff]
    %v3346 = vld [vmem:[#allocation8 + $0x8] sm:$0xff]
    %v3347 = vld [vmem:[#allocation8 + $0x10] sm:$0xff]
    %v3348 = vld [vmem:[#allocation8 + $0x18] sm:$0xff]
    %v3349 = vld [vmem:[#allocation8 + $0x20] sm:$0xff]
    %v3350 = vld [vmem:[#allocation8 + $0x28] sm:$0xff]
    %v3351 = vld [vmem:[#allocation8 + $0x30] sm:$0xff]
    %v3352 = vld [vmem:[#allocation8 + $0x38] sm:$0xff]
    %v3353 = vld [vmem:[#allocation8 + $0x40] sm:$0xff]
    %v3354 = vld [vmem:[#allocation8 + $0x48] sm:$0xff]
    %v3355 = vld [vmem:[#allocation8 + $0x50] sm:$0xff]
    %v3356 = vld [vmem:[#allocation8 + $0x58] sm:$0xff]
    %v3357 = vld [vmem:[#allocation8 + $0x60] sm:$0xff]
    %v3358 = vld [vmem:[#allocation8 + $0x68] sm:$0xff]
    %v3359 = vld [vmem:[#allocation8 + $0x70] sm:$0xff]
    %v3360 = vld [vmem:[#allocation8 + $0x78] sm:$0xff]
    %v3361 = vld [vmem:[#allocation8 + $0x80] sm:$0xff]
    %v3362 = vld [vmem:[#allocation8 + $0x88] sm:$0xff]
    %v3363 = vld [vmem:[#allocation8 + $0x90] sm:$0xff]
    %v3364 = vld [vmem:[#allocation8 + $0x98] sm:$0xff]
    %v3365 = vld [vmem:[#allocation8 + $0xa0] sm:$0xff]
    %v3366 = vld [vmem:[#allocation8 + $0xa8] sm:$0xff]
    %v3367 = vld [vmem:[#allocation8 + $0xb0] sm:$0xff]
    %v3368 = vld [vmem:[#allocation8 + $0xb8] sm:$0xff]
    %v3369 = vld [vmem:[#allocation8 + $0xc0] sm:$0xff]
    %v3370 = vld [vmem:[#allocation8 + $0xc8] sm:$0xff]
    %v3371 = vld [vmem:[#allocation8 + $0xd0] sm:$0xff]
    %v3372 = vld [vmem:[#allocation8 + $0xd8] sm:$0xff]
    %v3373 = vld [vmem:[#allocation8 + $0xe0] sm:$0xff]
    %v3374 = vld [vmem:[#allocation8 + $0xe8] sm:$0xff]
    %v3375 = vld [vmem:[#allocation8 + $0xf0] sm:$0xff]
    %v3376 = vld [vmem:[#allocation8 + $0xf8] sm:$0xff]
    %v3377 = vld [vmem:[#allocation8 + $0x100] sm:$0xff]
    %v3378 = vld [vmem:[#allocation8 + $0x108] sm:$0xff]
    %v3379 = vld [vmem:[#allocation8 + $0x110] sm:$0xff]
    %v3380 = vld [vmem:[#allocation8 + $0x118] sm:$0xff]
    %v3381 = vld [vmem:[#allocation8 + $0x120] sm:$0xff]
    %v3382 = vld [vmem:[#allocation8 + $0x128] sm:$0xff]
    %v3383 = vld [vmem:[#allocation8 + $0x130] sm:$0xff]
    %v3384 = vld [vmem:[#allocation8 + $0x138] sm:$0xff]
    %v3385 = vld [vmem:[#allocation8 + $0x140] sm:$0xff]
    %v3386 = vld [vmem:[#allocation8 + $0x148] sm:$0xff]
    %v3387 = vld [vmem:[#allocation8 + $0x150] sm:$0xff]
    %v3388 = vld [vmem:[#allocation8 + $0x158] sm:$0xff]
    %v3389 = vld [vmem:[#allocation8 + $0x160] sm:$0xff]
    %v3390 = vld [vmem:[#allocation8 + $0x168] sm:$0xff]
    %v3391 = vld [vmem:[#allocation8 + $0x170] sm:$0xff]
    %v3392 = vld [vmem:[#allocation8 + $0x178] sm:$0xff]
    %v3393 = vld [vmem:[#allocation8 + $0x180] sm:$0xff]
    %v3394 = vld [vmem:[#allocation8 + $0x188] sm:$0xff]
    %v3395 = vld [vmem:[#allocation8 + $0x190] sm:$0xff]
    %v3396 = vld [vmem:[#allocation8 + $0x198] sm:$0xff]
    %v3397 = vld [vmem:[#allocation8 + $0x1a0] sm:$0xff]
    %v3398 = vld [vmem:[#allocation8 + $0x1a8] sm:$0xff]
    %v3399 = vld [vmem:[#allocation8 + $0x1b0] sm:$0xff]
    %v3400 = vld [vmem:[#allocation8 + $0x1b8] sm:$0xff]
    %v3401 = vld [vmem:[#allocation8 + $0x1c0] sm:$0xff]
    %v3402 = vld [vmem:[#allocation8 + $0x1c8] sm:$0xff]
    %v3403 = vld [vmem:[#allocation8 + $0x1d0] sm:$0xff]
    %v3404 = vld [vmem:[#allocation8 + $0x1d8] sm:$0xff]
    %v3405 = vld [vmem:[#allocation8 + $0x1e0] sm:$0xff]
    %v3406 = vld [vmem:[#allocation8 + $0x1e8] sm:$0xff]
    %v3407 = vld [vmem:[#allocation8 + $0x1f0] sm:$0xff]
    %v3408 = vld [vmem:[#allocation8 + $0x1f8] sm:$0xff]
    %v3409 = vld [vmem:[#allocation8 + $0x200] sm:$0xff]
    %v3410 = vld [vmem:[#allocation8 + $0x208] sm:$0xff]
    %v3411 = vld [vmem:[#allocation8 + $0x210] sm:$0xff]
    %v3412 = vld [vmem:[#allocation8 + $0x218] sm:$0xff]
    %v3413 = vld [vmem:[#allocation8 + $0x220] sm:$0xff]
    %v3414 = vld [vmem:[#allocation8 + $0x228] sm:$0xff]
    %v3415 = vld [vmem:[#allocation8 + $0x230] sm:$0xff]
    %v3416 = vld [vmem:[#allocation8 + $0x238] sm:$0xff]
    %v3417 = vld [vmem:[#allocation8 + $0x240] sm:$0xff]
    %v3418 = vld [vmem:[#allocation8 + $0x248] sm:$0xff]
    %v3419 = vld [vmem:[#allocation8 + $0x250] sm:$0xff]
    %v3420 = vld [vmem:[#allocation8 + $0x258] sm:$0xff]
    %v3421 = vld [vmem:[#allocation8 + $0x260] sm:$0xff]
    %v3422 = vld [vmem:[#allocation8 + $0x268] sm:$0xff]
    %v3423 = vld [vmem:[#allocation8 + $0x270] sm:$0xff]
    %v3424 = vld [vmem:[#allocation8 + $0x278] sm:$0xff]
    %v3425 = vld [vmem:[#allocation8 + $0x280] sm:$0xff]
    %v3426 = vld [vmem:[#allocation8 + $0x288] sm:$0xff]
    %v3427 = vld [vmem:[#allocation8 + $0x290] sm:$0xff]
    %v3428 = vld [vmem:[#allocation8 + $0x298] sm:$0xff]
    %v3429 = vld [vmem:[#allocation8 + $0x2a0] sm:$0xff]
    %v3430 = vld [vmem:[#allocation8 + $0x2a8] sm:$0xff]
    %v3431 = vld [vmem:[#allocation8 + $0x2b0] sm:$0xff]
    %v3432 = vld [vmem:[#allocation8 + $0x2b8] sm:$0xff]
    %v3433 = vld [vmem:[#allocation8 + $0x2c0] sm:$0xff]
    %v3434 = vld [vmem:[#allocation8 + $0x2c8] sm:$0xff]
    %v3435 = vld [vmem:[#allocation8 + $0x2d0] sm:$0xff]
    %v3436 = vld [vmem:[#allocation8 + $0x2d8] sm:$0xff]
    %v3437 = vld [vmem:[#allocation8 + $0x2e0] sm:$0xff]
    %v3438 = vld [vmem:[#allocation8 + $0x2e8] sm:$0xff]
    %v3439 = vld [vmem:[#allocation8 + $0x2f0] sm:$0xff]
    %v3440 = vld [vmem:[#allocation8 + $0x2f8] sm:$0xff]
    %v3441 = vld [vmem:[#allocation8 + $0x300] sm:$0xff]
    %v3442 = vld [vmem:[#allocation8 + $0x308] sm:$0xff]
    %v3443 = vld [vmem:[#allocation8 + $0x310] sm:$0xff]
    %v3444 = vld [vmem:[#allocation8 + $0x318] sm:$0xff]
    %v3445 = vld [vmem:[#allocation8 + $0x320] sm:$0xff]
    %v3446 = vld [vmem:[#allocation8 + $0x328] sm:$0xff]
    %v3447 = vld [vmem:[#allocation8 + $0x330] sm:$0xff]
    %v3448 = vld [vmem:[#allocation8 + $0x338] sm:$0xff]
    %v3449 = vld [vmem:[#allocation8 + $0x340] sm:$0xff]
    %v3450 = vld [vmem:[#allocation8 + $0x348] sm:$0xff]
    %v3451 = vld [vmem:[#allocation8 + $0x350] sm:$0xff]
    %v3452 = vld [vmem:[#allocation8 + $0x358] sm:$0xff]
    %v3453 = vld [vmem:[#allocation8 + $0x360] sm:$0xff]
    %v3454 = vld [vmem:[#allocation8 + $0x368] sm:$0xff]
    %v3455 = vld [vmem:[#allocation8 + $0x370] sm:$0xff]
    %v3456 = vld [vmem:[#allocation8 + $0x378] sm:$0xff]
    %v3457 = vld [vmem:[#allocation8 + $0x380] sm:$0xff]
    %v3458 = vld [vmem:[#allocation8 + $0x388] sm:$0xff]
    %v3459 = vld [vmem:[#allocation8 + $0x390] sm:$0xff]
    %v3460 = vld [vmem:[#allocation8 + $0x398] sm:$0xff]
    %v3461 = vld [vmem:[#allocation8 + $0x3a0] sm:$0xff]
    %v3462 = vld [vmem:[#allocation8 + $0x3a8] sm:$0xff]
    %v3463 = vld [vmem:[#allocation8 + $0x3b0] sm:$0xff]
    %v3464 = vld [vmem:[#allocation8 + $0x3b8] sm:$0xff]
    %v3465 = vld [vmem:[#allocation8 + $0x3c0] sm:$0xff]
    %v3466 = vld [vmem:[#allocation8 + $0x3c8] sm:$0xff]
    %v3467 = vld [vmem:[#allocation8 + $0x3d0] sm:$0xff]
    %v3468 = vld [vmem:[#allocation8 + $0x3d8] sm:$0xff]
    %v3469 = vld [vmem:[#allocation8 + $0x3e0] sm:$0xff]
    %v3470 = vld [vmem:[#allocation8 + $0x3e8] sm:$0xff]
    %v3471 = vld [vmem:[#allocation8 + $0x3f0] sm:$0xff]
    %v3472 = vld [vmem:[#allocation8 + $0x3f8] sm:$0xff]
    %v3473 = vld [vmem:[#allocation8 + $0x400] sm:$0xff]
    %v3474 = vld [vmem:[#allocation8 + $0x408] sm:$0xff]
    %v3475 = vld [vmem:[#allocation8 + $0x410] sm:$0xff]
    %v3476 = vld [vmem:[#allocation8 + $0x418] sm:$0xff]
    %v3477 = vld [vmem:[#allocation8 + $0x420] sm:$0xff]
    %v3478 = vld [vmem:[#allocation8 + $0x428] sm:$0xff]
    %v3479 = vld [vmem:[#allocation8 + $0x430] sm:$0xff]
    %v3480 = vld [vmem:[#allocation8 + $0x438] sm:$0xff]
    %v3481 = vld [vmem:[#allocation8 + $0x440] sm:$0xff]
    %v3482 = vld [vmem:[#allocation8 + $0x448] sm:$0xff]
    %v3483 = vld [vmem:[#allocation8 + $0x450] sm:$0xff]
    %v3484 = vld [vmem:[#allocation8 + $0x458] sm:$0xff]
    %v3485 = vld [vmem:[#allocation8 + $0x460] sm:$0xff]
    %v3486 = vld [vmem:[#allocation8 + $0x468] sm:$0xff]
    %v3487 = vld [vmem:[#allocation8 + $0x470] sm:$0xff]
    %v3488 = vld [vmem:[#allocation8 + $0x478] sm:$0xff]
    %v3489 = vld [vmem:[#allocation8 + $0x480] sm:$0xff]
    %v3490 = vld [vmem:[#allocation8 + $0x488] sm:$0xff]
    %v3491 = vld [vmem:[#allocation8 + $0x490] sm:$0xff]
    %v3492 = vld [vmem:[#allocation8 + $0x498] sm:$0xff]
    %v3493 = vld [vmem:[#allocation8 + $0x4a0] sm:$0xff]
    %v3494 = vld [vmem:[#allocation8 + $0x4a8] sm:$0xff]
    %v3495 = vld [vmem:[#allocation8 + $0x4b0] sm:$0xff]
    %v3496 = vld [vmem:[#allocation8 + $0x4b8] sm:$0xff]
    %v3497 = vld [vmem:[#allocation8 + $0x4c0] sm:$0xff]
    %v3498 = vld [vmem:[#allocation8 + $0x4c8] sm:$0xff]
    %v3499 = vld [vmem:[#allocation8 + $0x4d0] sm:$0xff]
    %v3500 = vld [vmem:[#allocation8 + $0x4d8] sm:$0xff]
    %v3501 = vld [vmem:[#allocation8 + $0x4e0] sm:$0xff]
    %v3502 = vld [vmem:[#allocation8 + $0x4e8] sm:$0xff]
    %v3503 = vld [vmem:[#allocation8 + $0x4f0] sm:$0xff]
    %v3504 = vld [vmem:[#allocation8 + $0x4f8] sm:$0xff]
    %v3505 = vld [vmem:[#allocation8 + $0x500] sm:$0xff]
    %v3506 = vld [vmem:[#allocation8 + $0x508] sm:$0xff]
    %v3507 = vld [vmem:[#allocation8 + $0x510] sm:$0xff]
    %v3508 = vld [vmem:[#allocation8 + $0x518] sm:$0xff]
    %v3509 = vld [vmem:[#allocation8 + $0x520] sm:$0xff]
    %v3510 = vld [vmem:[#allocation8 + $0x528] sm:$0xff]
    %v3511 = vld [vmem:[#allocation8 + $0x530] sm:$0xff]
    %v3512 = vld [vmem:[#allocation8 + $0x538] sm:$0xff]
    %v3513 = vld [vmem:[#allocation8 + $0x540] sm:$0xff]
    %v3514 = vld [vmem:[#allocation8 + $0x548] sm:$0xff]
    %v3515 = vld [vmem:[#allocation8 + $0x550] sm:$0xff]
    %v3516 = vld [vmem:[#allocation8 + $0x558] sm:$0xff]
    %v3517 = vld [vmem:[#allocation8 + $0x560] sm:$0xff]
    %v3518 = vld [vmem:[#allocation8 + $0x568] sm:$0xff]
    %v3519 = vld [vmem:[#allocation8 + $0x570] sm:$0xff]
    %v3520 = vld [vmem:[#allocation8 + $0x578] sm:$0xff]
    %v3521 = vld [vmem:[#allocation8 + $0x580] sm:$0xff]
    %v3522 = vld [vmem:[#allocation8 + $0x588] sm:$0xff]
    %v3523 = vld [vmem:[#allocation8 + $0x590] sm:$0xff]
    %v3524 = vld [vmem:[#allocation8 + $0x598] sm:$0xff]
    %v3525 = vld [vmem:[#allocation8 + $0x5a0] sm:$0xff]
    %v3526 = vld [vmem:[#allocation8 + $0x5a8] sm:$0xff]
    %v3527 = vld [vmem:[#allocation8 + $0x5b0] sm:$0xff]
    %v3528 = vld [vmem:[#allocation8 + $0x5b8] sm:$0xff]
    %v3529 = vld [vmem:[#allocation8 + $0x5c0] sm:$0xff]
    %v3530 = vld [vmem:[#allocation8 + $0x5c8] sm:$0xff]
    %v3531 = vld [vmem:[#allocation8 + $0x5d0] sm:$0xff]
    %v3532 = vld [vmem:[#allocation8 + $0x5d8] sm:$0xff]
    %v3533 = vld [vmem:[#allocation8 + $0x5e0] sm:$0xff]
    %v3534 = vld [vmem:[#allocation8 + $0x5e8] sm:$0xff]
    %v3535 = vld [vmem:[#allocation8 + $0x5f0] sm:$0xff]
    %v3536 = vld [vmem:[#allocation8 + $0x5f8] sm:$0xff]
    %v3537 = vld [vmem:[#allocation8 + $0x600] sm:$0xff]
    %v3538 = vld [vmem:[#allocation8 + $0x608] sm:$0xff]
    %v3539 = vld [vmem:[#allocation8 + $0x610] sm:$0xff]
    %v3540 = vld [vmem:[#allocation8 + $0x618] sm:$0xff]
    %v3541 = vld [vmem:[#allocation8 + $0x620] sm:$0xff]
    %v3542 = vld [vmem:[#allocation8 + $0x628] sm:$0xff]
    %v3543 = vld [vmem:[#allocation8 + $0x630] sm:$0xff]
    %v3544 = vld [vmem:[#allocation8 + $0x638] sm:$0xff]
    %v3545 = vld [vmem:[#allocation8 + $0x640] sm:$0xff]
    %v3546 = vld [vmem:[#allocation8 + $0x648] sm:$0xff]
    %v3547 = vld [vmem:[#allocation8 + $0x650] sm:$0xff]
    %v3548 = vld [vmem:[#allocation8 + $0x658] sm:$0xff]
    %v3549 = vld [vmem:[#allocation8 + $0x660] sm:$0xff]
    %v3550 = vld [vmem:[#allocation8 + $0x668] sm:$0xff]
    %v3551 = vld [vmem:[#allocation8 + $0x670] sm:$0xff]
    %v3552 = vld [vmem:[#allocation8 + $0x678] sm:$0xff]
    %v3553 = vld [vmem:[#allocation8 + $0x680] sm:$0xff]
    %v3554 = vld [vmem:[#allocation8 + $0x688] sm:$0xff]
    %v3555 = vld [vmem:[#allocation8 + $0x690] sm:$0xff]
    %v3556 = vld [vmem:[#allocation8 + $0x698] sm:$0xff]
    %v3557 = vld [vmem:[#allocation8 + $0x6a0] sm:$0xff]
    %v3558 = vld [vmem:[#allocation8 + $0x6a8] sm:$0xff]
    %v3559 = vld [vmem:[#allocation8 + $0x6b0] sm:$0xff]
    %v3560 = vld [vmem:[#allocation8 + $0x6b8] sm:$0xff]
    %v3561 = vld [vmem:[#allocation8 + $0x6c0] sm:$0xff]
    %v3562 = vld [vmem:[#allocation8 + $0x6c8] sm:$0xff]
    %v3563 = vld [vmem:[#allocation8 + $0x6d0] sm:$0xff]
    %v3564 = vld [vmem:[#allocation8 + $0x6d8] sm:$0xff]
    %v3565 = vld [vmem:[#allocation8 + $0x6e0] sm:$0xff]
    %v3566 = vld [vmem:[#allocation8 + $0x6e8] sm:$0xff]
    %v3567 = vld [vmem:[#allocation8 + $0x6f0] sm:$0xff]
    %v3568 = vld [vmem:[#allocation8 + $0x6f8] sm:$0xff]
    %v3569 = vld [vmem:[#allocation8 + $0x700] sm:$0xff]
    %v3570 = vld [vmem:[#allocation8 + $0x708] sm:$0xff]
    %v3571 = vld [vmem:[#allocation8 + $0x710] sm:$0xff]
    %v3572 = vld [vmem:[#allocation8 + $0x718] sm:$0xff]
    %v3573 = vld [vmem:[#allocation8 + $0x720] sm:$0xff]
    %v3574 = vld [vmem:[#allocation8 + $0x728] sm:$0xff]
    %v3575 = vld [vmem:[#allocation8 + $0x730] sm:$0xff]
    %v3576 = vld [vmem:[#allocation8 + $0x738] sm:$0xff]
    %v3577 = vld [vmem:[#allocation8 + $0x740] sm:$0xff]
    %v3578 = vld [vmem:[#allocation8 + $0x748] sm:$0xff]
    %v3579 = vld [vmem:[#allocation8 + $0x750] sm:$0xff]
    %v3580 = vld [vmem:[#allocation8 + $0x758] sm:$0xff]
    %v3581 = vld [vmem:[#allocation8 + $0x760] sm:$0xff]
    %v3582 = vld [vmem:[#allocation8 + $0x768] sm:$0xff]
    %v3583 = vld [vmem:[#allocation8 + $0x770] sm:$0xff]
    %v3584 = vld [vmem:[#allocation8 + $0x778] sm:$0xff]
    %v3585 = vld [vmem:[#allocation8 + $0x780] sm:$0xff]
    %v3586 = vld [vmem:[#allocation8 + $0x788] sm:$0xff]
    %v3587 = vld [vmem:[#allocation8 + $0x790] sm:$0xff]
    %v3588 = vld [vmem:[#allocation8 + $0x798] sm:$0xff]
    %v3589 = vld [vmem:[#allocation8 + $0x7a0] sm:$0xff]
    %v3590 = vld [vmem:[#allocation8 + $0x7a8] sm:$0xff]
    %v3591 = vld [vmem:[#allocation8 + $0x7b0] sm:$0xff]
    %v3592 = vld [vmem:[#allocation8 + $0x7b8] sm:$0xff]
    %v3593 = vld [vmem:[#allocation8 + $0x7c0] sm:$0xff]
    %v3594 = vld [vmem:[#allocation8 + $0x7c8] sm:$0xff]
    %v3595 = vld [vmem:[#allocation8 + $0x7d0] sm:$0xff]
    %v3596 = vld [vmem:[#allocation8 + $0x7d8] sm:$0xff]
    %v3597 = vld [vmem:[#allocation8 + $0x7e0] sm:$0xff]
    %v3598 = vld [vmem:[#allocation8 + $0x7e8] sm:$0xff]
    %v3599 = vld [vmem:[#allocation8 + $0x7f0] sm:$0xff]
    %v3600 = vld [vmem:[#allocation8 + $0x7f8] sm:$0xff]
    %v3601 = vld [vmem:[#allocation10] sm:$0xf]
    %v3602 = vunpack.c.l.bf16 %v3601
    %v3604 = vlaneseq
    %v3605 = vshrl.u32 %v3604, 7
    %v3606 = vsub.s32 0, %v3605
    %v3607 = vrot.slane %v3602, %v3606
    %v3608 = vlaneseq
    %v3609 = vshrl.u32 %v3608, 7
    %v3610 = vsub.s32 2, %v3609
    %v3611 = vrot.slane %v3602, %v3610
    %v3612 = vlaneseq
    %v3613 = vshrl.u32 %v3612, 7
    %v3614 = vsub.s32 4, %v3613
    %v3615 = vrot.slane %v3602, %v3614
    %v3616 = vlaneseq
    %v3617 = vshrl.u32 %v3616, 7
    %v3618 = vsub.s32 6, %v3617
    %v3619 = vrot.slane %v3602, %v3618
    %v3624 = vlaneseq
    %v3625 = vshrl.u32 %v3624, 7
    %v3626 = vsub.s32 0, %v3625
    %v3627 = vrot.slane %v3607, %v3626
    %v3628 = vlaneseq
    %v3629 = vshrl.u32 %v3628, 7
    %v3630 = vsub.s32 0, %v3629
    %v3631 = vrot.slane %v3611, %v3630
    %v3632 = vlaneseq
    %v3633 = vshrl.u32 %v3632, 7
    %v3634 = vsub.s32 0, %v3633
    %v3635 = vrot.slane %v3615, %v3634
    %v3636 = vlaneseq
    %v3637 = vshrl.u32 %v3636, 7
    %v3638 = vsub.s32 0, %v3637
    %v3639 = vrot.slane %v3619, %v3638
    %v3896 = vunpack.c.l.b16 %v3345
    %v3897 = vunpack.c.h.b16 %v3345
    %v3898 = vunpack.c.l.b16 %v3346
    %v3899 = vunpack.c.h.b16 %v3346
    %v3900 = vunpack.c.l.b16 %v3347
    %v3901 = vunpack.c.h.b16 %v3347
    %v3902 = vunpack.c.l.b16 %v3348
    %v3903 = vunpack.c.h.b16 %v3348
    %v3904 = vunpack.c.l.b16 %v3349
    %v3905 = vunpack.c.h.b16 %v3349
    %v3906 = vunpack.c.l.b16 %v3350
    %v3907 = vunpack.c.h.b16 %v3350
    %v3908 = vunpack.c.l.b16 %v3351
    %v3909 = vunpack.c.h.b16 %v3351
    %v3910 = vunpack.c.l.b16 %v3352
    %v3911 = vunpack.c.h.b16 %v3352
    %v3912 = vunpack.c.l.b16 %v3353
    %v3913 = vunpack.c.h.b16 %v3353
    %v3914 = vunpack.c.l.b16 %v3354
    %v3915 = vunpack.c.h.b16 %v3354
    %v3916 = vunpack.c.l.b16 %v3355
    %v3917 = vunpack.c.h.b16 %v3355
    %v3918 = vunpack.c.l.b16 %v3356
    %v3919 = vunpack.c.h.b16 %v3356
    %v3920 = vunpack.c.l.b16 %v3357
    %v3921 = vunpack.c.h.b16 %v3357
    %v3922 = vunpack.c.l.b16 %v3358
    %v3923 = vunpack.c.h.b16 %v3358
    %v3924 = vunpack.c.l.b16 %v3359
    %v3925 = vunpack.c.h.b16 %v3359
    %v3926 = vunpack.c.l.b16 %v3360
    %v3927 = vunpack.c.h.b16 %v3360
    %v3928 = vunpack.c.l.b16 %v3361
    %v3929 = vunpack.c.h.b16 %v3361
    %v3930 = vunpack.c.l.b16 %v3362
    %v3931 = vunpack.c.h.b16 %v3362
    %v3932 = vunpack.c.l.b16 %v3363
    %v3933 = vunpack.c.h.b16 %v3363
    %v3934 = vunpack.c.l.b16 %v3364
    %v3935 = vunpack.c.h.b16 %v3364
    %v3936 = vunpack.c.l.b16 %v3365
    %v3937 = vunpack.c.h.b16 %v3365
    %v3938 = vunpack.c.l.b16 %v3366
    %v3939 = vunpack.c.h.b16 %v3366
    %v3940 = vunpack.c.l.b16 %v3367
    %v3941 = vunpack.c.h.b16 %v3367
    %v3942 = vunpack.c.l.b16 %v3368
    %v3943 = vunpack.c.h.b16 %v3368
    %v3944 = vunpack.c.l.b16 %v3369
    %v3945 = vunpack.c.h.b16 %v3369
    %v3946 = vunpack.c.l.b16 %v3370
    %v3947 = vunpack.c.h.b16 %v3370
    %v3948 = vunpack.c.l.b16 %v3371
    %v3949 = vunpack.c.h.b16 %v3371
    %v3950 = vunpack.c.l.b16 %v3372
    %v3951 = vunpack.c.h.b16 %v3372
    %v3952 = vunpack.c.l.b16 %v3373
    %v3953 = vunpack.c.h.b16 %v3373
    %v3954 = vunpack.c.l.b16 %v3374
    %v3955 = vunpack.c.h.b16 %v3374
    %v3956 = vunpack.c.l.b16 %v3375
    %v3957 = vunpack.c.h.b16 %v3375
    %v3958 = vunpack.c.l.b16 %v3376
    %v3959 = vunpack.c.h.b16 %v3376
    %v3960 = vunpack.c.l.b16 %v3377
    %v3961 = vunpack.c.h.b16 %v3377
    %v3962 = vunpack.c.l.b16 %v3378
    %v3963 = vunpack.c.h.b16 %v3378
    %v3964 = vunpack.c.l.b16 %v3379
    %v3965 = vunpack.c.h.b16 %v3379
    %v3966 = vunpack.c.l.b16 %v3380
    %v3967 = vunpack.c.h.b16 %v3380
    %v3968 = vunpack.c.l.b16 %v3381
    %v3969 = vunpack.c.h.b16 %v3381
    %v3970 = vunpack.c.l.b16 %v3382
    %v3971 = vunpack.c.h.b16 %v3382
    %v3972 = vunpack.c.l.b16 %v3383
    %v3973 = vunpack.c.h.b16 %v3383
    %v3974 = vunpack.c.l.b16 %v3384
    %v3975 = vunpack.c.h.b16 %v3384
    %v3976 = vunpack.c.l.b16 %v3385
    %v3977 = vunpack.c.h.b16 %v3385
    %v3978 = vunpack.c.l.b16 %v3386
    %v3979 = vunpack.c.h.b16 %v3386
    %v3980 = vunpack.c.l.b16 %v3387
    %v3981 = vunpack.c.h.b16 %v3387
    %v3982 = vunpack.c.l.b16 %v3388
    %v3983 = vunpack.c.h.b16 %v3388
    %v3984 = vunpack.c.l.b16 %v3389
    %v3985 = vunpack.c.h.b16 %v3389
    %v3986 = vunpack.c.l.b16 %v3390
    %v3987 = vunpack.c.h.b16 %v3390
    %v3988 = vunpack.c.l.b16 %v3391
    %v3989 = vunpack.c.h.b16 %v3391
    %v3990 = vunpack.c.l.b16 %v3392
    %v3991 = vunpack.c.h.b16 %v3392
    %v3992 = vunpack.c.l.b16 %v3393
    %v3993 = vunpack.c.h.b16 %v3393
    %v3994 = vunpack.c.l.b16 %v3394
    %v3995 = vunpack.c.h.b16 %v3394
    %v3996 = vunpack.c.l.b16 %v3395
    %v3997 = vunpack.c.h.b16 %v3395
    %v3998 = vunpack.c.l.b16 %v3396
    %v3999 = vunpack.c.h.b16 %v3396
    %v4000 = vunpack.c.l.b16 %v3397
    %v4001 = vunpack.c.h.b16 %v3397
    %v4002 = vunpack.c.l.b16 %v3398
    %v4003 = vunpack.c.h.b16 %v3398
    %v4004 = vunpack.c.l.b16 %v3399
    %v4005 = vunpack.c.h.b16 %v3399
    %v4006 = vunpack.c.l.b16 %v3400
    %v4007 = vunpack.c.h.b16 %v3400
    %v4008 = vunpack.c.l.b16 %v3401
    %v4009 = vunpack.c.h.b16 %v3401
    %v4010 = vunpack.c.l.b16 %v3402
    %v4011 = vunpack.c.h.b16 %v3402
    %v4012 = vunpack.c.l.b16 %v3403
    %v4013 = vunpack.c.h.b16 %v3403
    %v4014 = vunpack.c.l.b16 %v3404
    %v4015 = vunpack.c.h.b16 %v3404
    %v4016 = vunpack.c.l.b16 %v3405
    %v4017 = vunpack.c.h.b16 %v3405
    %v4018 = vunpack.c.l.b16 %v3406
    %v4019 = vunpack.c.h.b16 %v3406
    %v4020 = vunpack.c.l.b16 %v3407
    %v4021 = vunpack.c.h.b16 %v3407
    %v4022 = vunpack.c.l.b16 %v3408
    %v4023 = vunpack.c.h.b16 %v3408
    %v4024 = vunpack.c.l.b16 %v3409
    %v4025 = vunpack.c.h.b16 %v3409
    %v4026 = vunpack.c.l.b16 %v3410
    %v4027 = vunpack.c.h.b16 %v3410
    %v4028 = vunpack.c.l.b16 %v3411
    %v4029 = vunpack.c.h.b16 %v3411
    %v4030 = vunpack.c.l.b16 %v3412
    %v4031 = vunpack.c.h.b16 %v3412
    %v4032 = vunpack.c.l.b16 %v3413
    %v4033 = vunpack.c.h.b16 %v3413
    %v4034 = vunpack.c.l.b16 %v3414
    %v4035 = vunpack.c.h.b16 %v3414
    %v4036 = vunpack.c.l.b16 %v3415
    %v4037 = vunpack.c.h.b16 %v3415
    %v4038 = vunpack.c.l.b16 %v3416
    %v4039 = vunpack.c.h.b16 %v3416
    %v4040 = vunpack.c.l.b16 %v3417
    %v4041 = vunpack.c.h.b16 %v3417
    %v4042 = vunpack.c.l.b16 %v3418
    %v4043 = vunpack.c.h.b16 %v3418
    %v4044 = vunpack.c.l.b16 %v3419
    %v4045 = vunpack.c.h.b16 %v3419
    %v4046 = vunpack.c.l.b16 %v3420
    %v4047 = vunpack.c.h.b16 %v3420
    %v4048 = vunpack.c.l.b16 %v3421
    %v4049 = vunpack.c.h.b16 %v3421
    %v4050 = vunpack.c.l.b16 %v3422
    %v4051 = vunpack.c.h.b16 %v3422
    %v4052 = vunpack.c.l.b16 %v3423
    %v4053 = vunpack.c.h.b16 %v3423
    %v4054 = vunpack.c.l.b16 %v3424
    %v4055 = vunpack.c.h.b16 %v3424
    %v4056 = vunpack.c.l.b16 %v3425
    %v4057 = vunpack.c.h.b16 %v3425
    %v4058 = vunpack.c.l.b16 %v3426
    %v4059 = vunpack.c.h.b16 %v3426
    %v4060 = vunpack.c.l.b16 %v3427
    %v4061 = vunpack.c.h.b16 %v3427
    %v4062 = vunpack.c.l.b16 %v3428
    %v4063 = vunpack.c.h.b16 %v3428
    %v4064 = vunpack.c.l.b16 %v3429
    %v4065 = vunpack.c.h.b16 %v3429
    %v4066 = vunpack.c.l.b16 %v3430
    %v4067 = vunpack.c.h.b16 %v3430
    %v4068 = vunpack.c.l.b16 %v3431
    %v4069 = vunpack.c.h.b16 %v3431
    %v4070 = vunpack.c.l.b16 %v3432
    %v4071 = vunpack.c.h.b16 %v3432
    %v4072 = vunpack.c.l.b16 %v3433
    %v4073 = vunpack.c.h.b16 %v3433
    %v4074 = vunpack.c.l.b16 %v3434
    %v4075 = vunpack.c.h.b16 %v3434
    %v4076 = vunpack.c.l.b16 %v3435
    %v4077 = vunpack.c.h.b16 %v3435
    %v4078 = vunpack.c.l.b16 %v3436
    %v4079 = vunpack.c.h.b16 %v3436
    %v4080 = vunpack.c.l.b16 %v3437
    %v4081 = vunpack.c.h.b16 %v3437
    %v4082 = vunpack.c.l.b16 %v3438
    %v4083 = vunpack.c.h.b16 %v3438
    %v4084 = vunpack.c.l.b16 %v3439
    %v4085 = vunpack.c.h.b16 %v3439
    %v4086 = vunpack.c.l.b16 %v3440
    %v4087 = vunpack.c.h.b16 %v3440
    %v4088 = vunpack.c.l.b16 %v3441
    %v4089 = vunpack.c.h.b16 %v3441
    %v4090 = vunpack.c.l.b16 %v3442
    %v4091 = vunpack.c.h.b16 %v3442
    %v4092 = vunpack.c.l.b16 %v3443
    %v4093 = vunpack.c.h.b16 %v3443
    %v4094 = vunpack.c.l.b16 %v3444
    %v4095 = vunpack.c.h.b16 %v3444
    %v4096 = vunpack.c.l.b16 %v3445
    %v4097 = vunpack.c.h.b16 %v3445
    %v4098 = vunpack.c.l.b16 %v3446
    %v4099 = vunpack.c.h.b16 %v3446
    %v4100 = vunpack.c.l.b16 %v3447
    %v4101 = vunpack.c.h.b16 %v3447
    %v4102 = vunpack.c.l.b16 %v3448
    %v4103 = vunpack.c.h.b16 %v3448
    %v4104 = vunpack.c.l.b16 %v3449
    %v4105 = vunpack.c.h.b16 %v3449
    %v4106 = vunpack.c.l.b16 %v3450
    %v4107 = vunpack.c.h.b16 %v3450
    %v4108 = vunpack.c.l.b16 %v3451
    %v4109 = vunpack.c.h.b16 %v3451
    %v4110 = vunpack.c.l.b16 %v3452
    %v4111 = vunpack.c.h.b16 %v3452
    %v4112 = vunpack.c.l.b16 %v3453
    %v4113 = vunpack.c.h.b16 %v3453
    %v4114 = vunpack.c.l.b16 %v3454
    %v4115 = vunpack.c.h.b16 %v3454
    %v4116 = vunpack.c.l.b16 %v3455
    %v4117 = vunpack.c.h.b16 %v3455
    %v4118 = vunpack.c.l.b16 %v3456
    %v4119 = vunpack.c.h.b16 %v3456
    %v4120 = vunpack.c.l.b16 %v3457
    %v4121 = vunpack.c.h.b16 %v3457
    %v4122 = vunpack.c.l.b16 %v3458
    %v4123 = vunpack.c.h.b16 %v3458
    %v4124 = vunpack.c.l.b16 %v3459
    %v4125 = vunpack.c.h.b16 %v3459
    %v4126 = vunpack.c.l.b16 %v3460
    %v4127 = vunpack.c.h.b16 %v3460
    %v4128 = vunpack.c.l.b16 %v3461
    %v4129 = vunpack.c.h.b16 %v3461
    %v4130 = vunpack.c.l.b16 %v3462
    %v4131 = vunpack.c.h.b16 %v3462
    %v4132 = vunpack.c.l.b16 %v3463
    %v4133 = vunpack.c.h.b16 %v3463
    %v4134 = vunpack.c.l.b16 %v3464
    %v4135 = vunpack.c.h.b16 %v3464
    %v4136 = vunpack.c.l.b16 %v3465
    %v4137 = vunpack.c.h.b16 %v3465
    %v4138 = vunpack.c.l.b16 %v3466
    %v4139 = vunpack.c.h.b16 %v3466
    %v4140 = vunpack.c.l.b16 %v3467
    %v4141 = vunpack.c.h.b16 %v3467
    %v4142 = vunpack.c.l.b16 %v3468
    %v4143 = vunpack.c.h.b16 %v3468
    %v4144 = vunpack.c.l.b16 %v3469
    %v4145 = vunpack.c.h.b16 %v3469
    %v4146 = vunpack.c.l.b16 %v3470
    %v4147 = vunpack.c.h.b16 %v3470
    %v4148 = vunpack.c.l.b16 %v3471
    %v4149 = vunpack.c.h.b16 %v3471
    %v4150 = vunpack.c.l.b16 %v3472
    %v4151 = vunpack.c.h.b16 %v3472
    %v4152 = vunpack.c.l.b16 %v3473
    %v4153 = vunpack.c.h.b16 %v3473
    %v4154 = vunpack.c.l.b16 %v3474
    %v4155 = vunpack.c.h.b16 %v3474
    %v4156 = vunpack.c.l.b16 %v3475
    %v4157 = vunpack.c.h.b16 %v3475
    %v4158 = vunpack.c.l.b16 %v3476
    %v4159 = vunpack.c.h.b16 %v3476
    %v4160 = vunpack.c.l.b16 %v3477
    %v4161 = vunpack.c.h.b16 %v3477
    %v4162 = vunpack.c.l.b16 %v3478
    %v4163 = vunpack.c.h.b16 %v3478
    %v4164 = vunpack.c.l.b16 %v3479
    %v4165 = vunpack.c.h.b16 %v3479
    %v4166 = vunpack.c.l.b16 %v3480
    %v4167 = vunpack.c.h.b16 %v3480
    %v4168 = vunpack.c.l.b16 %v3481
    %v4169 = vunpack.c.h.b16 %v3481
    %v4170 = vunpack.c.l.b16 %v3482
    %v4171 = vunpack.c.h.b16 %v3482
    %v4172 = vunpack.c.l.b16 %v3483
    %v4173 = vunpack.c.h.b16 %v3483
    %v4174 = vunpack.c.l.b16 %v3484
    %v4175 = vunpack.c.h.b16 %v3484
    %v4176 = vunpack.c.l.b16 %v3485
    %v4177 = vunpack.c.h.b16 %v3485
    %v4178 = vunpack.c.l.b16 %v3486
    %v4179 = vunpack.c.h.b16 %v3486
    %v4180 = vunpack.c.l.b16 %v3487
    %v4181 = vunpack.c.h.b16 %v3487
    %v4182 = vunpack.c.l.b16 %v3488
    %v4183 = vunpack.c.h.b16 %v3488
    %v4184 = vunpack.c.l.b16 %v3489
    %v4185 = vunpack.c.h.b16 %v3489
    %v4186 = vunpack.c.l.b16 %v3490
    %v4187 = vunpack.c.h.b16 %v3490
    %v4188 = vunpack.c.l.b16 %v3491
    %v4189 = vunpack.c.h.b16 %v3491
    %v4190 = vunpack.c.l.b16 %v3492
    %v4191 = vunpack.c.h.b16 %v3492
    %v4192 = vunpack.c.l.b16 %v3493
    %v4193 = vunpack.c.h.b16 %v3493
    %v4194 = vunpack.c.l.b16 %v3494
    %v4195 = vunpack.c.h.b16 %v3494
    %v4196 = vunpack.c.l.b16 %v3495
    %v4197 = vunpack.c.h.b16 %v3495
    %v4198 = vunpack.c.l.b16 %v3496
    %v4199 = vunpack.c.h.b16 %v3496
    %v4200 = vunpack.c.l.b16 %v3497
    %v4201 = vunpack.c.h.b16 %v3497
    %v4202 = vunpack.c.l.b16 %v3498
    %v4203 = vunpack.c.h.b16 %v3498
    %v4204 = vunpack.c.l.b16 %v3499
    %v4205 = vunpack.c.h.b16 %v3499
    %v4206 = vunpack.c.l.b16 %v3500
    %v4207 = vunpack.c.h.b16 %v3500
    %v4208 = vunpack.c.l.b16 %v3501
    %v4209 = vunpack.c.h.b16 %v3501
    %v4210 = vunpack.c.l.b16 %v3502
    %v4211 = vunpack.c.h.b16 %v3502
    %v4212 = vunpack.c.l.b16 %v3503
    %v4213 = vunpack.c.h.b16 %v3503
    %v4214 = vunpack.c.l.b16 %v3504
    %v4215 = vunpack.c.h.b16 %v3504
    %v4216 = vunpack.c.l.b16 %v3505
    %v4217 = vunpack.c.h.b16 %v3505
    %v4218 = vunpack.c.l.b16 %v3506
    %v4219 = vunpack.c.h.b16 %v3506
    %v4220 = vunpack.c.l.b16 %v3507
    %v4221 = vunpack.c.h.b16 %v3507
    %v4222 = vunpack.c.l.b16 %v3508
    %v4223 = vunpack.c.h.b16 %v3508
    %v4224 = vunpack.c.l.b16 %v3509
    %v4225 = vunpack.c.h.b16 %v3509
    %v4226 = vunpack.c.l.b16 %v3510
    %v4227 = vunpack.c.h.b16 %v3510
    %v4228 = vunpack.c.l.b16 %v3511
    %v4229 = vunpack.c.h.b16 %v3511
    %v4230 = vunpack.c.l.b16 %v3512
    %v4231 = vunpack.c.h.b16 %v3512
    %v4232 = vunpack.c.l.b16 %v3513
    %v4233 = vunpack.c.h.b16 %v3513
    %v4234 = vunpack.c.l.b16 %v3514
    %v4235 = vunpack.c.h.b16 %v3514
    %v4236 = vunpack.c.l.b16 %v3515
    %v4237 = vunpack.c.h.b16 %v3515
    %v4238 = vunpack.c.l.b16 %v3516
    %v4239 = vunpack.c.h.b16 %v3516
    %v4240 = vunpack.c.l.b16 %v3517
    %v4241 = vunpack.c.h.b16 %v3517
    %v4242 = vunpack.c.l.b16 %v3518
    %v4243 = vunpack.c.h.b16 %v3518
    %v4244 = vunpack.c.l.b16 %v3519
    %v4245 = vunpack.c.h.b16 %v3519
    %v4246 = vunpack.c.l.b16 %v3520
    %v4247 = vunpack.c.h.b16 %v3520
    %v4248 = vunpack.c.l.b16 %v3521
    %v4249 = vunpack.c.h.b16 %v3521
    %v4250 = vunpack.c.l.b16 %v3522
    %v4251 = vunpack.c.h.b16 %v3522
    %v4252 = vunpack.c.l.b16 %v3523
    %v4253 = vunpack.c.h.b16 %v3523
    %v4254 = vunpack.c.l.b16 %v3524
    %v4255 = vunpack.c.h.b16 %v3524
    %v4256 = vunpack.c.l.b16 %v3525
    %v4257 = vunpack.c.h.b16 %v3525
    %v4258 = vunpack.c.l.b16 %v3526
    %v4259 = vunpack.c.h.b16 %v3526
    %v4260 = vunpack.c.l.b16 %v3527
    %v4261 = vunpack.c.h.b16 %v3527
    %v4262 = vunpack.c.l.b16 %v3528
    %v4263 = vunpack.c.h.b16 %v3528
    %v4264 = vunpack.c.l.b16 %v3529
    %v4265 = vunpack.c.h.b16 %v3529
    %v4266 = vunpack.c.l.b16 %v3530
    %v4267 = vunpack.c.h.b16 %v3530
    %v4268 = vunpack.c.l.b16 %v3531
    %v4269 = vunpack.c.h.b16 %v3531
    %v4270 = vunpack.c.l.b16 %v3532
    %v4271 = vunpack.c.h.b16 %v3532
    %v4272 = vunpack.c.l.b16 %v3533
    %v4273 = vunpack.c.h.b16 %v3533
    %v4274 = vunpack.c.l.b16 %v3534
    %v4275 = vunpack.c.h.b16 %v3534
    %v4276 = vunpack.c.l.b16 %v3535
    %v4277 = vunpack.c.h.b16 %v3535
    %v4278 = vunpack.c.l.b16 %v3536
    %v4279 = vunpack.c.h.b16 %v3536
    %v4280 = vunpack.c.l.b16 %v3537
    %v4281 = vunpack.c.h.b16 %v3537
    %v4282 = vunpack.c.l.b16 %v3538
    %v4283 = vunpack.c.h.b16 %v3538
    %v4284 = vunpack.c.l.b16 %v3539
    %v4285 = vunpack.c.h.b16 %v3539
    %v4286 = vunpack.c.l.b16 %v3540
    %v4287 = vunpack.c.h.b16 %v3540
    %v4288 = vunpack.c.l.b16 %v3541
    %v4289 = vunpack.c.h.b16 %v3541
    %v4290 = vunpack.c.l.b16 %v3542
    %v4291 = vunpack.c.h.b16 %v3542
    %v4292 = vunpack.c.l.b16 %v3543
    %v4293 = vunpack.c.h.b16 %v3543
    %v4294 = vunpack.c.l.b16 %v3544
    %v4295 = vunpack.c.h.b16 %v3544
    %v4296 = vunpack.c.l.b16 %v3545
    %v4297 = vunpack.c.h.b16 %v3545
    %v4298 = vunpack.c.l.b16 %v3546
    %v4299 = vunpack.c.h.b16 %v3546
    %v4300 = vunpack.c.l.b16 %v3547
    %v4301 = vunpack.c.h.b16 %v3547
    %v4302 = vunpack.c.l.b16 %v3548
    %v4303 = vunpack.c.h.b16 %v3548
    %v4304 = vunpack.c.l.b16 %v3549
    %v4305 = vunpack.c.h.b16 %v3549
    %v4306 = vunpack.c.l.b16 %v3550
    %v4307 = vunpack.c.h.b16 %v3550
    %v4308 = vunpack.c.l.b16 %v3551
    %v4309 = vunpack.c.h.b16 %v3551
    %v4310 = vunpack.c.l.b16 %v3552
    %v4311 = vunpack.c.h.b16 %v3552
    %v4312 = vunpack.c.l.b16 %v3553
    %v4313 = vunpack.c.h.b16 %v3553
    %v4314 = vunpack.c.l.b16 %v3554
    %v4315 = vunpack.c.h.b16 %v3554
    %v4316 = vunpack.c.l.b16 %v3555
    %v4317 = vunpack.c.h.b16 %v3555
    %v4318 = vunpack.c.l.b16 %v3556
    %v4319 = vunpack.c.h.b16 %v3556
    %v4320 = vunpack.c.l.b16 %v3557
    %v4321 = vunpack.c.h.b16 %v3557
    %v4322 = vunpack.c.l.b16 %v3558
    %v4323 = vunpack.c.h.b16 %v3558
    %v4324 = vunpack.c.l.b16 %v3559
    %v4325 = vunpack.c.h.b16 %v3559
    %v4326 = vunpack.c.l.b16 %v3560
    %v4327 = vunpack.c.h.b16 %v3560
    %v4328 = vunpack.c.l.b16 %v3561
    %v4329 = vunpack.c.h.b16 %v3561
    %v4330 = vunpack.c.l.b16 %v3562
    %v4331 = vunpack.c.h.b16 %v3562
    %v4332 = vunpack.c.l.b16 %v3563
    %v4333 = vunpack.c.h.b16 %v3563
    %v4334 = vunpack.c.l.b16 %v3564
    %v4335 = vunpack.c.h.b16 %v3564
    %v4336 = vunpack.c.l.b16 %v3565
    %v4337 = vunpack.c.h.b16 %v3565
    %v4338 = vunpack.c.l.b16 %v3566
    %v4339 = vunpack.c.h.b16 %v3566
    %v4340 = vunpack.c.l.b16 %v3567
    %v4341 = vunpack.c.h.b16 %v3567
    %v4342 = vunpack.c.l.b16 %v3568
    %v4343 = vunpack.c.h.b16 %v3568
    %v4344 = vunpack.c.l.b16 %v3569
    %v4345 = vunpack.c.h.b16 %v3569
    %v4346 = vunpack.c.l.b16 %v3570
    %v4347 = vunpack.c.h.b16 %v3570
    %v4348 = vunpack.c.l.b16 %v3571
    %v4349 = vunpack.c.h.b16 %v3571
    %v4350 = vunpack.c.l.b16 %v3572
    %v4351 = vunpack.c.h.b16 %v3572
    %v4352 = vunpack.c.l.b16 %v3573
    %v4353 = vunpack.c.h.b16 %v3573
    %v4354 = vunpack.c.l.b16 %v3574
    %v4355 = vunpack.c.h.b16 %v3574
    %v4356 = vunpack.c.l.b16 %v3575
    %v4357 = vunpack.c.h.b16 %v3575
    %v4358 = vunpack.c.l.b16 %v3576
    %v4359 = vunpack.c.h.b16 %v3576
    %v4360 = vunpack.c.l.b16 %v3577
    %v4361 = vunpack.c.h.b16 %v3577
    %v4362 = vunpack.c.l.b16 %v3578
    %v4363 = vunpack.c.h.b16 %v3578
    %v4364 = vunpack.c.l.b16 %v3579
    %v4365 = vunpack.c.h.b16 %v3579
    %v4366 = vunpack.c.l.b16 %v3580
    %v4367 = vunpack.c.h.b16 %v3580
    %v4368 = vunpack.c.l.b16 %v3581
    %v4369 = vunpack.c.h.b16 %v3581
    %v4370 = vunpack.c.l.b16 %v3582
    %v4371 = vunpack.c.h.b16 %v3582
    %v4372 = vunpack.c.l.b16 %v3583
    %v4373 = vunpack.c.h.b16 %v3583
    %v4374 = vunpack.c.l.b16 %v3584
    %v4375 = vunpack.c.h.b16 %v3584
    %v4376 = vunpack.c.l.b16 %v3585
    %v4377 = vunpack.c.h.b16 %v3585
    %v4378 = vunpack.c.l.b16 %v3586
    %v4379 = vunpack.c.h.b16 %v3586
    %v4380 = vunpack.c.l.b16 %v3587
    %v4381 = vunpack.c.h.b16 %v3587
    %v4382 = vunpack.c.l.b16 %v3588
    %v4383 = vunpack.c.h.b16 %v3588
    %v4384 = vunpack.c.l.b16 %v3589
    %v4385 = vunpack.c.h.b16 %v3589
    %v4386 = vunpack.c.l.b16 %v3590
    %v4387 = vunpack.c.h.b16 %v3590
    %v4388 = vunpack.c.l.b16 %v3591
    %v4389 = vunpack.c.h.b16 %v3591
    %v4390 = vunpack.c.l.b16 %v3592
    %v4391 = vunpack.c.h.b16 %v3592
    %v4392 = vunpack.c.l.b16 %v3593
    %v4393 = vunpack.c.h.b16 %v3593
    %v4394 = vunpack.c.l.b16 %v3594
    %v4395 = vunpack.c.h.b16 %v3594
    %v4396 = vunpack.c.l.b16 %v3595
    %v4397 = vunpack.c.h.b16 %v3595
    %v4398 = vunpack.c.l.b16 %v3596
    %v4399 = vunpack.c.h.b16 %v3596
    %v4400 = vunpack.c.l.b16 %v3597
    %v4401 = vunpack.c.h.b16 %v3597
    %v4402 = vunpack.c.l.b16 %v3598
    %v4403 = vunpack.c.h.b16 %v3598
    %v4404 = vunpack.c.l.b16 %v3599
    %v4405 = vunpack.c.h.b16 %v3599
    %v4406 = vunpack.c.l.b16 %v3600
    %v4407 = vunpack.c.h.b16 %v3600
    %v4408 = vpack.c.b16 %v3900, %v3896
    %v4409 = vpack.c.b16 %v3901, %v3897
    %v4410 = vpack.c.b16 %v3902, %v3898
    %v4411 = vpack.c.b16 %v3903, %v3899
    %v4412 = vpack.c.b16 %v3908, %v3904
    %v4413 = vpack.c.b16 %v3909, %v3905
    %v4414 = vpack.c.b16 %v3910, %v3906
    %v4415 = vpack.c.b16 %v3911, %v3907
    %v4416 = vpack.c.b16 %v3916, %v3912
    %v4417 = vpack.c.b16 %v3917, %v3913
    %v4418 = vpack.c.b16 %v3918, %v3914
    %v4419 = vpack.c.b16 %v3919, %v3915
    %v4420 = vpack.c.b16 %v3924, %v3920
    %v4421 = vpack.c.b16 %v3925, %v3921
    %v4422 = vpack.c.b16 %v3926, %v3922
    %v4423 = vpack.c.b16 %v3927, %v3923
    %v4424 = vpack.c.b16 %v3932, %v3928
    %v4425 = vpack.c.b16 %v3933, %v3929
    %v4426 = vpack.c.b16 %v3934, %v3930
    %v4427 = vpack.c.b16 %v3935, %v3931
    %v4428 = vpack.c.b16 %v3940, %v3936
    %v4429 = vpack.c.b16 %v3941, %v3937
    %v4430 = vpack.c.b16 %v3942, %v3938
    %v4431 = vpack.c.b16 %v3943, %v3939
    %v4432 = vpack.c.b16 %v3948, %v3944
    %v4433 = vpack.c.b16 %v3949, %v3945
    %v4434 = vpack.c.b16 %v3950, %v3946
    %v4435 = vpack.c.b16 %v3951, %v3947
    %v4436 = vpack.c.b16 %v3956, %v3952
    %v4437 = vpack.c.b16 %v3957, %v3953
    %v4438 = vpack.c.b16 %v3958, %v3954
    %v4439 = vpack.c.b16 %v3959, %v3955
    %v4440 = vpack.c.b16 %v3964, %v3960
    %v4441 = vpack.c.b16 %v3965, %v3961
    %v4442 = vpack.c.b16 %v3966, %v3962
    %v4443 = vpack.c.b16 %v3967, %v3963
    %v4444 = vpack.c.b16 %v3972, %v3968
    %v4445 = vpack.c.b16 %v3973, %v3969
    %v4446 = vpack.c.b16 %v3974, %v3970
    %v4447 = vpack.c.b16 %v3975, %v3971
    %v4448 = vpack.c.b16 %v3980, %v3976
    %v4449 = vpack.c.b16 %v3981, %v3977
    %v4450 = vpack.c.b16 %v3982, %v3978
    %v4451 = vpack.c.b16 %v3983, %v3979
    %v4452 = vpack.c.b16 %v3988, %v3984
    %v4453 = vpack.c.b16 %v3989, %v3985
    %v4454 = vpack.c.b16 %v3990, %v3986
    %v4455 = vpack.c.b16 %v3991, %v3987
    %v4456 = vpack.c.b16 %v3996, %v3992
    %v4457 = vpack.c.b16 %v3997, %v3993
    %v4458 = vpack.c.b16 %v3998, %v3994
    %v4459 = vpack.c.b16 %v3999, %v3995
    %v4460 = vpack.c.b16 %v4004, %v4000
    %v4461 = vpack.c.b16 %v4005, %v4001
    %v4462 = vpack.c.b16 %v4006, %v4002
    %v4463 = vpack.c.b16 %v4007, %v4003
    %v4464 = vpack.c.b16 %v4012, %v4008
    %v4465 = vpack.c.b16 %v4013, %v4009
    %v4466 = vpack.c.b16 %v4014, %v4010
    %v4467 = vpack.c.b16 %v4015, %v4011
    %v4468 = vpack.c.b16 %v4020, %v4016
    %v4469 = vpack.c.b16 %v4021, %v4017
    %v4470 = vpack.c.b16 %v4022, %v4018
    %v4471 = vpack.c.b16 %v4023, %v4019
    %v4472 = vpack.c.b16 %v4028, %v4024
    %v4473 = vpack.c.b16 %v4029, %v4025
    %v4474 = vpack.c.b16 %v4030, %v4026
    %v4475 = vpack.c.b16 %v4031, %v4027
    %v4476 = vpack.c.b16 %v4036, %v4032
    %v4477 = vpack.c.b16 %v4037, %v4033
    %v4478 = vpack.c.b16 %v4038, %v4034
    %v4479 = vpack.c.b16 %v4039, %v4035
    %v4480 = vpack.c.b16 %v4044, %v4040
    %v4481 = vpack.c.b16 %v4045, %v4041
    %v4482 = vpack.c.b16 %v4046, %v4042
    %v4483 = vpack.c.b16 %v4047, %v4043
    %v4484 = vpack.c.b16 %v4052, %v4048
    %v4485 = vpack.c.b16 %v4053, %v4049
    %v4486 = vpack.c.b16 %v4054, %v4050
    %v4487 = vpack.c.b16 %v4055, %v4051
    %v4488 = vpack.c.b16 %v4060, %v4056
    %v4489 = vpack.c.b16 %v4061, %v4057
    %v4490 = vpack.c.b16 %v4062, %v4058
    %v4491 = vpack.c.b16 %v4063, %v4059
    %v4492 = vpack.c.b16 %v4068, %v4064
    %v4493 = vpack.c.b16 %v4069, %v4065
    %v4494 = vpack.c.b16 %v4070, %v4066
    %v4495 = vpack.c.b16 %v4071, %v4067
    %v4496 = vpack.c.b16 %v4076, %v4072
    %v4497 = vpack.c.b16 %v4077, %v4073
    %v4498 = vpack.c.b16 %v4078, %v4074
    %v4499 = vpack.c.b16 %v4079, %v4075
    %v4500 = vpack.c.b16 %v4084, %v4080
    %v4501 = vpack.c.b16 %v4085, %v4081
    %v4502 = vpack.c.b16 %v4086, %v4082
    %v4503 = vpack.c.b16 %v4087, %v4083
    %v4504 = vpack.c.b16 %v4092, %v4088
    %v4505 = vpack.c.b16 %v4093, %v4089
    %v4506 = vpack.c.b16 %v4094, %v4090
    %v4507 = vpack.c.b16 %v4095, %v4091
    %v4508 = vpack.c.b16 %v4100, %v4096
    %v4509 = vpack.c.b16 %v4101, %v4097
    %v4510 = vpack.c.b16 %v4102, %v4098
    %v4511 = vpack.c.b16 %v4103, %v4099
    %v4512 = vpack.c.b16 %v4108, %v4104
    %v4513 = vpack.c.b16 %v4109, %v4105
    %v4514 = vpack.c.b16 %v4110, %v4106
    %v4515 = vpack.c.b16 %v4111, %v4107
    %v4516 = vpack.c.b16 %v4116, %v4112
    %v4517 = vpack.c.b16 %v4117, %v4113
    %v4518 = vpack.c.b16 %v4118, %v4114
    %v4519 = vpack.c.b16 %v4119, %v4115
    %v4520 = vpack.c.b16 %v4124, %v4120
    %v4521 = vpack.c.b16 %v4125, %v4121
    %v4522 = vpack.c.b16 %v4126, %v4122
    %v4523 = vpack.c.b16 %v4127, %v4123
    %v4524 = vpack.c.b16 %v4132, %v4128
    %v4525 = vpack.c.b16 %v4133, %v4129
    %v4526 = vpack.c.b16 %v4134, %v4130
    %v4527 = vpack.c.b16 %v4135, %v4131
    %v4528 = vpack.c.b16 %v4140, %v4136
    %v4529 = vpack.c.b16 %v4141, %v4137
    %v4530 = vpack.c.b16 %v4142, %v4138
    %v4531 = vpack.c.b16 %v4143, %v4139
    %v4532 = vpack.c.b16 %v4148, %v4144
    %v4533 = vpack.c.b16 %v4149, %v4145
    %v4534 = vpack.c.b16 %v4150, %v4146
    %v4535 = vpack.c.b16 %v4151, %v4147
    %v4536 = vpack.c.b16 %v4156, %v4152
    %v4537 = vpack.c.b16 %v4157, %v4153
    %v4538 = vpack.c.b16 %v4158, %v4154
    %v4539 = vpack.c.b16 %v4159, %v4155
    %v4540 = vpack.c.b16 %v4164, %v4160
    %v4541 = vpack.c.b16 %v4165, %v4161
    %v4542 = vpack.c.b16 %v4166, %v4162
    %v4543 = vpack.c.b16 %v4167, %v4163
    %v4544 = vpack.c.b16 %v4172, %v4168
    %v4545 = vpack.c.b16 %v4173, %v4169
    %v4546 = vpack.c.b16 %v4174, %v4170
    %v4547 = vpack.c.b16 %v4175, %v4171
    %v4548 = vpack.c.b16 %v4180, %v4176
    %v4549 = vpack.c.b16 %v4181, %v4177
    %v4550 = vpack.c.b16 %v4182, %v4178
    %v4551 = vpack.c.b16 %v4183, %v4179
    %v4552 = vpack.c.b16 %v4188, %v4184
    %v4553 = vpack.c.b16 %v4189, %v4185
    %v4554 = vpack.c.b16 %v4190, %v4186
    %v4555 = vpack.c.b16 %v4191, %v4187
    %v4556 = vpack.c.b16 %v4196, %v4192
    %v4557 = vpack.c.b16 %v4197, %v4193
    %v4558 = vpack.c.b16 %v4198, %v4194
    %v4559 = vpack.c.b16 %v4199, %v4195
    %v4560 = vpack.c.b16 %v4204, %v4200
    %v4561 = vpack.c.b16 %v4205, %v4201
    %v4562 = vpack.c.b16 %v4206, %v4202
    %v4563 = vpack.c.b16 %v4207, %v4203
    %v4564 = vpack.c.b16 %v4212, %v4208
    %v4565 = vpack.c.b16 %v4213, %v4209
    %v4566 = vpack.c.b16 %v4214, %v4210
    %v4567 = vpack.c.b16 %v4215, %v4211
    %v4568 = vpack.c.b16 %v4220, %v4216
    %v4569 = vpack.c.b16 %v4221, %v4217
    %v4570 = vpack.c.b16 %v4222, %v4218
    %v4571 = vpack.c.b16 %v4223, %v4219
    %v4572 = vpack.c.b16 %v4228, %v4224
    %v4573 = vpack.c.b16 %v4229, %v4225
    %v4574 = vpack.c.b16 %v4230, %v4226
    %v4575 = vpack.c.b16 %v4231, %v4227
    %v4576 = vpack.c.b16 %v4236, %v4232
    %v4577 = vpack.c.b16 %v4237, %v4233
    %v4578 = vpack.c.b16 %v4238, %v4234
    %v4579 = vpack.c.b16 %v4239, %v4235
    %v4580 = vpack.c.b16 %v4244, %v4240
    %v4581 = vpack.c.b16 %v4245, %v4241
    %v4582 = vpack.c.b16 %v4246, %v4242
    %v4583 = vpack.c.b16 %v4247, %v4243
    %v4584 = vpack.c.b16 %v4252, %v4248
    %v4585 = vpack.c.b16 %v4253, %v4249
    %v4586 = vpack.c.b16 %v4254, %v4250
    %v4587 = vpack.c.b16 %v4255, %v4251
    %v4588 = vpack.c.b16 %v4260, %v4256
    %v4589 = vpack.c.b16 %v4261, %v4257
    %v4590 = vpack.c.b16 %v4262, %v4258
    %v4591 = vpack.c.b16 %v4263, %v4259
    %v4592 = vpack.c.b16 %v4268, %v4264
    %v4593 = vpack.c.b16 %v4269, %v4265
    %v4594 = vpack.c.b16 %v4270, %v4266
    %v4595 = vpack.c.b16 %v4271, %v4267
    %v4596 = vpack.c.b16 %v4276, %v4272
    %v4597 = vpack.c.b16 %v4277, %v4273
    %v4598 = vpack.c.b16 %v4278, %v4274
    %v4599 = vpack.c.b16 %v4279, %v4275
    %v4600 = vpack.c.b16 %v4284, %v4280
    %v4601 = vpack.c.b16 %v4285, %v4281
    %v4602 = vpack.c.b16 %v4286, %v4282
    %v4603 = vpack.c.b16 %v4287, %v4283
    %v4604 = vpack.c.b16 %v4292, %v4288
    %v4605 = vpack.c.b16 %v4293, %v4289
    %v4606 = vpack.c.b16 %v4294, %v4290
    %v4607 = vpack.c.b16 %v4295, %v4291
    %v4608 = vpack.c.b16 %v4300, %v4296
    %v4609 = vpack.c.b16 %v4301, %v4297
    %v4610 = vpack.c.b16 %v4302, %v4298
    %v4611 = vpack.c.b16 %v4303, %v4299
    %v4612 = vpack.c.b16 %v4308, %v4304
    %v4613 = vpack.c.b16 %v4309, %v4305
    %v4614 = vpack.c.b16 %v4310, %v4306
    %v4615 = vpack.c.b16 %v4311, %v4307
    %v4616 = vpack.c.b16 %v4316, %v4312
    %v4617 = vpack.c.b16 %v4317, %v4313
    %v4618 = vpack.c.b16 %v4318, %v4314
    %v4619 = vpack.c.b16 %v4319, %v4315
    %v4620 = vpack.c.b16 %v4324, %v4320
    %v4621 = vpack.c.b16 %v4325, %v4321
    %v4622 = vpack.c.b16 %v4326, %v4322
    %v4623 = vpack.c.b16 %v4327, %v4323
    %v4624 = vpack.c.b16 %v4332, %v4328
    %v4625 = vpack.c.b16 %v4333, %v4329
    %v4626 = vpack.c.b16 %v4334, %v4330
    %v4627 = vpack.c.b16 %v4335, %v4331
    %v4628 = vpack.c.b16 %v4340, %v4336
    %v4629 = vpack.c.b16 %v4341, %v4337
    %v4630 = vpack.c.b16 %v4342, %v4338
    %v4631 = vpack.c.b16 %v4343, %v4339
    %v4632 = vpack.c.b16 %v4348, %v4344
    %v4633 = vpack.c.b16 %v4349, %v4345
    %v4634 = vpack.c.b16 %v4350, %v4346
    %v4635 = vpack.c.b16 %v4351, %v4347
    %v4636 = vpack.c.b16 %v4356, %v4352
    %v4637 = vpack.c.b16 %v4357, %v4353
    %v4638 = vpack.c.b16 %v4358, %v4354
    %v4639 = vpack.c.b16 %v4359, %v4355
    %v4640 = vpack.c.b16 %v4364, %v4360
    %v4641 = vpack.c.b16 %v4365, %v4361
    %v4642 = vpack.c.b16 %v4366, %v4362
    %v4643 = vpack.c.b16 %v4367, %v4363
    %v4644 = vpack.c.b16 %v4372, %v4368
    %v4645 = vpack.c.b16 %v4373, %v4369
    %v4646 = vpack.c.b16 %v4374, %v4370
    %v4647 = vpack.c.b16 %v4375, %v4371
    %v4648 = vpack.c.b16 %v4380, %v4376
    %v4649 = vpack.c.b16 %v4381, %v4377
    %v4650 = vpack.c.b16 %v4382, %v4378
    %v4651 = vpack.c.b16 %v4383, %v4379
    %v4652 = vpack.c.b16 %v4388, %v4384
    %v4653 = vpack.c.b16 %v4389, %v4385
    %v4654 = vpack.c.b16 %v4390, %v4386
    %v4655 = vpack.c.b16 %v4391, %v4387
    %v4656 = vpack.c.b16 %v4396, %v4392
    %v4657 = vpack.c.b16 %v4397, %v4393
    %v4658 = vpack.c.b16 %v4398, %v4394
    %v4659 = vpack.c.b16 %v4399, %v4395
    %v4660 = vpack.c.b16 %v4404, %v4400
    %v4661 = vpack.c.b16 %v4405, %v4401
    %v4662 = vpack.c.b16 %v4406, %v4402
    %v4663 = vpack.c.b16 %v4407, %v4403
    %4920 = vmatprep.subr.bf16.mxu0 %v4409
    %4921 = vmatpush1.bf16.msra.mxu0 %v4408
    %4922 = vmatprep.subr.bf16.mxu0 %v4413
    %4923 = vmatpush1.bf16.msra.mxu0 %v4412
    %4924 = vmatprep.subr.bf16.mxu0 %v4417
    %4925 = vmatpush1.bf16.msra.mxu0 %v4416
    %4926 = vmatprep.subr.bf16.mxu0 %v4421
    %4927 = vmatpush1.bf16.msra.mxu0 %v4420
    %4928 = vmatprep.subr.bf16.mxu0 %v4425
    %4929 = vmatpush1.bf16.msra.mxu0 %v4424
    %4930 = vmatprep.subr.bf16.mxu0 %v4429
    %4931 = vmatpush1.bf16.msra.mxu0 %v4428
    %4932 = vmatprep.subr.bf16.mxu0 %v4433
    %4933 = vmatpush1.bf16.msra.mxu0 %v4432
    %4934 = vmatprep.subr.bf16.mxu0 %v4437
    %4935 = vmatpush1.bf16.msra.mxu0 %v4436
    %4936 = vmatprep.subr.bf16.mxu0 %v4441
    %4937 = vmatpush1.bf16.msra.mxu0 %v4440
    %4938 = vmatprep.subr.bf16.mxu0 %v4445
    %4939 = vmatpush1.bf16.msra.mxu0 %v4444
    %4940 = vmatprep.subr.bf16.mxu0 %v4449
    %4941 = vmatpush1.bf16.msra.mxu0 %v4448
    %4942 = vmatprep.subr.bf16.mxu0 %v4453
    %4943 = vmatpush1.bf16.msra.mxu0 %v4452
    %4944 = vmatprep.subr.bf16.mxu0 %v4457
    %4945 = vmatpush1.bf16.msra.mxu0 %v4456
    %4946 = vmatprep.subr.bf16.mxu0 %v4461
    %4947 = vmatpush1.bf16.msra.mxu0 %v4460
    %4948 = vmatprep.subr.bf16.mxu0 %v4465
    %4949 = vmatpush1.bf16.msra.mxu0 %v4464
    %4950 = vmatprep.subr.bf16.mxu0 %v4469
    %4951 = vmatpush1.bf16.msra.mxu0 %v4468
    %4952 = vmatprep.mubr.bf16.mxu0 %v3338
    %4953 = vmatmul.mubr.bf16.gmra.mrb[0].mxu0 %v3337
    %v4954 = vpop.f32.mrb[0].mxu0
    %v4955 = vadd.f32 %v3627, %v4954
    %v4956 = vpop.f32.mrb[0].mxu0
    %v4957 = vadd.f32 %v3631, %v4956
    %v4958 = vpop.f32.mrb[0].mxu0
    %v4959 = vadd.f32 %v3627, %v4958
    %v4960 = vpop.f32.mrb[0].mxu0
    %v4961 = vadd.f32 %v3631, %v4960
    %4962 = vdwg.mxu0
    %4963 = vmatprep.subr.bf16.mxu0 %v4473
    %4964 = vmatpush1.bf16.msra.mxu0 %v4472
    %4965 = vmatprep.subr.bf16.mxu0 %v4477
    %4966 = vmatpush1.bf16.msra.mxu0 %v4476
    %4967 = vmatprep.subr.bf16.mxu0 %v4481
    %4968 = vmatpush1.bf16.msra.mxu0 %v4480
    %4969 = vmatprep.subr.bf16.mxu0 %v4485
    %4970 = vmatpush1.bf16.msra.mxu0 %v4484
    %4971 = vmatprep.subr.bf16.mxu0 %v4489
    %4972 = vmatpush1.bf16.msra.mxu0 %v4488
    %4973 = vmatprep.subr.bf16.mxu0 %v4493
    %4974 = vmatpush1.bf16.msra.mxu0 %v4492
    %4975 = vmatprep.subr.bf16.mxu0 %v4497
    %4976 = vmatpush1.bf16.msra.mxu0 %v4496
    %4977 = vmatprep.subr.bf16.mxu0 %v4501
    %4978 = vmatpush1.bf16.msra.mxu0 %v4500
    %4979 = vmatprep.subr.bf16.mxu0 %v4505
    %4980 = vmatpush1.bf16.msra.mxu0 %v4504
    %4981 = vmatprep.subr.bf16.mxu0 %v4509
    %4982 = vmatpush1.bf16.msra.mxu0 %v4508
    %4983 = vmatprep.subr.bf16.mxu0 %v4513
    %4984 = vmatpush1.bf16.msra.mxu0 %v4512
    %4985 = vmatprep.subr.bf16.mxu0 %v4517
    %4986 = vmatpush1.bf16.msra.mxu0 %v4516
    %4987 = vmatprep.subr.bf16.mxu0 %v4521
    %4988 = vmatpush1.bf16.msra.mxu0 %v4520
    %4989 = vmatprep.subr.bf16.mxu0 %v4525
    %4990 = vmatpush1.bf16.msra.mxu0 %v4524
    %4991 = vmatprep.subr.bf16.mxu0 %v4529
    %4992 = vmatpush1.bf16.msra.mxu0 %v4528
    %4993 = vmatprep.subr.bf16.mxu0 %v4533
    %4994 = vmatpush1.bf16.msra.mxu0 %v4532
    %4995 = vmatprep.mubr.bf16.mxu0 %v3340
    %4996 = vmatmul.mubr.bf16.gmra.mrb[0].mxu0 %v3339
    %v4997 = vpop.f32.mrb[0].mxu0
    %v4998 = vadd.f32 %v4955, %v4997
    %v4999 = vpop.f32.mrb[0].mxu0
    %v5000 = vadd.f32 %v4957, %v4999
    %v5001 = vpop.f32.mrb[0].mxu0
    %v5002 = vadd.f32 %v4959, %v5001
    %v5003 = vpop.f32.mrb[0].mxu0
    %v5004 = vadd.f32 %v4961, %v5003
    %5005 = vdwg.mxu0
    %5006 = vmatprep.subr.bf16.mxu0 %v4537
    %5007 = vmatpush1.bf16.msra.mxu0 %v4536
    %5008 = vmatprep.subr.bf16.mxu0 %v4541
    %5009 = vmatpush1.bf16.msra.mxu0 %v4540
    %5010 = vmatprep.subr.bf16.mxu0 %v4545
    %5011 = vmatpush1.bf16.msra.mxu0 %v4544
    %5012 = vmatprep.subr.bf16.mxu0 %v4549
    %5013 = vmatpush1.bf16.msra.mxu0 %v4548
    %5014 = vmatprep.subr.bf16.mxu0 %v4553
    %5015 = vmatpush1.bf16.msra.mxu0 %v4552
    %5016 = vmatprep.subr.bf16.mxu0 %v4557
    %5017 = vmatpush1.bf16.msra.mxu0 %v4556
    %5018 = vmatprep.subr.bf16.mxu0 %v4561
    %5019 = vmatpush1.bf16.msra.mxu0 %v4560
    %5020 = vmatprep.subr.bf16.mxu0 %v4565
    %5021 = vmatpush1.bf16.msra.mxu0 %v4564
    %5022 = vmatprep.subr.bf16.mxu0 %v4569
    %5023 = vmatpush1.bf16.msra.mxu0 %v4568
    %5024 = vmatprep.subr.bf16.mxu0 %v4573
    %5025 = vmatpush1.bf16.msra.mxu0 %v4572
    %5026 = vmatprep.subr.bf16.mxu0 %v4577
    %5027 = vmatpush1.bf16.msra.mxu0 %v4576
    %5028 = vmatprep.subr.bf16.mxu0 %v4581
    %5029 = vmatpush1.bf16.msra.mxu0 %v4580
    %5030 = vmatprep.subr.bf16.mxu0 %v4585
    %5031 = vmatpush1.bf16.msra.mxu0 %v4584
    %5032 = vmatprep.subr.bf16.mxu0 %v4589
    %5033 = vmatpush1.bf16.msra.mxu0 %v4588
    %5034 = vmatprep.subr.bf16.mxu0 %v4593
    %5035 = vmatpush1.bf16.msra.mxu0 %v4592
    %5036 = vmatprep.subr.bf16.mxu0 %v4597
    %5037 = vmatpush1.bf16.msra.mxu0 %v4596
    %5038 = vmatprep.mubr.bf16.mxu0 %v3342
    %5039 = vmatmul.mubr.bf16.gmra.mrb[0].mxu0 %v3341
    %v5040 = vpop.f32.mrb[0].mxu0
    %v5041 = vadd.f32 %v4998, %v5040
    %v5042 = vpop.f32.mrb[0].mxu0
    %v5043 = vadd.f32 %v5000, %v5042
    %v5044 = vpop.f32.mrb[0].mxu0
    %v5045 = vadd.f32 %v5002, %v5044
    %v5046 = vpop.f32.mrb[0].mxu0
    %v5047 = vadd.f32 %v5004, %v5046
    %5048 = vdwg.mxu0
    %5049 = vmatprep.subr.bf16.mxu0 %v4601
    %5050 = vmatpush1.bf16.msra.mxu0 %v4600
    %5051 = vmatprep.subr.bf16.mxu0 %v4605
    %5052 = vmatpush1.bf16.msra.mxu0 %v4604
    %5053 = vmatprep.subr.bf16.mxu0 %v4609
    %5054 = vmatpush1.bf16.msra.mxu0 %v4608
    %5055 = vmatprep.subr.bf16.mxu0 %v4613
    %5056 = vmatpush1.bf16.msra.mxu0 %v4612
    %5057 = vmatprep.subr.bf16.mxu0 %v4617
    %5058 = vmatpush1.bf16.msra.mxu0 %v4616
    %5059 = vmatprep.subr.bf16.mxu0 %v4621
    %5060 = vmatpush1.bf16.msra.mxu0 %v4620
    %5061 = vmatprep.subr.bf16.mxu0 %v4625
    %5062 = vmatpush1.bf16.msra.mxu0 %v4624
    %5063 = vmatprep.subr.bf16.mxu0 %v4629
    %5064 = vmatpush1.bf16.msra.mxu0 %v4628
    %5065 = vmatprep.subr.bf16.mxu0 %v4633
    %5066 = vmatpush1.bf16.msra.mxu0 %v4632
    %5067 = vmatprep.subr.bf16.mxu0 %v4637
    %5068 = vmatpush1.bf16.msra.mxu0 %v4636
    %5069 = vmatprep.subr.bf16.mxu0 %v4641
    %5070 = vmatpush1.bf16.msra.mxu0 %v4640
    %5071 = vmatprep.subr.bf16.mxu0 %v4645
    %5072 = vmatpush1.bf16.msra.mxu0 %v4644
    %5073 = vmatprep.subr.bf16.mxu0 %v4649
    %5074 = vmatpush1.bf16.msra.mxu0 %v4648
    %5075 = vmatprep.subr.bf16.mxu0 %v4653
    %5076 = vmatpush1.bf16.msra.mxu0 %v4652
    %5077 = vmatprep.subr.bf16.mxu0 %v4657
    %5078 = vmatpush1.bf16.msra.mxu0 %v4656
    %5079 = vmatprep.subr.bf16.mxu0 %v4661
    %5080 = vmatpush1.bf16.msra.mxu0 %v4660
    %5081 = vmatprep.mubr.bf16.mxu0 %v3344
    %5082 = vmatmul.mubr.bf16.gmra.mrb[0].mxu0 %v3343
    %v5083 = vpop.f32.mrb[0].mxu0
    %v5084 = vadd.f32 %v5041, %v5083
    %v5085 = vpop.f32.mrb[0].mxu0
    %v5086 = vadd.f32 %v5043, %v5085
    %v5087 = vpop.f32.mrb[0].mxu0
    %v5088 = vadd.f32 %v5045, %v5087
    %v5089 = vpop.f32.mrb[0].mxu0
    %v5090 = vadd.f32 %v5047, %v5089
    %5091 = vdwg.mxu0
    %5092 = vmatprep.subr.bf16.mxu0 %v4411
    %5093 = vmatpush1.bf16.msra.mxu0 %v4410
    %5094 = vmatprep.subr.bf16.mxu0 %v4415
    %5095 = vmatpush1.bf16.msra.mxu0 %v4414
    %5096 = vmatprep.subr.bf16.mxu0 %v4419
    %5097 = vmatpush1.bf16.msra.mxu0 %v4418
    %5098 = vmatprep.subr.bf16.mxu0 %v4423
    %5099 = vmatpush1.bf16.msra.mxu0 %v4422
    %5100 = vmatprep.subr.bf16.mxu0 %v4427
    %5101 = vmatpush1.bf16.msra.mxu0 %v4426
    %5102 = vmatprep.subr.bf16.mxu0 %v4431
    %5103 = vmatpush1.bf16.msra.mxu0 %v4430
    %5104 = vmatprep.subr.bf16.mxu0 %v4435
    %5105 = vmatpush1.bf16.msra.mxu0 %v4434
    %5106 = vmatprep.subr.bf16.mxu0 %v4439
    %5107 = vmatpush1.bf16.msra.mxu0 %v4438
    %5108 = vmatprep.subr.bf16.mxu0 %v4443
    %5109 = vmatpush1.bf16.msra.mxu0 %v4442
    %5110 = vmatprep.subr.bf16.mxu0 %v4447
    %5111 = vmatpush1.bf16.msra.mxu0 %v4446
    %5112 = vmatprep.subr.bf16.mxu0 %v4451
    %5113 = vmatpush1.bf16.msra.mxu0 %v4450
    %5114 = vmatprep.subr.bf16.mxu0 %v4455
    %5115 = vmatpush1.bf16.msra.mxu0 %v4454
    %5116 = vmatprep.subr.bf16.mxu0 %v4459
    %5117 = vmatpush1.bf16.msra.mxu0 %v4458
    %5118 = vmatprep.subr.bf16.mxu0 %v4463
    %5119 = vmatpush1.bf16.msra.mxu0 %v4462
    %5120 = vmatprep.subr.bf16.mxu0 %v4467
    %5121 = vmatpush1.bf16.msra.mxu0 %v4466
    %5122 = vmatprep.subr.bf16.mxu0 %v4471
    %5123 = vmatpush1.bf16.msra.mxu0 %v4470
    %5124 = vmatprep.mubr.bf16.mxu0 %v3338
    %5125 = vmatmul.mubr.bf16.gmra.mrb[0].mxu0 %v3337
    %v5126 = vpop.f32.mrb[0].mxu0
    %v5127 = vadd.f32 %v3635, %v5126
    %v5128 = vpop.f32.mrb[0].mxu0
    %v5129 = vadd.f32 %v3639, %v5128
    %v5130 = vpop.f32.mrb[0].mxu0
    %v5131 = vadd.f32 %v3635, %v5130
    %v5132 = vpop.f32.mrb[0].mxu0
    %v5133 = vadd.f32 %v3639, %v5132
    %5134 = vdwg.mxu0
    %5135 = vmatprep.subr.bf16.mxu0 %v4475
    %5136 = vmatpush1.bf16.msra.mxu0 %v4474
    %5137 = vmatprep.subr.bf16.mxu0 %v4479
    %5138 = vmatpush1.bf16.msra.mxu0 %v4478
    %5139 = vmatprep.subr.bf16.mxu0 %v4483
    %5140 = vmatpush1.bf16.msra.mxu0 %v4482
    %5141 = vmatprep.subr.bf16.mxu0 %v4487
    %5142 = vmatpush1.bf16.msra.mxu0 %v4486
    %5143 = vmatprep.subr.bf16.mxu0 %v4491
    %5144 = vmatpush1.bf16.msra.mxu0 %v4490
    %5145 = vmatprep.subr.bf16.mxu0 %v4495
    %5146 = vmatpush1.bf16.msra.mxu0 %v4494
    %5147 = vmatprep.subr.bf16.mxu0 %v4499
    %5148 = vmatpush1.bf16.msra.mxu0 %v4498
    %5149 = vmatprep.subr.bf16.mxu0 %v4503
    %5150 = vmatpush1.bf16.msra.mxu0 %v4502
    %5151 = vmatprep.subr.bf16.mxu0 %v4507
    %5152 = vmatpush1.bf16.msra.mxu0 %v4506
    %5153 = vmatprep.subr.bf16.mxu0 %v4511
    %5154 = vmatpush1.bf16.msra.mxu0 %v4510
    %5155 = vmatprep.subr.bf16.mxu0 %v4515
    %5156 = vmatpush1.bf16.msra.mxu0 %v4514
    %5157 = vmatprep.subr.bf16.mxu0 %v4519
    %5158 = vmatpush1.bf16.msra.mxu0 %v4518
    %5159 = vmatprep.subr.bf16.mxu0 %v4523
    %5160 = vmatpush1.bf16.msra.mxu0 %v4522
    %5161 = vmatprep.subr.bf16.mxu0 %v4527
    %5162 = vmatpush1.bf16.msra.mxu0 %v4526
    %5163 = vmatprep.subr.bf16.mxu0 %v4531
    %5164 = vmatpush1.bf16.msra.mxu0 %v4530
    %5165 = vmatprep.subr.bf16.mxu0 %v4535
    %5166 = vmatpush1.bf16.msra.mxu0 %v4534
    %5167 = vmatprep.mubr.bf16.mxu0 %v3340
    %5168 = vmatmul.mubr.bf16.gmra.mrb[0].mxu0 %v3339
    %v5169 = vpop.f32.mrb[0].mxu0
    %v5170 = vadd.f32 %v5127, %v5169
    %v5171 = vpop.f32.mrb[0].mxu0
    %v5172 = vadd.f32 %v5129, %v5171
    %v5173 = vpop.f32.mrb[0].mxu0
    %v5174 = vadd.f32 %v5131, %v5173
    %v5175 = vpop.f32.mrb[0].mxu0
    %v5176 = vadd.f32 %v5133, %v5175
    %5177 = vdwg.mxu0
    %5178 = vmatprep.subr.bf16.mxu0 %v4539
    %5179 = vmatpush1.bf16.msra.mxu0 %v4538
    %5180 = vmatprep.subr.bf16.mxu0 %v4543
    %5181 = vmatpush1.bf16.msra.mxu0 %v4542
    %5182 = vmatprep.subr.bf16.mxu0 %v4547
    %5183 = vmatpush1.bf16.msra.mxu0 %v4546
    %5184 = vmatprep.subr.bf16.mxu0 %v4551
    %5185 = vmatpush1.bf16.msra.mxu0 %v4550
    %5186 = vmatprep.subr.bf16.mxu0 %v4555
    %5187 = vmatpush1.bf16.msra.mxu0 %v4554
    %5188 = vmatprep.subr.bf16.mxu0 %v4559
    %5189 = vmatpush1.bf16.msra.mxu0 %v4558
    %5190 = vmatprep.subr.bf16.mxu0 %v4563
    %5191 = vmatpush1.bf16.msra.mxu0 %v4562
    %5192 = vmatprep.subr.bf16.mxu0 %v4567
    %5193 = vmatpush1.bf16.msra.mxu0 %v4566
    %5194 = vmatprep.subr.bf16.mxu0 %v4571
    %5195 = vmatpush1.bf16.msra.mxu0 %v4570
    %5196 = vmatprep.subr.bf16.mxu0 %v4575
    %5197 = vmatpush1.bf16.msra.mxu0 %v4574
    %5198 = vmatprep.subr.bf16.mxu0 %v4579
    %5199 = vmatpush1.bf16.msra.mxu0 %v4578
    %5200 = vmatprep.subr.bf16.mxu0 %v4583
    %5201 = vmatpush1.bf16.msra.mxu0 %v4582
    %5202 = vmatprep.subr.bf16.mxu0 %v4587
    %5203 = vmatpush1.bf16.msra.mxu0 %v4586
    %5204 = vmatprep.subr.bf16.mxu0 %v4591
    %5205 = vmatpush1.bf16.msra.mxu0 %v4590
    %5206 = vmatprep.subr.bf16.mxu0 %v4595
    %5207 = vmatpush1.bf16.msra.mxu0 %v4594
    %5208 = vmatprep.subr.bf16.mxu0 %v4599
    %5209 = vmatpush1.bf16.msra.mxu0 %v4598
    %5210 = vmatprep.mubr.bf16.mxu0 %v3342
    %5211 = vmatmul.mubr.bf16.gmra.mrb[0].mxu0 %v3341
    %v5212 = vpop.f32.mrb[0].mxu0
    %v5213 = vadd.f32 %v5170, %v5212
    %v5214 = vpop.f32.mrb[0].mxu0
    %v5215 = vadd.f32 %v5172, %v5214
    %v5216 = vpop.f32.mrb[0].mxu0
    %v5217 = vadd.f32 %v5174, %v5216
    %v5218 = vpop.f32.mrb[0].mxu0
    %v5219 = vadd.f32 %v5176, %v5218
    %5220 = vdwg.mxu0
    %5221 = vmatprep.subr.bf16.mxu0 %v4603
    %5222 = vmatpush1.bf16.msra.mxu0 %v4602
    %5223 = vmatprep.subr.bf16.mxu0 %v4607
    %5224 = vmatpush1.bf16.msra.mxu0 %v4606
    %5225 = vmatprep.subr.bf16.mxu0 %v4611
    %5226 = vmatpush1.bf16.msra.mxu0 %v4610
    %5227 = vmatprep.subr.bf16.mxu0 %v4615
    %5228 = vmatpush1.bf16.msra.mxu0 %v4614
    %5229 = vmatprep.subr.bf16.mxu0 %v4619
    %5230 = vmatpush1.bf16.msra.mxu0 %v4618
    %5231 = vmatprep.subr.bf16.mxu0 %v4623
    %5232 = vmatpush1.bf16.msra.mxu0 %v4622
    %5233 = vmatprep.subr.bf16.mxu0 %v4627
    %5234 = vmatpush1.bf16.msra.mxu0 %v4626
    %5235 = vmatprep.subr.bf16.mxu0 %v4631
    %5236 = vmatpush1.bf16.msra.mxu0 %v4630
    %5237 = vmatprep.subr.bf16.mxu0 %v4635
    %5238 = vmatpush1.bf16.msra.mxu0 %v4634
    %5239 = vmatprep.subr.bf16.mxu0 %v4639
    %5240 = vmatpush1.bf16.msra.mxu0 %v4638
    %5241 = vmatprep.subr.bf16.mxu0 %v4643
    %5242 = vmatpush1.bf16.msra.mxu0 %v4642
    %5243 = vmatprep.subr.bf16.mxu0 %v4647
    %5244 = vmatpush1.bf16.msra.mxu0 %v4646
    %5245 = vmatprep.subr.bf16.mxu0 %v4651
    %5246 = vmatpush1.bf16.msra.mxu0 %v4650
    %5247 = vmatprep.subr.bf16.mxu0 %v4655
    %5248 = vmatpush1.bf16.msra.mxu0 %v4654
    %5249 = vmatprep.subr.bf16.mxu0 %v4659
    %5250 = vmatpush1.bf16.msra.mxu0 %v4658
    %5251 = vmatprep.subr.bf16.mxu0 %v4663
    %5252 = vmatpush1.bf16.msra.mxu0 %v4662
    %5253 = vmatprep.mubr.bf16.mxu0 %v3344
    %5254 = vmatmul.mubr.bf16.gmra.mrb[0].mxu0 %v3343
    %v5255 = vpop.f32.mrb[0].mxu0
    %v5256 = vadd.f32 %v5213, %v5255
    %v5257 = vpop.f32.mrb[0].mxu0
    %v5258 = vadd.f32 %v5215, %v5257
    %v5259 = vpop.f32.mrb[0].mxu0
    %v5260 = vadd.f32 %v5217, %v5259
    %v5261 = vpop.f32.mrb[0].mxu0
    %v5262 = vadd.f32 %v5219, %v5261
    %5263 = vdwg.mxu0
    %v5264 = vmax.f32 %v5084, 0.0
    %v5265 = vmax.f32 %v5086, 0.0
    %v5266 = vmax.f32 %v5256, 0.0
    %v5267 = vmax.f32 %v5258, 0.0
    %v5268 = vmax.f32 %v5088, 0.0
    %v5269 = vmax.f32 %v5090, 0.0
    %v5270 = vmax.f32 %v5260, 0.0
    %v5271 = vmax.f32 %v5262, 0.0
    %v5272 = vpack.c.bf16 %v5268, %v5264
    %v5273 = vpack.c.bf16 %v5269, %v5265
    %v5274 = vpack.c.bf16 %v5270, %v5266
    %v5275 = vpack.c.bf16 %v5271, %v5267
    %v5276 = vld [vmem:[#allocation11] sm:$0xff]
    %v5277 = vld [vmem:[#allocation11 + $0x8] sm:$0xff]
    %v5278 = vld [vmem:[#allocation11 + $0x10] sm:$0xff]
    %v5279 = vld [vmem:[#allocation11 + $0x18] sm:$0xff]
    %v5280 = vld [vmem:[#allocation11 + $0x20] sm:$0xff]
    %v5281 = vld [vmem:[#allocation11 + $0x28] sm:$0xff]
    %v5282 = vld [vmem:[#allocation11 + $0x30] sm:$0xff]
    %v5283 = vld [vmem:[#allocation11 + $0x38] sm:$0xff]
    %v5284 = vld [vmem:[#allocation11 + $0x40] sm:$0xff]
    %v5285 = vld [vmem:[#allocation11 + $0x48] sm:$0xff]
    %v5286 = vld [vmem:[#allocation11 + $0x50] sm:$0xff]
    %v5287 = vld [vmem:[#allocation11 + $0x58] sm:$0xff]
    %v5288 = vld [vmem:[#allocation11 + $0x60] sm:$0xff]
    %v5289 = vld [vmem:[#allocation11 + $0x68] sm:$0xff]
    %v5290 = vld [vmem:[#allocation11 + $0x70] sm:$0xff]
    %v5291 = vld [vmem:[#allocation11 + $0x78] sm:$0xff]
    %v5292 = vld [vmem:[#allocation11 + $0x80] sm:$0xff]
    %v5293 = vld [vmem:[#allocation11 + $0x88] sm:$0xff]
    %v5294 = vld [vmem:[#allocation11 + $0x90] sm:$0xff]
    %v5295 = vld [vmem:[#allocation11 + $0x98] sm:$0xff]
    %v5296 = vld [vmem:[#allocation11 + $0xa0] sm:$0xff]
    %v5297 = vld [vmem:[#allocation11 + $0xa8] sm:$0xff]
    %v5298 = vld [vmem:[#allocation11 + $0xb0] sm:$0xff]
    %v5299 = vld [vmem:[#allocation11 + $0xb8] sm:$0xff]
    %v5300 = vld [vmem:[#allocation11 + $0xc0] sm:$0xff]
    %v5301 = vld [vmem:[#allocation11 + $0xc8] sm:$0xff]
    %v5302 = vld [vmem:[#allocation11 + $0xd0] sm:$0xff]
    %v5303 = vld [vmem:[#allocation11 + $0xd8] sm:$0xff]
    %v5304 = vld [vmem:[#allocation11 + $0xe0] sm:$0xff]
    %v5305 = vld [vmem:[#allocation11 + $0xe8] sm:$0xff]
    %v5306 = vld [vmem:[#allocation11 + $0xf0] sm:$0xff]
    %v5307 = vld [vmem:[#allocation11 + $0xf8] sm:$0xff]
    %v5308 = vld [vmem:[#allocation11 + $0x100] sm:$0xff]
    %v5309 = vld [vmem:[#allocation11 + $0x108] sm:$0xff]
    %v5310 = vld [vmem:[#allocation11 + $0x110] sm:$0xff]
    %v5311 = vld [vmem:[#allocation11 + $0x118] sm:$0xff]
    %v5312 = vld [vmem:[#allocation11 + $0x120] sm:$0xff]
    %v5313 = vld [vmem:[#allocation11 + $0x128] sm:$0xff]
    %v5314 = vld [vmem:[#allocation11 + $0x130] sm:$0xff]
    %v5315 = vld [vmem:[#allocation11 + $0x138] sm:$0xff]
    %v5316 = vld [vmem:[#allocation11 + $0x140] sm:$0xff]
    %v5317 = vld [vmem:[#allocation11 + $0x148] sm:$0xff]
    %v5318 = vld [vmem:[#allocation11 + $0x150] sm:$0xff]
    %v5319 = vld [vmem:[#allocation11 + $0x158] sm:$0xff]
    %v5320 = vld [vmem:[#allocation11 + $0x160] sm:$0xff]
    %v5321 = vld [vmem:[#allocation11 + $0x168] sm:$0xff]
    %v5322 = vld [vmem:[#allocation11 + $0x170] sm:$0xff]
    %v5323 = vld [vmem:[#allocation11 + $0x178] sm:$0xff]
    %v5324 = vld [vmem:[#allocation11 + $0x180] sm:$0xff]
    %v5325 = vld [vmem:[#allocation11 + $0x188] sm:$0xff]
    %v5326 = vld [vmem:[#allocation11 + $0x190] sm:$0xff]
    %v5327 = vld [vmem:[#allocation11 + $0x198] sm:$0xff]
    %v5328 = vld [vmem:[#allocation11 + $0x1a0] sm:$0xff]
    %v5329 = vld [vmem:[#allocation11 + $0x1a8] sm:$0xff]
    %v5330 = vld [vmem:[#allocation11 + $0x1b0] sm:$0xff]
    %v5331 = vld [vmem:[#allocation11 + $0x1b8] sm:$0xff]
    %v5332 = vld [vmem:[#allocation11 + $0x1c0] sm:$0xff]
    %v5333 = vld [vmem:[#allocation11 + $0x1c8] sm:$0xff]
    %v5334 = vld [vmem:[#allocation11 + $0x1d0] sm:$0xff]
    %v5335 = vld [vmem:[#allocation11 + $0x1d8] sm:$0xff]
    %v5336 = vld [vmem:[#allocation11 + $0x1e0] sm:$0xff]
    %v5337 = vld [vmem:[#allocation11 + $0x1e8] sm:$0xff]
    %v5338 = vld [vmem:[#allocation11 + $0x1f0] sm:$0xff]
    %v5339 = vld [vmem:[#allocation11 + $0x1f8] sm:$0xff]
    %v5340 = vld [vmem:[#allocation11 + $0x200] sm:$0xff]
    %v5341 = vld [vmem:[#allocation11 + $0x208] sm:$0xff]
    %v5342 = vld [vmem:[#allocation11 + $0x210] sm:$0xff]
    %v5343 = vld [vmem:[#allocation11 + $0x218] sm:$0xff]
    %v5344 = vld [vmem:[#allocation11 + $0x220] sm:$0xff]
    %v5345 = vld [vmem:[#allocation11 + $0x228] sm:$0xff]
    %v5346 = vld [vmem:[#allocation11 + $0x230] sm:$0xff]
    %v5347 = vld [vmem:[#allocation11 + $0x238] sm:$0xff]
    %v5348 = vld [vmem:[#allocation11 + $0x240] sm:$0xff]
    %v5349 = vld [vmem:[#allocation11 + $0x248] sm:$0xff]
    %v5350 = vld [vmem:[#allocation11 + $0x250] sm:$0xff]
    %v5351 = vld [vmem:[#allocation11 + $0x258] sm:$0xff]
    %v5352 = vld [vmem:[#allocation11 + $0x260] sm:$0xff]
    %v5353 = vld [vmem:[#allocation11 + $0x268] sm:$0xff]
    %v5354 = vld [vmem:[#allocation11 + $0x270] sm:$0xff]
    %v5355 = vld [vmem:[#allocation11 + $0x278] sm:$0xff]
    %v5356 = vld [vmem:[#allocation11 + $0x280] sm:$0xff]
    %v5357 = vld [vmem:[#allocation11 + $0x288] sm:$0xff]
    %v5358 = vld [vmem:[#allocation11 + $0x290] sm:$0xff]
    %v5359 = vld [vmem:[#allocation11 + $0x298] sm:$0xff]
    %v5360 = vld [vmem:[#allocation11 + $0x2a0] sm:$0xff]
    %v5361 = vld [vmem:[#allocation11 + $0x2a8] sm:$0xff]
    %v5362 = vld [vmem:[#allocation11 + $0x2b0] sm:$0xff]
    %v5363 = vld [vmem:[#allocation11 + $0x2b8] sm:$0xff]
    %v5364 = vld [vmem:[#allocation11 + $0x2c0] sm:$0xff]
    %v5365 = vld [vmem:[#allocation11 + $0x2c8] sm:$0xff]
    %v5366 = vld [vmem:[#allocation11 + $0x2d0] sm:$0xff]
    %v5367 = vld [vmem:[#allocation11 + $0x2d8] sm:$0xff]
    %v5368 = vld [vmem:[#allocation11 + $0x2e0] sm:$0xff]
    %v5369 = vld [vmem:[#allocation11 + $0x2e8] sm:$0xff]
    %v5370 = vld [vmem:[#allocation11 + $0x2f0] sm:$0xff]
    %v5371 = vld [vmem:[#allocation11 + $0x2f8] sm:$0xff]
    %v5372 = vld [vmem:[#allocation11 + $0x300] sm:$0xff]
    %v5373 = vld [vmem:[#allocation11 + $0x308] sm:$0xff]
    %v5374 = vld [vmem:[#allocation11 + $0x310] sm:$0xff]
    %v5375 = vld [vmem:[#allocation11 + $0x318] sm:$0xff]
    %v5376 = vld [vmem:[#allocation11 + $0x320] sm:$0xff]
    %v5377 = vld [vmem:[#allocation11 + $0x328] sm:$0xff]
    %v5378 = vld [vmem:[#allocation11 + $0x330] sm:$0xff]
    %v5379 = vld [vmem:[#allocation11 + $0x338] sm:$0xff]
    %v5380 = vld [vmem:[#allocation11 + $0x340] sm:$0xff]
    %v5381 = vld [vmem:[#allocation11 + $0x348] sm:$0xff]
    %v5382 = vld [vmem:[#allocation11 + $0x350] sm:$0xff]
    %v5383 = vld [vmem:[#allocation11 + $0x358] sm:$0xff]
    %v5384 = vld [vmem:[#allocation11 + $0x360] sm:$0xff]
    %v5385 = vld [vmem:[#allocation11 + $0x368] sm:$0xff]
    %v5386 = vld [vmem:[#allocation11 + $0x370] sm:$0xff]
    %v5387 = vld [vmem:[#allocation11 + $0x378] sm:$0xff]
    %v5388 = vld [vmem:[#allocation11 + $0x380] sm:$0xff]
    %v5389 = vld [vmem:[#allocation11 + $0x388] sm:$0xff]
    %v5390 = vld [vmem:[#allocation11 + $0x390] sm:$0xff]
    %v5391 = vld [vmem:[#allocation11 + $0x398] sm:$0xff]
    %v5392 = vld [vmem:[#allocation11 + $0x3a0] sm:$0xff]
    %v5393 = vld [vmem:[#allocation11 + $0x3a8] sm:$0xff]
    %v5394 = vld [vmem:[#allocation11 + $0x3b0] sm:$0xff]
    %v5395 = vld [vmem:[#allocation11 + $0x3b8] sm:$0xff]
    %v5396 = vld [vmem:[#allocation11 + $0x3c0] sm:$0xff]
    %v5397 = vld [vmem:[#allocation11 + $0x3c8] sm:$0xff]
    %v5398 = vld [vmem:[#allocation11 + $0x3d0] sm:$0xff]
    %v5399 = vld [vmem:[#allocation11 + $0x3d8] sm:$0xff]
    %v5400 = vld [vmem:[#allocation11 + $0x3e0] sm:$0xff]
    %v5401 = vld [vmem:[#allocation11 + $0x3e8] sm:$0xff]
    %v5402 = vld [vmem:[#allocation11 + $0x3f0] sm:$0xff]
    %v5403 = vld [vmem:[#allocation11 + $0x3f8] sm:$0xff]
    %v5404 = vld [vmem:[#allocation13] sm:$0xf]
    %v5405 = vunpack.c.l.bf16 %v5404
    %v5407 = vlaneseq
    %v5408 = vshrl.u32 %v5407, 7
    %v5409 = vsub.s32 0, %v5408
    %v5410 = vrot.slane %v5405, %v5409
    %v5411 = vlaneseq
    %v5412 = vshrl.u32 %v5411, 7
    %v5413 = vsub.s32 2, %v5412
    %v5414 = vrot.slane %v5405, %v5413
    %v5415 = vlaneseq
    %v5416 = vshrl.u32 %v5415, 7
    %v5417 = vsub.s32 4, %v5416
    %v5418 = vrot.slane %v5405, %v5417
    %v5419 = vlaneseq
    %v5420 = vshrl.u32 %v5419, 7
    %v5421 = vsub.s32 6, %v5420
    %v5422 = vrot.slane %v5405, %v5421
    %v5427 = vlaneseq
    %v5428 = vshrl.u32 %v5427, 7
    %v5429 = vsub.s32 0, %v5428
    %v5430 = vrot.slane %v5410, %v5429
    %v5431 = vlaneseq
    %v5432 = vshrl.u32 %v5431, 7
    %v5433 = vsub.s32 0, %v5432
    %v5434 = vrot.slane %v5414, %v5433
    %v5435 = vlaneseq
    %v5436 = vshrl.u32 %v5435, 7
    %v5437 = vsub.s32 0, %v5436
    %v5438 = vrot.slane %v5418, %v5437
    %v5439 = vlaneseq
    %v5440 = vshrl.u32 %v5439, 7
    %v5441 = vsub.s32 0, %v5440
    %v5442 = vrot.slane %v5422, %v5441
    %v5571 = vunpack.c.l.b16 %v5276
    %v5572 = vunpack.c.h.b16 %v5276
    %v5573 = vunpack.c.l.b16 %v5277
    %v5574 = vunpack.c.h.b16 %v5277
    %v5575 = vunpack.c.l.b16 %v5278
    %v5576 = vunpack.c.h.b16 %v5278
    %v5577 = vunpack.c.l.b16 %v5279
    %v5578 = vunpack.c.h.b16 %v5279
    %v5579 = vunpack.c.l.b16 %v5280
    %v5580 = vunpack.c.h.b16 %v5280
    %v5581 = vunpack.c.l.b16 %v5281
    %v5582 = vunpack.c.h.b16 %v5281
    %v5583 = vunpack.c.l.b16 %v5282
    %v5584 = vunpack.c.h.b16 %v5282
    %v5585 = vunpack.c.l.b16 %v5283
    %v5586 = vunpack.c.h.b16 %v5283
    %v5587 = vunpack.c.l.b16 %v5284
    %v5588 = vunpack.c.h.b16 %v5284
    %v5589 = vunpack.c.l.b16 %v5285
    %v5590 = vunpack.c.h.b16 %v5285
    %v5591 = vunpack.c.l.b16 %v5286
    %v5592 = vunpack.c.h.b16 %v5286
    %v5593 = vunpack.c.l.b16 %v5287
    %v5594 = vunpack.c.h.b16 %v5287
    %v5595 = vunpack.c.l.b16 %v5288
    %v5596 = vunpack.c.h.b16 %v5288
    %v5597 = vunpack.c.l.b16 %v5289
    %v5598 = vunpack.c.h.b16 %v5289
    %v5599 = vunpack.c.l.b16 %v5290
    %v5600 = vunpack.c.h.b16 %v5290
    %v5601 = vunpack.c.l.b16 %v5291
    %v5602 = vunpack.c.h.b16 %v5291
    %v5603 = vunpack.c.l.b16 %v5292
    %v5604 = vunpack.c.h.b16 %v5292
    %v5605 = vunpack.c.l.b16 %v5293
    %v5606 = vunpack.c.h.b16 %v5293
    %v5607 = vunpack.c.l.b16 %v5294
    %v5608 = vunpack.c.h.b16 %v5294
    %v5609 = vunpack.c.l.b16 %v5295
    %v5610 = vunpack.c.h.b16 %v5295
    %v5611 = vunpack.c.l.b16 %v5296
    %v5612 = vunpack.c.h.b16 %v5296
    %v5613 = vunpack.c.l.b16 %v5297
    %v5614 = vunpack.c.h.b16 %v5297
    %v5615 = vunpack.c.l.b16 %v5298
    %v5616 = vunpack.c.h.b16 %v5298
    %v5617 = vunpack.c.l.b16 %v5299
    %v5618 = vunpack.c.h.b16 %v5299
    %v5619 = vunpack.c.l.b16 %v5300
    %v5620 = vunpack.c.h.b16 %v5300
    %v5621 = vunpack.c.l.b16 %v5301
    %v5622 = vunpack.c.h.b16 %v5301
    %v5623 = vunpack.c.l.b16 %v5302
    %v5624 = vunpack.c.h.b16 %v5302
    %v5625 = vunpack.c.l.b16 %v5303
    %v5626 = vunpack.c.h.b16 %v5303
    %v5627 = vunpack.c.l.b16 %v5304
    %v5628 = vunpack.c.h.b16 %v5304
    %v5629 = vunpack.c.l.b16 %v5305
    %v5630 = vunpack.c.h.b16 %v5305
    %v5631 = vunpack.c.l.b16 %v5306
    %v5632 = vunpack.c.h.b16 %v5306
    %v5633 = vunpack.c.l.b16 %v5307
    %v5634 = vunpack.c.h.b16 %v5307
    %v5635 = vunpack.c.l.b16 %v5308
    %v5636 = vunpack.c.h.b16 %v5308
    %v5637 = vunpack.c.l.b16 %v5309
    %v5638 = vunpack.c.h.b16 %v5309
    %v5639 = vunpack.c.l.b16 %v5310
    %v5640 = vunpack.c.h.b16 %v5310
    %v5641 = vunpack.c.l.b16 %v5311
    %v5642 = vunpack.c.h.b16 %v5311
    %v5643 = vunpack.c.l.b16 %v5312
    %v5644 = vunpack.c.h.b16 %v5312
    %v5645 = vunpack.c.l.b16 %v5313
    %v5646 = vunpack.c.h.b16 %v5313
    %v5647 = vunpack.c.l.b16 %v5314
    %v5648 = vunpack.c.h.b16 %v5314
    %v5649 = vunpack.c.l.b16 %v5315
    %v5650 = vunpack.c.h.b16 %v5315
    %v5651 = vunpack.c.l.b16 %v5316
    %v5652 = vunpack.c.h.b16 %v5316
    %v5653 = vunpack.c.l.b16 %v5317
    %v5654 = vunpack.c.h.b16 %v5317
    %v5655 = vunpack.c.l.b16 %v5318
    %v5656 = vunpack.c.h.b16 %v5318
    %v5657 = vunpack.c.l.b16 %v5319
    %v5658 = vunpack.c.h.b16 %v5319
    %v5659 = vunpack.c.l.b16 %v5320
    %v5660 = vunpack.c.h.b16 %v5320
    %v5661 = vunpack.c.l.b16 %v5321
    %v5662 = vunpack.c.h.b16 %v5321
    %v5663 = vunpack.c.l.b16 %v5322
    %v5664 = vunpack.c.h.b16 %v5322
    %v5665 = vunpack.c.l.b16 %v5323
    %v5666 = vunpack.c.h.b16 %v5323
    %v5667 = vunpack.c.l.b16 %v5324
    %v5668 = vunpack.c.h.b16 %v5324
    %v5669 = vunpack.c.l.b16 %v5325
    %v5670 = vunpack.c.h.b16 %v5325
    %v5671 = vunpack.c.l.b16 %v5326
    %v5672 = vunpack.c.h.b16 %v5326
    %v5673 = vunpack.c.l.b16 %v5327
    %v5674 = vunpack.c.h.b16 %v5327
    %v5675 = vunpack.c.l.b16 %v5328
    %v5676 = vunpack.c.h.b16 %v5328
    %v5677 = vunpack.c.l.b16 %v5329
    %v5678 = vunpack.c.h.b16 %v5329
    %v5679 = vunpack.c.l.b16 %v5330
    %v5680 = vunpack.c.h.b16 %v5330
    %v5681 = vunpack.c.l.b16 %v5331
    %v5682 = vunpack.c.h.b16 %v5331
    %v5683 = vunpack.c.l.b16 %v5332
    %v5684 = vunpack.c.h.b16 %v5332
    %v5685 = vunpack.c.l.b16 %v5333
    %v5686 = vunpack.c.h.b16 %v5333
    %v5687 = vunpack.c.l.b16 %v5334
    %v5688 = vunpack.c.h.b16 %v5334
    %v5689 = vunpack.c.l.b16 %v5335
    %v5690 = vunpack.c.h.b16 %v5335
    %v5691 = vunpack.c.l.b16 %v5336
    %v5692 = vunpack.c.h.b16 %v5336
    %v5693 = vunpack.c.l.b16 %v5337
    %v5694 = vunpack.c.h.b16 %v5337
    %v5695 = vunpack.c.l.b16 %v5338
    %v5696 = vunpack.c.h.b16 %v5338
    %v5697 = vunpack.c.l.b16 %v5339
    %v5698 = vunpack.c.h.b16 %v5339
    %v5699 = vunpack.c.l.b16 %v5340
    %v5700 = vunpack.c.h.b16 %v5340
    %v5701 = vunpack.c.l.b16 %v5341
    %v5702 = vunpack.c.h.b16 %v5341
    %v5703 = vunpack.c.l.b16 %v5342
    %v5704 = vunpack.c.h.b16 %v5342
    %v5705 = vunpack.c.l.b16 %v5343
    %v5706 = vunpack.c.h.b16 %v5343
    %v5707 = vunpack.c.l.b16 %v5344
    %v5708 = vunpack.c.h.b16 %v5344
    %v5709 = vunpack.c.l.b16 %v5345
    %v5710 = vunpack.c.h.b16 %v5345
    %v5711 = vunpack.c.l.b16 %v5346
    %v5712 = vunpack.c.h.b16 %v5346
    %v5713 = vunpack.c.l.b16 %v5347
    %v5714 = vunpack.c.h.b16 %v5347
    %v5715 = vunpack.c.l.b16 %v5348
    %v5716 = vunpack.c.h.b16 %v5348
    %v5717 = vunpack.c.l.b16 %v5349
    %v5718 = vunpack.c.h.b16 %v5349
    %v5719 = vunpack.c.l.b16 %v5350
    %v5720 = vunpack.c.h.b16 %v5350
    %v5721 = vunpack.c.l.b16 %v5351
    %v5722 = vunpack.c.h.b16 %v5351
    %v5723 = vunpack.c.l.b16 %v5352
    %v5724 = vunpack.c.h.b16 %v5352
    %v5725 = vunpack.c.l.b16 %v5353
    %v5726 = vunpack.c.h.b16 %v5353
    %v5727 = vunpack.c.l.b16 %v5354
    %v5728 = vunpack.c.h.b16 %v5354
    %v5729 = vunpack.c.l.b16 %v5355
    %v5730 = vunpack.c.h.b16 %v5355
    %v5731 = vunpack.c.l.b16 %v5356
    %v5732 = vunpack.c.h.b16 %v5356
    %v5733 = vunpack.c.l.b16 %v5357
    %v5734 = vunpack.c.h.b16 %v5357
    %v5735 = vunpack.c.l.b16 %v5358
    %v5736 = vunpack.c.h.b16 %v5358
    %v5737 = vunpack.c.l.b16 %v5359
    %v5738 = vunpack.c.h.b16 %v5359
    %v5739 = vunpack.c.l.b16 %v5360
    %v5740 = vunpack.c.h.b16 %v5360
    %v5741 = vunpack.c.l.b16 %v5361
    %v5742 = vunpack.c.h.b16 %v5361
    %v5743 = vunpack.c.l.b16 %v5362
    %v5744 = vunpack.c.h.b16 %v5362
    %v5745 = vunpack.c.l.b16 %v5363
    %v5746 = vunpack.c.h.b16 %v5363
    %v5747 = vunpack.c.l.b16 %v5364
    %v5748 = vunpack.c.h.b16 %v5364
    %v5749 = vunpack.c.l.b16 %v5365
    %v5750 = vunpack.c.h.b16 %v5365
    %v5751 = vunpack.c.l.b16 %v5366
    %v5752 = vunpack.c.h.b16 %v5366
    %v5753 = vunpack.c.l.b16 %v5367
    %v5754 = vunpack.c.h.b16 %v5367
    %v5755 = vunpack.c.l.b16 %v5368
    %v5756 = vunpack.c.h.b16 %v5368
    %v5757 = vunpack.c.l.b16 %v5369
    %v5758 = vunpack.c.h.b16 %v5369
    %v5759 = vunpack.c.l.b16 %v5370
    %v5760 = vunpack.c.h.b16 %v5370
    %v5761 = vunpack.c.l.b16 %v5371
    %v5762 = vunpack.c.h.b16 %v5371
    %v5763 = vunpack.c.l.b16 %v5372
    %v5764 = vunpack.c.h.b16 %v5372
    %v5765 = vunpack.c.l.b16 %v5373
    %v5766 = vunpack.c.h.b16 %v5373
    %v5767 = vunpack.c.l.b16 %v5374
    %v5768 = vunpack.c.h.b16 %v5374
    %v5769 = vunpack.c.l.b16 %v5375
    %v5770 = vunpack.c.h.b16 %v5375
    %v5771 = vunpack.c.l.b16 %v5376
    %v5772 = vunpack.c.h.b16 %v5376
    %v5773 = vunpack.c.l.b16 %v5377
    %v5774 = vunpack.c.h.b16 %v5377
    %v5775 = vunpack.c.l.b16 %v5378
    %v5776 = vunpack.c.h.b16 %v5378
    %v5777 = vunpack.c.l.b16 %v5379
    %v5778 = vunpack.c.h.b16 %v5379
    %v5779 = vunpack.c.l.b16 %v5380
    %v5780 = vunpack.c.h.b16 %v5380
    %v5781 = vunpack.c.l.b16 %v5381
    %v5782 = vunpack.c.h.b16 %v5381
    %v5783 = vunpack.c.l.b16 %v5382
    %v5784 = vunpack.c.h.b16 %v5382
    %v5785 = vunpack.c.l.b16 %v5383
    %v5786 = vunpack.c.h.b16 %v5383
    %v5787 = vunpack.c.l.b16 %v5384
    %v5788 = vunpack.c.h.b16 %v5384
    %v5789 = vunpack.c.l.b16 %v5385
    %v5790 = vunpack.c.h.b16 %v5385
    %v5791 = vunpack.c.l.b16 %v5386
    %v5792 = vunpack.c.h.b16 %v5386
    %v5793 = vunpack.c.l.b16 %v5387
    %v5794 = vunpack.c.h.b16 %v5387
    %v5795 = vunpack.c.l.b16 %v5388
    %v5796 = vunpack.c.h.b16 %v5388
    %v5797 = vunpack.c.l.b16 %v5389
    %v5798 = vunpack.c.h.b16 %v5389
    %v5799 = vunpack.c.l.b16 %v5390
    %v5800 = vunpack.c.h.b16 %v5390
    %v5801 = vunpack.c.l.b16 %v5391
    %v5802 = vunpack.c.h.b16 %v5391
    %v5803 = vunpack.c.l.b16 %v5392
    %v5804 = vunpack.c.h.b16 %v5392
    %v5805 = vunpack.c.l.b16 %v5393
    %v5806 = vunpack.c.h.b16 %v5393
    %v5807 = vunpack.c.l.b16 %v5394
    %v5808 = vunpack.c.h.b16 %v5394
    %v5809 = vunpack.c.l.b16 %v5395
    %v5810 = vunpack.c.h.b16 %v5395
    %v5811 = vunpack.c.l.b16 %v5396
    %v5812 = vunpack.c.h.b16 %v5396
    %v5813 = vunpack.c.l.b16 %v5397
    %v5814 = vunpack.c.h.b16 %v5397
    %v5815 = vunpack.c.l.b16 %v5398
    %v5816 = vunpack.c.h.b16 %v5398
    %v5817 = vunpack.c.l.b16 %v5399
    %v5818 = vunpack.c.h.b16 %v5399
    %v5819 = vunpack.c.l.b16 %v5400
    %v5820 = vunpack.c.h.b16 %v5400
    %v5821 = vunpack.c.l.b16 %v5401
    %v5822 = vunpack.c.h.b16 %v5401
    %v5823 = vunpack.c.l.b16 %v5402
    %v5824 = vunpack.c.h.b16 %v5402
    %v5825 = vunpack.c.l.b16 %v5403
    %v5826 = vunpack.c.h.b16 %v5403
    %v5827 = vpack.c.b16 %v5575, %v5571
    %v5828 = vpack.c.b16 %v5576, %v5572
    %v5829 = vpack.c.b16 %v5577, %v5573
    %v5830 = vpack.c.b16 %v5578, %v5574
    %v5831 = vpack.c.b16 %v5583, %v5579
    %v5832 = vpack.c.b16 %v5584, %v5580
    %v5833 = vpack.c.b16 %v5585, %v5581
    %v5834 = vpack.c.b16 %v5586, %v5582
    %v5835 = vpack.c.b16 %v5591, %v5587
    %v5836 = vpack.c.b16 %v5592, %v5588
    %v5837 = vpack.c.b16 %v5593, %v5589
    %v5838 = vpack.c.b16 %v5594, %v5590
    %v5839 = vpack.c.b16 %v5599, %v5595
    %v5840 = vpack.c.b16 %v5600, %v5596
    %v5841 = vpack.c.b16 %v5601, %v5597
    %v5842 = vpack.c.b16 %v5602, %v5598
    %v5843 = vpack.c.b16 %v5607, %v5603
    %v5844 = vpack.c.b16 %v5608, %v5604
    %v5845 = vpack.c.b16 %v5609, %v5605
    %v5846 = vpack.c.b16 %v5610, %v5606
    %v5847 = vpack.c.b16 %v5615, %v5611
    %v5848 = vpack.c.b16 %v5616, %v5612
    %v5849 = vpack.c.b16 %v5617, %v5613
    %v5850 = vpack.c.b16 %v5618, %v5614
    %v5851 = vpack.c.b16 %v5623, %v5619
    %v5852 = vpack.c.b16 %v5624, %v5620
    %v5853 = vpack.c.b16 %v5625, %v5621
    %v5854 = vpack.c.b16 %v5626, %v5622
    %v5855 = vpack.c.b16 %v5631, %v5627
    %v5856 = vpack.c.b16 %v5632, %v5628
    %v5857 = vpack.c.b16 %v5633, %v5629
    %v5858 = vpack.c.b16 %v5634, %v5630
    %v5859 = vpack.c.b16 %v5639, %v5635
    %v5860 = vpack.c.b16 %v5640, %v5636
    %v5861 = vpack.c.b16 %v5641, %v5637
    %v5862 = vpack.c.b16 %v5642, %v5638
    %v5863 = vpack.c.b16 %v5647, %v5643
    %v5864 = vpack.c.b16 %v5648, %v5644
    %v5865 = vpack.c.b16 %v5649, %v5645
    %v5866 = vpack.c.b16 %v5650, %v5646
    %v5867 = vpack.c.b16 %v5655, %v5651
    %v5868 = vpack.c.b16 %v5656, %v5652
    %v5869 = vpack.c.b16 %v5657, %v5653
    %v5870 = vpack.c.b16 %v5658, %v5654
    %v5871 = vpack.c.b16 %v5663, %v5659
    %v5872 = vpack.c.b16 %v5664, %v5660
    %v5873 = vpack.c.b16 %v5665, %v5661
    %v5874 = vpack.c.b16 %v5666, %v5662
    %v5875 = vpack.c.b16 %v5671, %v5667
    %v5876 = vpack.c.b16 %v5672, %v5668
    %v5877 = vpack.c.b16 %v5673, %v5669
    %v5878 = vpack.c.b16 %v5674, %v5670
    %v5879 = vpack.c.b16 %v5679, %v5675
    %v5880 = vpack.c.b16 %v5680, %v5676
    %v5881 = vpack.c.b16 %v5681, %v5677
    %v5882 = vpack.c.b16 %v5682, %v5678
    %v5883 = vpack.c.b16 %v5687, %v5683
    %v5884 = vpack.c.b16 %v5688, %v5684
    %v5885 = vpack.c.b16 %v5689, %v5685
    %v5886 = vpack.c.b16 %v5690, %v5686
    %v5887 = vpack.c.b16 %v5695, %v5691
    %v5888 = vpack.c.b16 %v5696, %v5692
    %v5889 = vpack.c.b16 %v5697, %v5693
    %v5890 = vpack.c.b16 %v5698, %v5694
    %v5891 = vpack.c.b16 %v5703, %v5699
    %v5892 = vpack.c.b16 %v5704, %v5700
    %v5893 = vpack.c.b16 %v5705, %v5701
    %v5894 = vpack.c.b16 %v5706, %v5702
    %v5895 = vpack.c.b16 %v5711, %v5707
    %v5896 = vpack.c.b16 %v5712, %v5708
    %v5897 = vpack.c.b16 %v5713, %v5709
    %v5898 = vpack.c.b16 %v5714, %v5710
    %v5899 = vpack.c.b16 %v5719, %v5715
    %v5900 = vpack.c.b16 %v5720, %v5716
    %v5901 = vpack.c.b16 %v5721, %v5717
    %v5902 = vpack.c.b16 %v5722, %v5718
    %v5903 = vpack.c.b16 %v5727, %v5723
    %v5904 = vpack.c.b16 %v5728, %v5724
    %v5905 = vpack.c.b16 %v5729, %v5725
    %v5906 = vpack.c.b16 %v5730, %v5726
    %v5907 = vpack.c.b16 %v5735, %v5731
    %v5908 = vpack.c.b16 %v5736, %v5732
    %v5909 = vpack.c.b16 %v5737, %v5733
    %v5910 = vpack.c.b16 %v5738, %v5734
    %v5911 = vpack.c.b16 %v5743, %v5739
    %v5912 = vpack.c.b16 %v5744, %v5740
    %v5913 = vpack.c.b16 %v5745, %v5741
    %v5914 = vpack.c.b16 %v5746, %v5742
    %v5915 = vpack.c.b16 %v5751, %v5747
    %v5916 = vpack.c.b16 %v5752, %v5748
    %v5917 = vpack.c.b16 %v5753, %v5749
    %v5918 = vpack.c.b16 %v5754, %v5750
    %v5919 = vpack.c.b16 %v5759, %v5755
    %v5920 = vpack.c.b16 %v5760, %v5756
    %v5921 = vpack.c.b16 %v5761, %v5757
    %v5922 = vpack.c.b16 %v5762, %v5758
    %v5923 = vpack.c.b16 %v5767, %v5763
    %v5924 = vpack.c.b16 %v5768, %v5764
    %v5925 = vpack.c.b16 %v5769, %v5765
    %v5926 = vpack.c.b16 %v5770, %v5766
    %v5927 = vpack.c.b16 %v5775, %v5771
    %v5928 = vpack.c.b16 %v5776, %v5772
    %v5929 = vpack.c.b16 %v5777, %v5773
    %v5930 = vpack.c.b16 %v5778, %v5774
    %v5931 = vpack.c.b16 %v5783, %v5779
    %v5932 = vpack.c.b16 %v5784, %v5780
    %v5933 = vpack.c.b16 %v5785, %v5781
    %v5934 = vpack.c.b16 %v5786, %v5782
    %v5935 = vpack.c.b16 %v5791, %v5787
    %v5936 = vpack.c.b16 %v5792, %v5788
    %v5937 = vpack.c.b16 %v5793, %v5789
    %v5938 = vpack.c.b16 %v5794, %v5790
    %v5939 = vpack.c.b16 %v5799, %v5795
    %v5940 = vpack.c.b16 %v5800, %v5796
    %v5941 = vpack.c.b16 %v5801, %v5797
    %v5942 = vpack.c.b16 %v5802, %v5798
    %v5943 = vpack.c.b16 %v5807, %v5803
    %v5944 = vpack.c.b16 %v5808, %v5804
    %v5945 = vpack.c.b16 %v5809, %v5805
    %v5946 = vpack.c.b16 %v5810, %v5806
    %v5947 = vpack.c.b16 %v5815, %v5811
    %v5948 = vpack.c.b16 %v5816, %v5812
    %v5949 = vpack.c.b16 %v5817, %v5813
    %v5950 = vpack.c.b16 %v5818, %v5814
    %v5951 = vpack.c.b16 %v5823, %v5819
    %v5952 = vpack.c.b16 %v5824, %v5820
    %v5953 = vpack.c.b16 %v5825, %v5821
    %v5954 = vpack.c.b16 %v5826, %v5822
    %6083 = vmatprep.subr.bf16.mxu0 %v5828
    %6084 = vmatpush1.bf16.msra.mxu0 %v5827
    %6085 = vmatprep.subr.bf16.mxu0 %v5832
    %6086 = vmatpush1.bf16.msra.mxu0 %v5831
    %6087 = vmatprep.subr.bf16.mxu0 %v5836
    %6088 = vmatpush1.bf16.msra.mxu0 %v5835
    %6089 = vmatprep.subr.bf16.mxu0 %v5840
    %6090 = vmatpush1.bf16.msra.mxu0 %v5839
    %6091 = vmatprep.subr.bf16.mxu0 %v5844
    %6092 = vmatpush1.bf16.msra.mxu0 %v5843
    %6093 = vmatprep.subr.bf16.mxu0 %v5848
    %6094 = vmatpush1.bf16.msra.mxu0 %v5847
    %6095 = vmatprep.subr.bf16.mxu0 %v5852
    %6096 = vmatpush1.bf16.msra.mxu0 %v5851
    %6097 = vmatprep.subr.bf16.mxu0 %v5856
    %6098 = vmatpush1.bf16.msra.mxu0 %v5855
    %6099 = vmatprep.subr.bf16.mxu0 %v5860
    %6100 = vmatpush1.bf16.msra.mxu0 %v5859
    %6101 = vmatprep.subr.bf16.mxu0 %v5864
    %6102 = vmatpush1.bf16.msra.mxu0 %v5863
    %6103 = vmatprep.subr.bf16.mxu0 %v5868
    %6104 = vmatpush1.bf16.msra.mxu0 %v5867
    %6105 = vmatprep.subr.bf16.mxu0 %v5872
    %6106 = vmatpush1.bf16.msra.mxu0 %v5871
    %6107 = vmatprep.subr.bf16.mxu0 %v5876
    %6108 = vmatpush1.bf16.msra.mxu0 %v5875
    %6109 = vmatprep.subr.bf16.mxu0 %v5880
    %6110 = vmatpush1.bf16.msra.mxu0 %v5879
    %6111 = vmatprep.subr.bf16.mxu0 %v5884
    %6112 = vmatpush1.bf16.msra.mxu0 %v5883
    %6113 = vmatprep.subr.bf16.mxu0 %v5888
    %6114 = vmatpush1.bf16.msra.mxu0 %v5887
    %6115 = vmatprep.mubr.bf16.mxu0 %v5273
    %6116 = vmatmul.mubr.bf16.gmra.mrb[0].mxu0 %v5272
    %v6117 = vpop.f32.mrb[0].mxu0
    %v6118 = vadd.f32 %v5430, %v6117
    %v6119 = vpop.f32.mrb[0].mxu0
    %v6120 = vadd.f32 %v5434, %v6119
    %v6121 = vpop.f32.mrb[0].mxu0
    %v6122 = vadd.f32 %v5430, %v6121
    %v6123 = vpop.f32.mrb[0].mxu0
    %v6124 = vadd.f32 %v5434, %v6123
    %6125 = vdwg.mxu0
    %6126 = vmatprep.subr.bf16.mxu0 %v5892
    %6127 = vmatpush1.bf16.msra.mxu0 %v5891
    %6128 = vmatprep.subr.bf16.mxu0 %v5896
    %6129 = vmatpush1.bf16.msra.mxu0 %v5895
    %6130 = vmatprep.subr.bf16.mxu0 %v5900
    %6131 = vmatpush1.bf16.msra.mxu0 %v5899
    %6132 = vmatprep.subr.bf16.mxu0 %v5904
    %6133 = vmatpush1.bf16.msra.mxu0 %v5903
    %6134 = vmatprep.subr.bf16.mxu0 %v5908
    %6135 = vmatpush1.bf16.msra.mxu0 %v5907
    %6136 = vmatprep.subr.bf16.mxu0 %v5912
    %6137 = vmatpush1.bf16.msra.mxu0 %v5911
    %6138 = vmatprep.subr.bf16.mxu0 %v5916
    %6139 = vmatpush1.bf16.msra.mxu0 %v5915
    %6140 = vmatprep.subr.bf16.mxu0 %v5920
    %6141 = vmatpush1.bf16.msra.mxu0 %v5919
    %6142 = vmatprep.subr.bf16.mxu0 %v5924
    %6143 = vmatpush1.bf16.msra.mxu0 %v5923
    %6144 = vmatprep.subr.bf16.mxu0 %v5928
    %6145 = vmatpush1.bf16.msra.mxu0 %v5927
    %6146 = vmatprep.subr.bf16.mxu0 %v5932
    %6147 = vmatpush1.bf16.msra.mxu0 %v5931
    %6148 = vmatprep.subr.bf16.mxu0 %v5936
    %6149 = vmatpush1.bf16.msra.mxu0 %v5935
    %6150 = vmatprep.subr.bf16.mxu0 %v5940
    %6151 = vmatpush1.bf16.msra.mxu0 %v5939
    %6152 = vmatprep.subr.bf16.mxu0 %v5944
    %6153 = vmatpush1.bf16.msra.mxu0 %v5943
    %6154 = vmatprep.subr.bf16.mxu0 %v5948
    %6155 = vmatpush1.bf16.msra.mxu0 %v5947
    %6156 = vmatprep.subr.bf16.mxu0 %v5952
    %6157 = vmatpush1.bf16.msra.mxu0 %v5951
    %6158 = vmatprep.mubr.bf16.mxu0 %v5275
    %6159 = vmatmul.mubr.bf16.gmra.mrb[0].mxu0 %v5274
    %v6160 = vpop.f32.mrb[0].mxu0
    %v6161 = vadd.f32 %v6118, %v6160
    %v6162 = vpop.f32.mrb[0].mxu0
    %v6163 = vadd.f32 %v6120, %v6162
    %v6164 = vpop.f32.mrb[0].mxu0
    %v6165 = vadd.f32 %v6122, %v6164
    %v6166 = vpop.f32.mrb[0].mxu0
    %v6167 = vadd.f32 %v6124, %v6166
    %6168 = vdwg.mxu0
    %6169 = vmatprep.subr.bf16.mxu0 %v5830
    %6170 = vmatpush1.bf16.msra.mxu0 %v5829
    %6171 = vmatprep.subr.bf16.mxu0 %v5834
    %6172 = vmatpush1.bf16.msra.mxu0 %v5833
    %6173 = vmatprep.subr.bf16.mxu0 %v5838
    %6174 = vmatpush1.bf16.msra.mxu0 %v5837
    %6175 = vmatprep.subr.bf16.mxu0 %v5842
    %6176 = vmatpush1.bf16.msra.mxu0 %v5841
    %6177 = vmatprep.subr.bf16.mxu0 %v5846
    %6178 = vmatpush1.bf16.msra.mxu0 %v5845
    %6179 = vmatprep.subr.bf16.mxu0 %v5850
    %6180 = vmatpush1.bf16.msra.mxu0 %v5849
    %6181 = vmatprep.subr.bf16.mxu0 %v5854
    %6182 = vmatpush1.bf16.msra.mxu0 %v5853
    %6183 = vmatprep.subr.bf16.mxu0 %v5858
    %6184 = vmatpush1.bf16.msra.mxu0 %v5857
    %6185 = vmatprep.subr.bf16.mxu0 %v5862
    %6186 = vmatpush1.bf16.msra.mxu0 %v5861
    %6187 = vmatprep.subr.bf16.mxu0 %v5866
    %6188 = vmatpush1.bf16.msra.mxu0 %v5865
    %6189 = vmatprep.subr.bf16.mxu0 %v5870
    %6190 = vmatpush1.bf16.msra.mxu0 %v5869
    %6191 = vmatprep.subr.bf16.mxu0 %v5874
    %6192 = vmatpush1.bf16.msra.mxu0 %v5873
    %6193 = vmatprep.subr.bf16.mxu0 %v5878
    %6194 = vmatpush1.bf16.msra.mxu0 %v5877
    %6195 = vmatprep.subr.bf16.mxu0 %v5882
    %6196 = vmatpush1.bf16.msra.mxu0 %v5881
    %6197 = vmatprep.subr.bf16.mxu0 %v5886
    %6198 = vmatpush1.bf16.msra.mxu0 %v5885
    %6199 = vmatprep.subr.bf16.mxu0 %v5890
    %6200 = vmatpush1.bf16.msra.mxu0 %v5889
    %6201 = vmatprep.mubr.bf16.mxu0 %v5273
    %6202 = vmatmul.mubr.bf16.gmra.mrb[0].mxu0 %v5272
    %v6203 = vpop.f32.mrb[0].mxu0
    %v6204 = vadd.f32 %v5438, %v6203
    %v6205 = vpop.f32.mrb[0].mxu0
    %v6206 = vadd.f32 %v5442, %v6205
    %v6207 = vpop.f32.mrb[0].mxu0
    %v6208 = vadd.f32 %v5438, %v6207
    %v6209 = vpop.f32.mrb[0].mxu0
    %v6210 = vadd.f32 %v5442, %v6209
    %6211 = vdwg.mxu0
    %6212 = vmatprep.subr.bf16.mxu0 %v5894
    %6213 = vmatpush1.bf16.msra.mxu0 %v5893
    %6214 = vmatprep.subr.bf16.mxu0 %v5898
    %6215 = vmatpush1.bf16.msra.mxu0 %v5897
    %6216 = vmatprep.subr.bf16.mxu0 %v5902
    %6217 = vmatpush1.bf16.msra.mxu0 %v5901
    %6218 = vmatprep.subr.bf16.mxu0 %v5906
    %6219 = vmatpush1.bf16.msra.mxu0 %v5905
    %6220 = vmatprep.subr.bf16.mxu0 %v5910
    %6221 = vmatpush1.bf16.msra.mxu0 %v5909
    %6222 = vmatprep.subr.bf16.mxu0 %v5914
    %6223 = vmatpush1.bf16.msra.mxu0 %v5913
    %6224 = vmatprep.subr.bf16.mxu0 %v5918
    %6225 = vmatpush1.bf16.msra.mxu0 %v5917
    %6226 = vmatprep.subr.bf16.mxu0 %v5922
    %6227 = vmatpush1.bf16.msra.mxu0 %v5921
    %6228 = vmatprep.subr.bf16.mxu0 %v5926
    %6229 = vmatpush1.bf16.msra.mxu0 %v5925
    %6230 = vmatprep.subr.bf16.mxu0 %v5930
    %6231 = vmatpush1.bf16.msra.mxu0 %v5929
    %6232 = vmatprep.subr.bf16.mxu0 %v5934
    %6233 = vmatpush1.bf16.msra.mxu0 %v5933
    %6234 = vmatprep.subr.bf16.mxu0 %v5938
    %6235 = vmatpush1.bf16.msra.mxu0 %v5937
    %6236 = vmatprep.subr.bf16.mxu0 %v5942
    %6237 = vmatpush1.bf16.msra.mxu0 %v5941
    %6238 = vmatprep.subr.bf16.mxu0 %v5946
    %6239 = vmatpush1.bf16.msra.mxu0 %v5945
    %6240 = vmatprep.subr.bf16.mxu0 %v5950
    %6241 = vmatpush1.bf16.msra.mxu0 %v5949
    %6242 = vmatprep.subr.bf16.mxu0 %v5954
    %6243 = vmatpush1.bf16.msra.mxu0 %v5953
    %6244 = vmatprep.mubr.bf16.mxu0 %v5275
    %6245 = vmatmul.mubr.bf16.gmra.mrb[0].mxu0 %v5274
    %v6246 = vpop.f32.mrb[0].mxu0
    %v6247 = vadd.f32 %v6204, %v6246
    %v6248 = vpop.f32.mrb[0].mxu0
    %v6249 = vadd.f32 %v6206, %v6248
    %v6250 = vpop.f32.mrb[0].mxu0
    %v6251 = vadd.f32 %v6208, %v6250
    %v6252 = vpop.f32.mrb[0].mxu0
    %v6253 = vadd.f32 %v6210, %v6252
    %6254 = vdwg.mxu0
    %v6255 = vmax.f32 %v6161, 0.0
    %v6256 = vmax.f32 %v6163, 0.0
    %v6257 = vmax.f32 %v6247, 0.0
    %v6258 = vmax.f32 %v6249, 0.0
    %v6259 = vmax.f32 %v6165, 0.0
    %v6260 = vmax.f32 %v6167, 0.0
    %v6261 = vmax.f32 %v6251, 0.0
    %v6262 = vmax.f32 %v6253, 0.0
    %v6263 = vpack.c.bf16 %v6259, %v6255
    %v6264 = vpack.c.bf16 %v6260, %v6256
    %v6265 = vpack.c.bf16 %v6261, %v6257
    %v6266 = vpack.c.bf16 %v6262, %v6258
    %v6267 = vld [vmem:[#allocation14] sm:$0xff]
    %v6268 = vld [vmem:[#allocation14 + $0x8] sm:$0xff]
    %v6269 = vld [vmem:[#allocation14 + $0x10] sm:$0xff]
    %v6270 = vld [vmem:[#allocation14 + $0x18] sm:$0xff]
    %v6271 = vld [vmem:[#allocation14 + $0x20] sm:$0xff]
    %v6272 = vld [vmem:[#allocation14 + $0x28] sm:$0xff]
    %v6273 = vld [vmem:[#allocation14 + $0x30] sm:$0xff]
    %v6274 = vld [vmem:[#allocation14 + $0x38] sm:$0xff]
    %v6275 = vld [vmem:[#allocation14 + $0x40] sm:$0xff]
    %v6276 = vld [vmem:[#allocation14 + $0x48] sm:$0xff]
    %v6277 = vld [vmem:[#allocation14 + $0x50] sm:$0xff]
    %v6278 = vld [vmem:[#allocation14 + $0x58] sm:$0xff]
    %v6279 = vld [vmem:[#allocation14 + $0x60] sm:$0xff]
    %v6280 = vld [vmem:[#allocation14 + $0x68] sm:$0xff]
    %v6281 = vld [vmem:[#allocation14 + $0x70] sm:$0xff]
    %v6282 = vld [vmem:[#allocation14 + $0x78] sm:$0xff]
    %v6283 = vld [vmem:[#allocation14 + $0x80] sm:$0xff]
    %v6284 = vld [vmem:[#allocation14 + $0x88] sm:$0xff]
    %v6285 = vld [vmem:[#allocation14 + $0x90] sm:$0xff]
    %v6286 = vld [vmem:[#allocation14 + $0x98] sm:$0xff]
    %v6287 = vld [vmem:[#allocation14 + $0xa0] sm:$0xff]
    %v6288 = vld [vmem:[#allocation14 + $0xa8] sm:$0xff]
    %v6289 = vld [vmem:[#allocation14 + $0xb0] sm:$0xff]
    %v6290 = vld [vmem:[#allocation14 + $0xb8] sm:$0xff]
    %v6291 = vld [vmem:[#allocation14 + $0xc0] sm:$0xff]
    %v6292 = vld [vmem:[#allocation14 + $0xc8] sm:$0xff]
    %v6293 = vld [vmem:[#allocation14 + $0xd0] sm:$0xff]
    %v6294 = vld [vmem:[#allocation14 + $0xd8] sm:$0xff]
    %v6295 = vld [vmem:[#allocation14 + $0xe0] sm:$0xff]
    %v6296 = vld [vmem:[#allocation14 + $0xe8] sm:$0xff]
    %v6297 = vld [vmem:[#allocation14 + $0xf0] sm:$0xff]
    %v6298 = vld [vmem:[#allocation14 + $0xf8] sm:$0xff]
    %v6299 = vld [vmem:[#allocation14 + $0x100] sm:$0xff]
    %v6300 = vld [vmem:[#allocation14 + $0x108] sm:$0xff]
    %v6301 = vld [vmem:[#allocation14 + $0x110] sm:$0xff]
    %v6302 = vld [vmem:[#allocation14 + $0x118] sm:$0xff]
    %v6303 = vld [vmem:[#allocation14 + $0x120] sm:$0xff]
    %v6304 = vld [vmem:[#allocation14 + $0x128] sm:$0xff]
    %v6305 = vld [vmem:[#allocation14 + $0x130] sm:$0xff]
    %v6306 = vld [vmem:[#allocation14 + $0x138] sm:$0xff]
    %v6307 = vld [vmem:[#allocation14 + $0x140] sm:$0xff]
    %v6308 = vld [vmem:[#allocation14 + $0x148] sm:$0xff]
    %v6309 = vld [vmem:[#allocation14 + $0x150] sm:$0xff]
    %v6310 = vld [vmem:[#allocation14 + $0x158] sm:$0xff]
    %v6311 = vld [vmem:[#allocation14 + $0x160] sm:$0xff]
    %v6312 = vld [vmem:[#allocation14 + $0x168] sm:$0xff]
    %v6313 = vld [vmem:[#allocation14 + $0x170] sm:$0xff]
    %v6314 = vld [vmem:[#allocation14 + $0x178] sm:$0xff]
    %v6315 = vld [vmem:[#allocation14 + $0x180] sm:$0xff]
    %v6316 = vld [vmem:[#allocation14 + $0x188] sm:$0xff]
    %v6317 = vld [vmem:[#allocation14 + $0x190] sm:$0xff]
    %v6318 = vld [vmem:[#allocation14 + $0x198] sm:$0xff]
    %v6319 = vld [vmem:[#allocation14 + $0x1a0] sm:$0xff]
    %v6320 = vld [vmem:[#allocation14 + $0x1a8] sm:$0xff]
    %v6321 = vld [vmem:[#allocation14 + $0x1b0] sm:$0xff]
    %v6322 = vld [vmem:[#allocation14 + $0x1b8] sm:$0xff]
    %v6323 = vld [vmem:[#allocation14 + $0x1c0] sm:$0xff]
    %v6324 = vld [vmem:[#allocation14 + $0x1c8] sm:$0xff]
    %v6325 = vld [vmem:[#allocation14 + $0x1d0] sm:$0xff]
    %v6326 = vld [vmem:[#allocation14 + $0x1d8] sm:$0xff]
    %v6327 = vld [vmem:[#allocation14 + $0x1e0] sm:$0xff]
    %v6328 = vld [vmem:[#allocation14 + $0x1e8] sm:$0xff]
    %v6329 = vld [vmem:[#allocation14 + $0x1f0] sm:$0xff]
    %v6330 = vld [vmem:[#allocation14 + $0x1f8] sm:$0xff]
    %v6331 = vld [vmem:[#allocation14 + $0x200] sm:$0xff]
    %v6332 = vld [vmem:[#allocation14 + $0x208] sm:$0xff]
    %v6333 = vld [vmem:[#allocation14 + $0x210] sm:$0xff]
    %v6334 = vld [vmem:[#allocation14 + $0x218] sm:$0xff]
    %v6335 = vld [vmem:[#allocation14 + $0x220] sm:$0xff]
    %v6336 = vld [vmem:[#allocation14 + $0x228] sm:$0xff]
    %v6337 = vld [vmem:[#allocation14 + $0x230] sm:$0xff]
    %v6338 = vld [vmem:[#allocation14 + $0x238] sm:$0xff]
    %v6339 = vld [vmem:[#allocation14 + $0x240] sm:$0xff]
    %v6340 = vld [vmem:[#allocation14 + $0x248] sm:$0xff]
    %v6341 = vld [vmem:[#allocation14 + $0x250] sm:$0xff]
    %v6342 = vld [vmem:[#allocation14 + $0x258] sm:$0xff]
    %v6343 = vld [vmem:[#allocation14 + $0x260] sm:$0xff]
    %v6344 = vld [vmem:[#allocation14 + $0x268] sm:$0xff]
    %v6345 = vld [vmem:[#allocation14 + $0x270] sm:$0xff]
    %v6346 = vld [vmem:[#allocation14 + $0x278] sm:$0xff]
    %v6347 = vld [vmem:[#allocation14 + $0x280] sm:$0xff]
    %v6348 = vld [vmem:[#allocation14 + $0x288] sm:$0xff]
    %v6349 = vld [vmem:[#allocation14 + $0x290] sm:$0xff]
    %v6350 = vld [vmem:[#allocation14 + $0x298] sm:$0xff]
    %v6351 = vld [vmem:[#allocation14 + $0x2a0] sm:$0xff]
    %v6352 = vld [vmem:[#allocation14 + $0x2a8] sm:$0xff]
    %v6353 = vld [vmem:[#allocation14 + $0x2b0] sm:$0xff]
    %v6354 = vld [vmem:[#allocation14 + $0x2b8] sm:$0xff]
    %v6355 = vld [vmem:[#allocation14 + $0x2c0] sm:$0xff]
    %v6356 = vld [vmem:[#allocation14 + $0x2c8] sm:$0xff]
    %v6357 = vld [vmem:[#allocation14 + $0x2d0] sm:$0xff]
    %v6358 = vld [vmem:[#allocation14 + $0x2d8] sm:$0xff]
    %v6359 = vld [vmem:[#allocation14 + $0x2e0] sm:$0xff]
    %v6360 = vld [vmem:[#allocation14 + $0x2e8] sm:$0xff]
    %v6361 = vld [vmem:[#allocation14 + $0x2f0] sm:$0xff]
    %v6362 = vld [vmem:[#allocation14 + $0x2f8] sm:$0xff]
    %v6363 = vld [vmem:[#allocation14 + $0x300] sm:$0xff]
    %v6364 = vld [vmem:[#allocation14 + $0x308] sm:$0xff]
    %v6365 = vld [vmem:[#allocation14 + $0x310] sm:$0xff]
    %v6366 = vld [vmem:[#allocation14 + $0x318] sm:$0xff]
    %v6367 = vld [vmem:[#allocation14 + $0x320] sm:$0xff]
    %v6368 = vld [vmem:[#allocation14 + $0x328] sm:$0xff]
    %v6369 = vld [vmem:[#allocation14 + $0x330] sm:$0xff]
    %v6370 = vld [vmem:[#allocation14 + $0x338] sm:$0xff]
    %v6371 = vld [vmem:[#allocation14 + $0x340] sm:$0xff]
    %v6372 = vld [vmem:[#allocation14 + $0x348] sm:$0xff]
    %v6373 = vld [vmem:[#allocation14 + $0x350] sm:$0xff]
    %v6374 = vld [vmem:[#allocation14 + $0x358] sm:$0xff]
    %v6375 = vld [vmem:[#allocation14 + $0x360] sm:$0xff]
    %v6376 = vld [vmem:[#allocation14 + $0x368] sm:$0xff]
    %v6377 = vld [vmem:[#allocation14 + $0x370] sm:$0xff]
    %v6378 = vld [vmem:[#allocation14 + $0x378] sm:$0xff]
    %v6379 = vld [vmem:[#allocation14 + $0x380] sm:$0xff]
    %v6380 = vld [vmem:[#allocation14 + $0x388] sm:$0xff]
    %v6381 = vld [vmem:[#allocation14 + $0x390] sm:$0xff]
    %v6382 = vld [vmem:[#allocation14 + $0x398] sm:$0xff]
    %v6383 = vld [vmem:[#allocation14 + $0x3a0] sm:$0xff]
    %v6384 = vld [vmem:[#allocation14 + $0x3a8] sm:$0xff]
    %v6385 = vld [vmem:[#allocation14 + $0x3b0] sm:$0xff]
    %v6386 = vld [vmem:[#allocation14 + $0x3b8] sm:$0xff]
    %v6387 = vld [vmem:[#allocation14 + $0x3c0] sm:$0xff]
    %v6388 = vld [vmem:[#allocation14 + $0x3c8] sm:$0xff]
    %v6389 = vld [vmem:[#allocation14 + $0x3d0] sm:$0xff]
    %v6390 = vld [vmem:[#allocation14 + $0x3d8] sm:$0xff]
    %v6391 = vld [vmem:[#allocation14 + $0x3e0] sm:$0xff]
    %v6392 = vld [vmem:[#allocation14 + $0x3e8] sm:$0xff]
    %v6393 = vld [vmem:[#allocation14 + $0x3f0] sm:$0xff]
    %v6394 = vld [vmem:[#allocation14 + $0x3f8] sm:$0xff]
    %v6395 = vld [vmem:[#allocation16] sm:$0xf]
    %v6396 = vunpack.c.l.bf16 %v6395
    %v6398 = vlaneseq
    %v6399 = vshrl.u32 %v6398, 7
    %v6400 = vsub.s32 0, %v6399
    %v6401 = vrot.slane %v6396, %v6400
    %v6402 = vlaneseq
    %v6403 = vshrl.u32 %v6402, 7
    %v6404 = vsub.s32 2, %v6403
    %v6405 = vrot.slane %v6396, %v6404
    %v6406 = vlaneseq
    %v6407 = vshrl.u32 %v6406, 7
    %v6408 = vsub.s32 4, %v6407
    %v6409 = vrot.slane %v6396, %v6408
    %v6410 = vlaneseq
    %v6411 = vshrl.u32 %v6410, 7
    %v6412 = vsub.s32 6, %v6411
    %v6413 = vrot.slane %v6396, %v6412
    %v6418 = vlaneseq
    %v6419 = vshrl.u32 %v6418, 7
    %v6420 = vsub.s32 0, %v6419
    %v6421 = vrot.slane %v6401, %v6420
    %v6422 = vlaneseq
    %v6423 = vshrl.u32 %v6422, 7
    %v6424 = vsub.s32 0, %v6423
    %v6425 = vrot.slane %v6405, %v6424
    %v6426 = vlaneseq
    %v6427 = vshrl.u32 %v6426, 7
    %v6428 = vsub.s32 0, %v6427
    %v6429 = vrot.slane %v6409, %v6428
    %v6430 = vlaneseq
    %v6431 = vshrl.u32 %v6430, 7
    %v6432 = vsub.s32 0, %v6431
    %v6433 = vrot.slane %v6413, %v6432
    %v6562 = vunpack.c.l.b16 %v6267
    %v6563 = vunpack.c.h.b16 %v6267
    %v6564 = vunpack.c.l.b16 %v6268
    %v6565 = vunpack.c.h.b16 %v6268
    %v6566 = vunpack.c.l.b16 %v6269
    %v6567 = vunpack.c.h.b16 %v6269
    %v6568 = vunpack.c.l.b16 %v6270
    %v6569 = vunpack.c.h.b16 %v6270
    %v6570 = vunpack.c.l.b16 %v6271
    %v6571 = vunpack.c.h.b16 %v6271
    %v6572 = vunpack.c.l.b16 %v6272
    %v6573 = vunpack.c.h.b16 %v6272
    %v6574 = vunpack.c.l.b16 %v6273
    %v6575 = vunpack.c.h.b16 %v6273
    %v6576 = vunpack.c.l.b16 %v6274
    %v6577 = vunpack.c.h.b16 %v6274
    %v6578 = vunpack.c.l.b16 %v6275
    %v6579 = vunpack.c.h.b16 %v6275
    %v6580 = vunpack.c.l.b16 %v6276
    %v6581 = vunpack.c.h.b16 %v6276
    %v6582 = vunpack.c.l.b16 %v6277
    %v6583 = vunpack.c.h.b16 %v6277
    %v6584 = vunpack.c.l.b16 %v6278
    %v6585 = vunpack.c.h.b16 %v6278
    %v6586 = vunpack.c.l.b16 %v6279
    %v6587 = vunpack.c.h.b16 %v6279
    %v6588 = vunpack.c.l.b16 %v6280
    %v6589 = vunpack.c.h.b16 %v6280
    %v6590 = vunpack.c.l.b16 %v6281
    %v6591 = vunpack.c.h.b16 %v6281
    %v6592 = vunpack.c.l.b16 %v6282
    %v6593 = vunpack.c.h.b16 %v6282
    %v6594 = vunpack.c.l.b16 %v6283
    %v6595 = vunpack.c.h.b16 %v6283
    %v6596 = vunpack.c.l.b16 %v6284
    %v6597 = vunpack.c.h.b16 %v6284
    %v6598 = vunpack.c.l.b16 %v6285
    %v6599 = vunpack.c.h.b16 %v6285
    %v6600 = vunpack.c.l.b16 %v6286
    %v6601 = vunpack.c.h.b16 %v6286
    %v6602 = vunpack.c.l.b16 %v6287
    %v6603 = vunpack.c.h.b16 %v6287
    %v6604 = vunpack.c.l.b16 %v6288
    %v6605 = vunpack.c.h.b16 %v6288
    %v6606 = vunpack.c.l.b16 %v6289
    %v6607 = vunpack.c.h.b16 %v6289
    %v6608 = vunpack.c.l.b16 %v6290
    %v6609 = vunpack.c.h.b16 %v6290
    %v6610 = vunpack.c.l.b16 %v6291
    %v6611 = vunpack.c.h.b16 %v6291
    %v6612 = vunpack.c.l.b16 %v6292
    %v6613 = vunpack.c.h.b16 %v6292
    %v6614 = vunpack.c.l.b16 %v6293
    %v6615 = vunpack.c.h.b16 %v6293
    %v6616 = vunpack.c.l.b16 %v6294
    %v6617 = vunpack.c.h.b16 %v6294
    %v6618 = vunpack.c.l.b16 %v6295
    %v6619 = vunpack.c.h.b16 %v6295
    %v6620 = vunpack.c.l.b16 %v6296
    %v6621 = vunpack.c.h.b16 %v6296
    %v6622 = vunpack.c.l.b16 %v6297
    %v6623 = vunpack.c.h.b16 %v6297
    %v6624 = vunpack.c.l.b16 %v6298
    %v6625 = vunpack.c.h.b16 %v6298
    %v6626 = vunpack.c.l.b16 %v6299
    %v6627 = vunpack.c.h.b16 %v6299
    %v6628 = vunpack.c.l.b16 %v6300
    %v6629 = vunpack.c.h.b16 %v6300
    %v6630 = vunpack.c.l.b16 %v6301
    %v6631 = vunpack.c.h.b16 %v6301
    %v6632 = vunpack.c.l.b16 %v6302
    %v6633 = vunpack.c.h.b16 %v6302
    %v6634 = vunpack.c.l.b16 %v6303
    %v6635 = vunpack.c.h.b16 %v6303
    %v6636 = vunpack.c.l.b16 %v6304
    %v6637 = vunpack.c.h.b16 %v6304
    %v6638 = vunpack.c.l.b16 %v6305
    %v6639 = vunpack.c.h.b16 %v6305
    %v6640 = vunpack.c.l.b16 %v6306
    %v6641 = vunpack.c.h.b16 %v6306
    %v6642 = vunpack.c.l.b16 %v6307
    %v6643 = vunpack.c.h.b16 %v6307
    %v6644 = vunpack.c.l.b16 %v6308
    %v6645 = vunpack.c.h.b16 %v6308
    %v6646 = vunpack.c.l.b16 %v6309
    %v6647 = vunpack.c.h.b16 %v6309
    %v6648 = vunpack.c.l.b16 %v6310
    %v6649 = vunpack.c.h.b16 %v6310
    %v6650 = vunpack.c.l.b16 %v6311
    %v6651 = vunpack.c.h.b16 %v6311
    %v6652 = vunpack.c.l.b16 %v6312
    %v6653 = vunpack.c.h.b16 %v6312
    %v6654 = vunpack.c.l.b16 %v6313
    %v6655 = vunpack.c.h.b16 %v6313
    %v6656 = vunpack.c.l.b16 %v6314
    %v6657 = vunpack.c.h.b16 %v6314
    %v6658 = vunpack.c.l.b16 %v6315
    %v6659 = vunpack.c.h.b16 %v6315
    %v6660 = vunpack.c.l.b16 %v6316
    %v6661 = vunpack.c.h.b16 %v6316
    %v6662 = vunpack.c.l.b16 %v6317
    %v6663 = vunpack.c.h.b16 %v6317
    %v6664 = vunpack.c.l.b16 %v6318
    %v6665 = vunpack.c.h.b16 %v6318
    %v6666 = vunpack.c.l.b16 %v6319
    %v6667 = vunpack.c.h.b16 %v6319
    %v6668 = vunpack.c.l.b16 %v6320
    %v6669 = vunpack.c.h.b16 %v6320
    %v6670 = vunpack.c.l.b16 %v6321
    %v6671 = vunpack.c.h.b16 %v6321
    %v6672 = vunpack.c.l.b16 %v6322
    %v6673 = vunpack.c.h.b16 %v6322
    %v6674 = vunpack.c.l.b16 %v6323
    %v6675 = vunpack.c.h.b16 %v6323
    %v6676 = vunpack.c.l.b16 %v6324
    %v6677 = vunpack.c.h.b16 %v6324
    %v6678 = vunpack.c.l.b16 %v6325
    %v6679 = vunpack.c.h.b16 %v6325
    %v6680 = vunpack.c.l.b16 %v6326
    %v6681 = vunpack.c.h.b16 %v6326
    %v6682 = vunpack.c.l.b16 %v6327
    %v6683 = vunpack.c.h.b16 %v6327
    %v6684 = vunpack.c.l.b16 %v6328
    %v6685 = vunpack.c.h.b16 %v6328
    %v6686 = vunpack.c.l.b16 %v6329
    %v6687 = vunpack.c.h.b16 %v6329
    %v6688 = vunpack.c.l.b16 %v6330
    %v6689 = vunpack.c.h.b16 %v6330
    %v6690 = vunpack.c.l.b16 %v6331
    %v6691 = vunpack.c.h.b16 %v6331
    %v6692 = vunpack.c.l.b16 %v6332
    %v6693 = vunpack.c.h.b16 %v6332
    %v6694 = vunpack.c.l.b16 %v6333
    %v6695 = vunpack.c.h.b16 %v6333
    %v6696 = vunpack.c.l.b16 %v6334
    %v6697 = vunpack.c.h.b16 %v6334
    %v6698 = vunpack.c.l.b16 %v6335
    %v6699 = vunpack.c.h.b16 %v6335
    %v6700 = vunpack.c.l.b16 %v6336
    %v6701 = vunpack.c.h.b16 %v6336
    %v6702 = vunpack.c.l.b16 %v6337
    %v6703 = vunpack.c.h.b16 %v6337
    %v6704 = vunpack.c.l.b16 %v6338
    %v6705 = vunpack.c.h.b16 %v6338
    %v6706 = vunpack.c.l.b16 %v6339
    %v6707 = vunpack.c.h.b16 %v6339
    %v6708 = vunpack.c.l.b16 %v6340
    %v6709 = vunpack.c.h.b16 %v6340
    %v6710 = vunpack.c.l.b16 %v6341
    %v6711 = vunpack.c.h.b16 %v6341
    %v6712 = vunpack.c.l.b16 %v6342
    %v6713 = vunpack.c.h.b16 %v6342
    %v6714 = vunpack.c.l.b16 %v6343
    %v6715 = vunpack.c.h.b16 %v6343
    %v6716 = vunpack.c.l.b16 %v6344
    %v6717 = vunpack.c.h.b16 %v6344
    %v6718 = vunpack.c.l.b16 %v6345
    %v6719 = vunpack.c.h.b16 %v6345
    %v6720 = vunpack.c.l.b16 %v6346
    %v6721 = vunpack.c.h.b16 %v6346
    %v6722 = vunpack.c.l.b16 %v6347
    %v6723 = vunpack.c.h.b16 %v6347
    %v6724 = vunpack.c.l.b16 %v6348
    %v6725 = vunpack.c.h.b16 %v6348
    %v6726 = vunpack.c.l.b16 %v6349
    %v6727 = vunpack.c.h.b16 %v6349
    %v6728 = vunpack.c.l.b16 %v6350
    %v6729 = vunpack.c.h.b16 %v6350
    %v6730 = vunpack.c.l.b16 %v6351
    %v6731 = vunpack.c.h.b16 %v6351
    %v6732 = vunpack.c.l.b16 %v6352
    %v6733 = vunpack.c.h.b16 %v6352
    %v6734 = vunpack.c.l.b16 %v6353
    %v6735 = vunpack.c.h.b16 %v6353
    %v6736 = vunpack.c.l.b16 %v6354
    %v6737 = vunpack.c.h.b16 %v6354
    %v6738 = vunpack.c.l.b16 %v6355
    %v6739 = vunpack.c.h.b16 %v6355
    %v6740 = vunpack.c.l.b16 %v6356
    %v6741 = vunpack.c.h.b16 %v6356
    %v6742 = vunpack.c.l.b16 %v6357
    %v6743 = vunpack.c.h.b16 %v6357
    %v6744 = vunpack.c.l.b16 %v6358
    %v6745 = vunpack.c.h.b16 %v6358
    %v6746 = vunpack.c.l.b16 %v6359
    %v6747 = vunpack.c.h.b16 %v6359
    %v6748 = vunpack.c.l.b16 %v6360
    %v6749 = vunpack.c.h.b16 %v6360
    %v6750 = vunpack.c.l.b16 %v6361
    %v6751 = vunpack.c.h.b16 %v6361
    %v6752 = vunpack.c.l.b16 %v6362
    %v6753 = vunpack.c.h.b16 %v6362
    %v6754 = vunpack.c.l.b16 %v6363
    %v6755 = vunpack.c.h.b16 %v6363
    %v6756 = vunpack.c.l.b16 %v6364
    %v6757 = vunpack.c.h.b16 %v6364
    %v6758 = vunpack.c.l.b16 %v6365
    %v6759 = vunpack.c.h.b16 %v6365
    %v6760 = vunpack.c.l.b16 %v6366
    %v6761 = vunpack.c.h.b16 %v6366
    %v6762 = vunpack.c.l.b16 %v6367
    %v6763 = vunpack.c.h.b16 %v6367
    %v6764 = vunpack.c.l.b16 %v6368
    %v6765 = vunpack.c.h.b16 %v6368
    %v6766 = vunpack.c.l.b16 %v6369
    %v6767 = vunpack.c.h.b16 %v6369
    %v6768 = vunpack.c.l.b16 %v6370
    %v6769 = vunpack.c.h.b16 %v6370
    %v6770 = vunpack.c.l.b16 %v6371
    %v6771 = vunpack.c.h.b16 %v6371
    %v6772 = vunpack.c.l.b16 %v6372
    %v6773 = vunpack.c.h.b16 %v6372
    %v6774 = vunpack.c.l.b16 %v6373
    %v6775 = vunpack.c.h.b16 %v6373
    %v6776 = vunpack.c.l.b16 %v6374
    %v6777 = vunpack.c.h.b16 %v6374
    %v6778 = vunpack.c.l.b16 %v6375
    %v6779 = vunpack.c.h.b16 %v6375
    %v6780 = vunpack.c.l.b16 %v6376
    %v6781 = vunpack.c.h.b16 %v6376
    %v6782 = vunpack.c.l.b16 %v6377
    %v6783 = vunpack.c.h.b16 %v6377
    %v6784 = vunpack.c.l.b16 %v6378
    %v6785 = vunpack.c.h.b16 %v6378
    %v6786 = vunpack.c.l.b16 %v6379
    %v6787 = vunpack.c.h.b16 %v6379
    %v6788 = vunpack.c.l.b16 %v6380
    %v6789 = vunpack.c.h.b16 %v6380
    %v6790 = vunpack.c.l.b16 %v6381
    %v6791 = vunpack.c.h.b16 %v6381
    %v6792 = vunpack.c.l.b16 %v6382
    %v6793 = vunpack.c.h.b16 %v6382
    %v6794 = vunpack.c.l.b16 %v6383
    %v6795 = vunpack.c.h.b16 %v6383
    %v6796 = vunpack.c.l.b16 %v6384
    %v6797 = vunpack.c.h.b16 %v6384
    %v6798 = vunpack.c.l.b16 %v6385
    %v6799 = vunpack.c.h.b16 %v6385
    %v6800 = vunpack.c.l.b16 %v6386
    %v6801 = vunpack.c.h.b16 %v6386
    %v6802 = vunpack.c.l.b16 %v6387
    %v6803 = vunpack.c.h.b16 %v6387
    %v6804 = vunpack.c.l.b16 %v6388
    %v6805 = vunpack.c.h.b16 %v6388
    %v6806 = vunpack.c.l.b16 %v6389
    %v6807 = vunpack.c.h.b16 %v6389
    %v6808 = vunpack.c.l.b16 %v6390
    %v6809 = vunpack.c.h.b16 %v6390
    %v6810 = vunpack.c.l.b16 %v6391
    %v6811 = vunpack.c.h.b16 %v6391
    %v6812 = vunpack.c.l.b16 %v6392
    %v6813 = vunpack.c.h.b16 %v6392
    %v6814 = vunpack.c.l.b16 %v6393
    %v6815 = vunpack.c.h.b16 %v6393
    %v6816 = vunpack.c.l.b16 %v6394
    %v6817 = vunpack.c.h.b16 %v6394
    %v6818 = vpack.c.b16 %v6566, %v6562
    %v6819 = vpack.c.b16 %v6567, %v6563
    %v6820 = vpack.c.b16 %v6568, %v6564
    %v6821 = vpack.c.b16 %v6569, %v6565
    %v6822 = vpack.c.b16 %v6574, %v6570
    %v6823 = vpack.c.b16 %v6575, %v6571
    %v6824 = vpack.c.b16 %v6576, %v6572
    %v6825 = vpack.c.b16 %v6577, %v6573
    %v6826 = vpack.c.b16 %v6582, %v6578
    %v6827 = vpack.c.b16 %v6583, %v6579
    %v6828 = vpack.c.b16 %v6584, %v6580
    %v6829 = vpack.c.b16 %v6585, %v6581
    %v6830 = vpack.c.b16 %v6590, %v6586
    %v6831 = vpack.c.b16 %v6591, %v6587
    %v6832 = vpack.c.b16 %v6592, %v6588
    %v6833 = vpack.c.b16 %v6593, %v6589
    %v6834 = vpack.c.b16 %v6598, %v6594
    %v6835 = vpack.c.b16 %v6599, %v6595
    %v6836 = vpack.c.b16 %v6600, %v6596
    %v6837 = vpack.c.b16 %v6601, %v6597
    %v6838 = vpack.c.b16 %v6606, %v6602
    %v6839 = vpack.c.b16 %v6607, %v6603
    %v6840 = vpack.c.b16 %v6608, %v6604
    %v6841 = vpack.c.b16 %v6609, %v6605
    %v6842 = vpack.c.b16 %v6614, %v6610
    %v6843 = vpack.c.b16 %v6615, %v6611
    %v6844 = vpack.c.b16 %v6616, %v6612
    %v6845 = vpack.c.b16 %v6617, %v6613
    %v6846 = vpack.c.b16 %v6622, %v6618
    %v6847 = vpack.c.b16 %v6623, %v6619
    %v6848 = vpack.c.b16 %v6624, %v6620
    %v6849 = vpack.c.b16 %v6625, %v6621
    %v6850 = vpack.c.b16 %v6630, %v6626
    %v6851 = vpack.c.b16 %v6631, %v6627
    %v6852 = vpack.c.b16 %v6632, %v6628
    %v6853 = vpack.c.b16 %v6633, %v6629
    %v6854 = vpack.c.b16 %v6638, %v6634
    %v6855 = vpack.c.b16 %v6639, %v6635
    %v6856 = vpack.c.b16 %v6640, %v6636
    %v6857 = vpack.c.b16 %v6641, %v6637
    %v6858 = vpack.c.b16 %v6646, %v6642
    %v6859 = vpack.c.b16 %v6647, %v6643
    %v6860 = vpack.c.b16 %v6648, %v6644
    %v6861 = vpack.c.b16 %v6649, %v6645
    %v6862 = vpack.c.b16 %v6654, %v6650
    %v6863 = vpack.c.b16 %v6655, %v6651
    %v6864 = vpack.c.b16 %v6656, %v6652
    %v6865 = vpack.c.b16 %v6657, %v6653
    %v6866 = vpack.c.b16 %v6662, %v6658
    %v6867 = vpack.c.b16 %v6663, %v6659
    %v6868 = vpack.c.b16 %v6664, %v6660
    %v6869 = vpack.c.b16 %v6665, %v6661
    %v6870 = vpack.c.b16 %v6670, %v6666
    %v6871 = vpack.c.b16 %v6671, %v6667
    %v6872 = vpack.c.b16 %v6672, %v6668
    %v6873 = vpack.c.b16 %v6673, %v6669
    %v6874 = vpack.c.b16 %v6678, %v6674
    %v6875 = vpack.c.b16 %v6679, %v6675
    %v6876 = vpack.c.b16 %v6680, %v6676
    %v6877 = vpack.c.b16 %v6681, %v6677
    %v6878 = vpack.c.b16 %v6686, %v6682
    %v6879 = vpack.c.b16 %v6687, %v6683
    %v6880 = vpack.c.b16 %v6688, %v6684
    %v6881 = vpack.c.b16 %v6689, %v6685
    %v6882 = vpack.c.b16 %v6694, %v6690
    %v6883 = vpack.c.b16 %v6695, %v6691
    %v6884 = vpack.c.b16 %v6696, %v6692
    %v6885 = vpack.c.b16 %v6697, %v6693
    %v6886 = vpack.c.b16 %v6702, %v6698
    %v6887 = vpack.c.b16 %v6703, %v6699
    %v6888 = vpack.c.b16 %v6704, %v6700
    %v6889 = vpack.c.b16 %v6705, %v6701
    %v6890 = vpack.c.b16 %v6710, %v6706
    %v6891 = vpack.c.b16 %v6711, %v6707
    %v6892 = vpack.c.b16 %v6712, %v6708
    %v6893 = vpack.c.b16 %v6713, %v6709
    %v6894 = vpack.c.b16 %v6718, %v6714
    %v6895 = vpack.c.b16 %v6719, %v6715
    %v6896 = vpack.c.b16 %v6720, %v6716
    %v6897 = vpack.c.b16 %v6721, %v6717
    %v6898 = vpack.c.b16 %v6726, %v6722
    %v6899 = vpack.c.b16 %v6727, %v6723
    %v6900 = vpack.c.b16 %v6728, %v6724
    %v6901 = vpack.c.b16 %v6729, %v6725
    %v6902 = vpack.c.b16 %v6734, %v6730
    %v6903 = vpack.c.b16 %v6735, %v6731
    %v6904 = vpack.c.b16 %v6736, %v6732
    %v6905 = vpack.c.b16 %v6737, %v6733
    %v6906 = vpack.c.b16 %v6742, %v6738
    %v6907 = vpack.c.b16 %v6743, %v6739
    %v6908 = vpack.c.b16 %v6744, %v6740
    %v6909 = vpack.c.b16 %v6745, %v6741
    %v6910 = vpack.c.b16 %v6750, %v6746
    %v6911 = vpack.c.b16 %v6751, %v6747
    %v6912 = vpack.c.b16 %v6752, %v6748
    %v6913 = vpack.c.b16 %v6753, %v6749
    %v6914 = vpack.c.b16 %v6758, %v6754
    %v6915 = vpack.c.b16 %v6759, %v6755
    %v6916 = vpack.c.b16 %v6760, %v6756
    %v6917 = vpack.c.b16 %v6761, %v6757
    %v6918 = vpack.c.b16 %v6766, %v6762
    %v6919 = vpack.c.b16 %v6767, %v6763
    %v6920 = vpack.c.b16 %v6768, %v6764
    %v6921 = vpack.c.b16 %v6769, %v6765
    %v6922 = vpack.c.b16 %v6774, %v6770
    %v6923 = vpack.c.b16 %v6775, %v6771
    %v6924 = vpack.c.b16 %v6776, %v6772
    %v6925 = vpack.c.b16 %v6777, %v6773
    %v6926 = vpack.c.b16 %v6782, %v6778
    %v6927 = vpack.c.b16 %v6783, %v6779
    %v6928 = vpack.c.b16 %v6784, %v6780
    %v6929 = vpack.c.b16 %v6785, %v6781
    %v6930 = vpack.c.b16 %v6790, %v6786
    %v6931 = vpack.c.b16 %v6791, %v6787
    %v6932 = vpack.c.b16 %v6792, %v6788
    %v6933 = vpack.c.b16 %v6793, %v6789
    %v6934 = vpack.c.b16 %v6798, %v6794
    %v6935 = vpack.c.b16 %v6799, %v6795
    %v6936 = vpack.c.b16 %v6800, %v6796
    %v6937 = vpack.c.b16 %v6801, %v6797
    %v6938 = vpack.c.b16 %v6806, %v6802
    %v6939 = vpack.c.b16 %v6807, %v6803
    %v6940 = vpack.c.b16 %v6808, %v6804
    %v6941 = vpack.c.b16 %v6809, %v6805
    %v6942 = vpack.c.b16 %v6814, %v6810
    %v6943 = vpack.c.b16 %v6815, %v6811
    %v6944 = vpack.c.b16 %v6816, %v6812
    %v6945 = vpack.c.b16 %v6817, %v6813
    %7074 = vmatprep.subr.bf16.mxu0 %v6819
    %7075 = vmatpush1.bf16.msra.mxu0 %v6818
    %7076 = vmatprep.subr.bf16.mxu0 %v6823
    %7077 = vmatpush1.bf16.msra.mxu0 %v6822
    %7078 = vmatprep.subr.bf16.mxu0 %v6827
    %7079 = vmatpush1.bf16.msra.mxu0 %v6826
    %7080 = vmatprep.subr.bf16.mxu0 %v6831
    %7081 = vmatpush1.bf16.msra.mxu0 %v6830
    %7082 = vmatprep.subr.bf16.mxu0 %v6835
    %7083 = vmatpush1.bf16.msra.mxu0 %v6834
    %7084 = vmatprep.subr.bf16.mxu0 %v6839
    %7085 = vmatpush1.bf16.msra.mxu0 %v6838
    %7086 = vmatprep.subr.bf16.mxu0 %v6843
    %7087 = vmatpush1.bf16.msra.mxu0 %v6842
    %7088 = vmatprep.subr.bf16.mxu0 %v6847
    %7089 = vmatpush1.bf16.msra.mxu0 %v6846
    %7090 = vmatprep.subr.bf16.mxu0 %v6851
    %7091 = vmatpush1.bf16.msra.mxu0 %v6850
    %7092 = vmatprep.subr.bf16.mxu0 %v6855
    %7093 = vmatpush1.bf16.msra.mxu0 %v6854
    %7094 = vmatprep.subr.bf16.mxu0 %v6859
    %7095 = vmatpush1.bf16.msra.mxu0 %v6858
    %7096 = vmatprep.subr.bf16.mxu0 %v6863
    %7097 = vmatpush1.bf16.msra.mxu0 %v6862
    %7098 = vmatprep.subr.bf16.mxu0 %v6867
    %7099 = vmatpush1.bf16.msra.mxu0 %v6866
    %7100 = vmatprep.subr.bf16.mxu0 %v6871
    %7101 = vmatpush1.bf16.msra.mxu0 %v6870
    %7102 = vmatprep.subr.bf16.mxu0 %v6875
    %7103 = vmatpush1.bf16.msra.mxu0 %v6874
    %7104 = vmatprep.subr.bf16.mxu0 %v6879
    %7105 = vmatpush1.bf16.msra.mxu0 %v6878
    %7106 = vmatprep.mubr.bf16.mxu0 %v6264
    %7107 = vmatmul.mubr.bf16.gmra.mrb[0].mxu0 %v6263
    %v7108 = vpop.f32.mrb[0].mxu0
    %v7109 = vadd.f32 %v6421, %v7108
    %v7110 = vpop.f32.mrb[0].mxu0
    %v7111 = vadd.f32 %v6425, %v7110
    %v7112 = vpop.f32.mrb[0].mxu0
    %v7113 = vadd.f32 %v6421, %v7112
    %v7114 = vpop.f32.mrb[0].mxu0
    %v7115 = vadd.f32 %v6425, %v7114
    %7116 = vdwg.mxu0
    %7117 = vmatprep.subr.bf16.mxu0 %v6883
    %7118 = vmatpush1.bf16.msra.mxu0 %v6882
    %7119 = vmatprep.subr.bf16.mxu0 %v6887
    %7120 = vmatpush1.bf16.msra.mxu0 %v6886
    %7121 = vmatprep.subr.bf16.mxu0 %v6891
    %7122 = vmatpush1.bf16.msra.mxu0 %v6890
    %7123 = vmatprep.subr.bf16.mxu0 %v6895
    %7124 = vmatpush1.bf16.msra.mxu0 %v6894
    %7125 = vmatprep.subr.bf16.mxu0 %v6899
    %7126 = vmatpush1.bf16.msra.mxu0 %v6898
    %7127 = vmatprep.subr.bf16.mxu0 %v6903
    %7128 = vmatpush1.bf16.msra.mxu0 %v6902
    %7129 = vmatprep.subr.bf16.mxu0 %v6907
    %7130 = vmatpush1.bf16.msra.mxu0 %v6906
    %7131 = vmatprep.subr.bf16.mxu0 %v6911
    %7132 = vmatpush1.bf16.msra.mxu0 %v6910
    %7133 = vmatprep.subr.bf16.mxu0 %v6915
    %7134 = vmatpush1.bf16.msra.mxu0 %v6914
    %7135 = vmatprep.subr.bf16.mxu0 %v6919
    %7136 = vmatpush1.bf16.msra.mxu0 %v6918
    %7137 = vmatprep.subr.bf16.mxu0 %v6923
    %7138 = vmatpush1.bf16.msra.mxu0 %v6922
    %7139 = vmatprep.subr.bf16.mxu0 %v6927
    %7140 = vmatpush1.bf16.msra.mxu0 %v6926
    %7141 = vmatprep.subr.bf16.mxu0 %v6931
    %7142 = vmatpush1.bf16.msra.mxu0 %v6930
    %7143 = vmatprep.subr.bf16.mxu0 %v6935
    %7144 = vmatpush1.bf16.msra.mxu0 %v6934
    %7145 = vmatprep.subr.bf16.mxu0 %v6939
    %7146 = vmatpush1.bf16.msra.mxu0 %v6938
    %7147 = vmatprep.subr.bf16.mxu0 %v6943
    %7148 = vmatpush1.bf16.msra.mxu0 %v6942
    %7149 = vmatprep.mubr.bf16.mxu0 %v6266
    %7150 = vmatmul.mubr.bf16.gmra.mrb[0].mxu0 %v6265
    %v7151 = vpop.f32.mrb[0].mxu0
    %v7152 = vadd.f32 %v7109, %v7151
    %v7153 = vpop.f32.mrb[0].mxu0
    %v7154 = vadd.f32 %v7111, %v7153
    %v7155 = vpop.f32.mrb[0].mxu0
    %v7156 = vadd.f32 %v7113, %v7155
    %v7157 = vpop.f32.mrb[0].mxu0
    %v7158 = vadd.f32 %v7115, %v7157
    %7159 = vdwg.mxu0
    %7160 = vmatprep.subr.bf16.mxu0 %v6821
    %7161 = vmatpush1.bf16.msra.mxu0 %v6820
    %7162 = vmatprep.subr.bf16.mxu0 %v6825
    %7163 = vmatpush1.bf16.msra.mxu0 %v6824
    %7164 = vmatprep.subr.bf16.mxu0 %v6829
    %7165 = vmatpush1.bf16.msra.mxu0 %v6828
    %7166 = vmatprep.subr.bf16.mxu0 %v6833
    %7167 = vmatpush1.bf16.msra.mxu0 %v6832
    %7168 = vmatprep.subr.bf16.mxu0 %v6837
    %7169 = vmatpush1.bf16.msra.mxu0 %v6836
    %7170 = vmatprep.subr.bf16.mxu0 %v6841
    %7171 = vmatpush1.bf16.msra.mxu0 %v6840
    %7172 = vmatprep.subr.bf16.mxu0 %v6845
    %7173 = vmatpush1.bf16.msra.mxu0 %v6844
    %7174 = vmatprep.subr.bf16.mxu0 %v6849
    %7175 = vmatpush1.bf16.msra.mxu0 %v6848
    %7176 = vmatprep.subr.bf16.mxu0 %v6853
    %7177 = vmatpush1.bf16.msra.mxu0 %v6852
    %7178 = vmatprep.subr.bf16.mxu0 %v6857
    %7179 = vmatpush1.bf16.msra.mxu0 %v6856
    %7180 = vmatprep.subr.bf16.mxu0 %v6861
    %7181 = vmatpush1.bf16.msra.mxu0 %v6860
    %7182 = vmatprep.subr.bf16.mxu0 %v6865
    %7183 = vmatpush1.bf16.msra.mxu0 %v6864
    %7184 = vmatprep.subr.bf16.mxu0 %v6869
    %7185 = vmatpush1.bf16.msra.mxu0 %v6868
    %7186 = vmatprep.subr.bf16.mxu0 %v6873
    %7187 = vmatpush1.bf16.msra.mxu0 %v6872
    %7188 = vmatprep.subr.bf16.mxu0 %v6877
    %7189 = vmatpush1.bf16.msra.mxu0 %v6876
    %7190 = vmatprep.subr.bf16.mxu0 %v6881
    %7191 = vmatpush1.bf16.msra.mxu0 %v6880
    %7192 = vmatprep.mubr.bf16.mxu0 %v6264
    %7193 = vmatmul.mubr.bf16.gmra.mrb[0].mxu0 %v6263
    %v7194 = vpop.f32.mrb[0].mxu0
    %v7195 = vadd.f32 %v6429, %v7194
    %v7196 = vpop.f32.mrb[0].mxu0
    %v7197 = vadd.f32 %v6433, %v7196
    %v7198 = vpop.f32.mrb[0].mxu0
    %v7199 = vadd.f32 %v6429, %v7198
    %v7200 = vpop.f32.mrb[0].mxu0
    %v7201 = vadd.f32 %v6433, %v7200
    %7202 = vdwg.mxu0
    %7203 = vmatprep.subr.bf16.mxu0 %v6885
    %7204 = vmatpush1.bf16.msra.mxu0 %v6884
    %7205 = vmatprep.subr.bf16.mxu0 %v6889
    %7206 = vmatpush1.bf16.msra.mxu0 %v6888
    %7207 = vmatprep.subr.bf16.mxu0 %v6893
    %7208 = vmatpush1.bf16.msra.mxu0 %v6892
    %7209 = vmatprep.subr.bf16.mxu0 %v6897
    %7210 = vmatpush1.bf16.msra.mxu0 %v6896
    %7211 = vmatprep.subr.bf16.mxu0 %v6901
    %7212 = vmatpush1.bf16.msra.mxu0 %v6900
    %7213 = vmatprep.subr.bf16.mxu0 %v6905
    %7214 = vmatpush1.bf16.msra.mxu0 %v6904
    %7215 = vmatprep.subr.bf16.mxu0 %v6909
    %7216 = vmatpush1.bf16.msra.mxu0 %v6908
    %7217 = vmatprep.subr.bf16.mxu0 %v6913
    %7218 = vmatpush1.bf16.msra.mxu0 %v6912
    %7219 = vmatprep.subr.bf16.mxu0 %v6917
    %7220 = vmatpush1.bf16.msra.mxu0 %v6916
    %7221 = vmatprep.subr.bf16.mxu0 %v6921
    %7222 = vmatpush1.bf16.msra.mxu0 %v6920
    %7223 = vmatprep.subr.bf16.mxu0 %v6925
    %7224 = vmatpush1.bf16.msra.mxu0 %v6924
    %7225 = vmatprep.subr.bf16.mxu0 %v6929
    %7226 = vmatpush1.bf16.msra.mxu0 %v6928
    %7227 = vmatprep.subr.bf16.mxu0 %v6933
    %7228 = vmatpush1.bf16.msra.mxu0 %v6932
    %7229 = vmatprep.subr.bf16.mxu0 %v6937
    %7230 = vmatpush1.bf16.msra.mxu0 %v6936
    %7231 = vmatprep.subr.bf16.mxu0 %v6941
    %7232 = vmatpush1.bf16.msra.mxu0 %v6940
    %7233 = vmatprep.subr.bf16.mxu0 %v6945
    %7234 = vmatpush1.bf16.msra.mxu0 %v6944
    %7235 = vmatprep.mubr.bf16.mxu0 %v6266
    %7236 = vmatmul.mubr.bf16.gmra.mrb[0].mxu0 %v6265
    %v7237 = vpop.f32.mrb[0].mxu0
    %v7238 = vadd.f32 %v7195, %v7237
    %v7239 = vpop.f32.mrb[0].mxu0
    %v7240 = vadd.f32 %v7197, %v7239
    %v7241 = vpop.f32.mrb[0].mxu0
    %v7242 = vadd.f32 %v7199, %v7241
    %v7243 = vpop.f32.mrb[0].mxu0
    %v7244 = vadd.f32 %v7201, %v7243
    %7245 = vdwg.mxu0
    %v7246 = vmax.f32 %v7152, 0.0
    %v7247 = vmax.f32 %v7154, 0.0
    %v7248 = vmax.f32 %v7238, 0.0
    %v7249 = vmax.f32 %v7240, 0.0
    %v7250 = vmax.f32 %v7156, 0.0
    %v7251 = vmax.f32 %v7158, 0.0
    %v7252 = vmax.f32 %v7242, 0.0
    %v7253 = vmax.f32 %v7244, 0.0
    %v7254 = vpack.c.bf16 %v7250, %v7246
    %v7255 = vpack.c.bf16 %v7251, %v7247
    %v7256 = vpack.c.bf16 %v7252, %v7248
    %v7257 = vpack.c.bf16 %v7253, %v7249
    %v7258 = vld [vmem:[#allocation17] sm:$0xf]
    %v7259 = vld [vmem:[#allocation17 + $0x4] sm:$0xf]
    %v7260 = vld [vmem:[#allocation17 + $0x8] sm:$0xf]
    %v7261 = vld [vmem:[#allocation17 + $0xc] sm:$0xf]
    %v7262 = vld [vmem:[#allocation17 + $0x10] sm:$0xf]
    %v7263 = vld [vmem:[#allocation17 + $0x14] sm:$0xf]
    %v7264 = vld [vmem:[#allocation17 + $0x18] sm:$0xf]
    %v7265 = vld [vmem:[#allocation17 + $0x1c] sm:$0xf]
    %v7266 = vld [vmem:[#allocation17 + $0x20] sm:$0xf]
    %v7267 = vld [vmem:[#allocation17 + $0x24] sm:$0xf]
    %v7268 = vld [vmem:[#allocation17 + $0x28] sm:$0xf]
    %v7269 = vld [vmem:[#allocation17 + $0x2c] sm:$0xf]
    %v7270 = vld [vmem:[#allocation17 + $0x30] sm:$0xf]
    %v7271 = vld [vmem:[#allocation17 + $0x34] sm:$0xf]
    %v7272 = vld [vmem:[#allocation17 + $0x38] sm:$0xf]
    %v7273 = vld [vmem:[#allocation17 + $0x3c] sm:$0xf]
    %v7274 = vld [vmem:[#allocation17 + $0x40] sm:$0xf]
    %v7275 = vld [vmem:[#allocation17 + $0x44] sm:$0xf]
    %v7276 = vld [vmem:[#allocation17 + $0x48] sm:$0xf]
    %v7277 = vld [vmem:[#allocation17 + $0x4c] sm:$0xf]
    %v7278 = vld [vmem:[#allocation17 + $0x50] sm:$0xf]
    %v7279 = vld [vmem:[#allocation17 + $0x54] sm:$0xf]
    %v7280 = vld [vmem:[#allocation17 + $0x58] sm:$0xf]
    %v7281 = vld [vmem:[#allocation17 + $0x5c] sm:$0xf]
    %v7282 = vld [vmem:[#allocation17 + $0x60] sm:$0xf]
    %v7283 = vld [vmem:[#allocation17 + $0x64] sm:$0xf]
    %v7284 = vld [vmem:[#allocation17 + $0x68] sm:$0xf]
    %v7285 = vld [vmem:[#allocation17 + $0x6c] sm:$0xf]
    %v7286 = vld [vmem:[#allocation17 + $0x70] sm:$0xf]
    %v7287 = vld [vmem:[#allocation17 + $0x74] sm:$0xf]
    %v7288 = vld [vmem:[#allocation17 + $0x78] sm:$0xf]
    %v7289 = vld [vmem:[#allocation17 + $0x7c] sm:$0xf]
    %v7290 = vld [vmem:[#allocation17 + $0x80] sm:$0xf]
    %v7291 = vld [vmem:[#allocation17 + $0x84] sm:$0xf]
    %v7292 = vld [vmem:[#allocation17 + $0x88] sm:$0xf]
    %v7293 = vld [vmem:[#allocation17 + $0x8c] sm:$0xf]
    %v7294 = vld [vmem:[#allocation17 + $0x90] sm:$0xf]
    %v7295 = vld [vmem:[#allocation17 + $0x94] sm:$0xf]
    %v7296 = vld [vmem:[#allocation17 + $0x98] sm:$0xf]
    %v7297 = vld [vmem:[#allocation17 + $0x9c] sm:$0xf]
    %v7298 = vld [vmem:[#allocation17 + $0xa0] sm:$0xf]
    %v7299 = vld [vmem:[#allocation17 + $0xa4] sm:$0xf]
    %v7300 = vld [vmem:[#allocation17 + $0xa8] sm:$0xf]
    %v7301 = vld [vmem:[#allocation17 + $0xac] sm:$0xf]
    %v7302 = vld [vmem:[#allocation17 + $0xb0] sm:$0xf]
    %v7303 = vld [vmem:[#allocation17 + $0xb4] sm:$0xf]
    %v7304 = vld [vmem:[#allocation17 + $0xb8] sm:$0xf]
    %v7305 = vld [vmem:[#allocation17 + $0xbc] sm:$0xf]
    %v7306 = vld [vmem:[#allocation17 + $0xc0] sm:$0xf]
    %v7307 = vld [vmem:[#allocation17 + $0xc4] sm:$0xf]
    %v7308 = vld [vmem:[#allocation17 + $0xc8] sm:$0xf]
    %v7309 = vld [vmem:[#allocation17 + $0xcc] sm:$0xf]
    %v7310 = vld [vmem:[#allocation17 + $0xd0] sm:$0xf]
    %v7311 = vld [vmem:[#allocation17 + $0xd4] sm:$0xf]
    %v7312 = vld [vmem:[#allocation17 + $0xd8] sm:$0xf]
    %v7313 = vld [vmem:[#allocation17 + $0xdc] sm:$0xf]
    %v7314 = vld [vmem:[#allocation17 + $0xe0] sm:$0xf]
    %v7315 = vld [vmem:[#allocation17 + $0xe4] sm:$0xf]
    %v7316 = vld [vmem:[#allocation17 + $0xe8] sm:$0xf]
    %v7317 = vld [vmem:[#allocation17 + $0xec] sm:$0xf]
    %v7318 = vld [vmem:[#allocation17 + $0xf0] sm:$0xf]
    %v7319 = vld [vmem:[#allocation17 + $0xf4] sm:$0xf]
    %v7320 = vld [vmem:[#allocation17 + $0xf8] sm:$0xf]
    %v7321 = vld [vmem:[#allocation17 + $0xfc] sm:$0xf]
    %v7322 = vld [vmem:[#allocation19] sm:$0x1]
    %v7323 = vunpack.c.l.bf16 %v7322
    %v7324 = vlaneseq
    %v7325 = vshrl.u32 %v7324, 7
    %v7326 = vsub.s32 0, %v7325
    %v7327 = vrot.slane %v7323, %v7326
    %v7392 = vunpack.c.l.b16 %v7258
    %v7393 = vunpack.c.l.b16 %v7259
    %v7394 = vunpack.c.l.b16 %v7260
    %v7395 = vunpack.c.l.b16 %v7261
    %v7396 = vunpack.c.l.b16 %v7262
    %v7397 = vunpack.c.l.b16 %v7263
    %v7398 = vunpack.c.l.b16 %v7264
    %v7399 = vunpack.c.l.b16 %v7265
    %v7400 = vunpack.c.l.b16 %v7266
    %v7401 = vunpack.c.l.b16 %v7267
    %v7402 = vunpack.c.l.b16 %v7268
    %v7403 = vunpack.c.l.b16 %v7269
    %v7404 = vunpack.c.l.b16 %v7270
    %v7405 = vunpack.c.l.b16 %v7271
    %v7406 = vunpack.c.l.b16 %v7272
    %v7407 = vunpack.c.l.b16 %v7273
    %v7408 = vunpack.c.l.b16 %v7274
    %v7409 = vunpack.c.l.b16 %v7275
    %v7410 = vunpack.c.l.b16 %v7276
    %v7411 = vunpack.c.l.b16 %v7277
    %v7412 = vunpack.c.l.b16 %v7278
    %v7413 = vunpack.c.l.b16 %v7279
    %v7414 = vunpack.c.l.b16 %v7280
    %v7415 = vunpack.c.l.b16 %v7281
    %v7416 = vunpack.c.l.b16 %v7282
    %v7417 = vunpack.c.l.b16 %v7283
    %v7418 = vunpack.c.l.b16 %v7284
    %v7419 = vunpack.c.l.b16 %v7285
    %v7420 = vunpack.c.l.b16 %v7286
    %v7421 = vunpack.c.l.b16 %v7287
    %v7422 = vunpack.c.l.b16 %v7288
    %v7423 = vunpack.c.l.b16 %v7289
    %v7424 = vunpack.c.l.b16 %v7290
    %v7425 = vunpack.c.l.b16 %v7291
    %v7426 = vunpack.c.l.b16 %v7292
    %v7427 = vunpack.c.l.b16 %v7293
    %v7428 = vunpack.c.l.b16 %v7294
    %v7429 = vunpack.c.l.b16 %v7295
    %v7430 = vunpack.c.l.b16 %v7296
    %v7431 = vunpack.c.l.b16 %v7297
    %v7432 = vunpack.c.l.b16 %v7298
    %v7433 = vunpack.c.l.b16 %v7299
    %v7434 = vunpack.c.l.b16 %v7300
    %v7435 = vunpack.c.l.b16 %v7301
    %v7436 = vunpack.c.l.b16 %v7302
    %v7437 = vunpack.c.l.b16 %v7303
    %v7438 = vunpack.c.l.b16 %v7304
    %v7439 = vunpack.c.l.b16 %v7305
    %v7440 = vunpack.c.l.b16 %v7306
    %v7441 = vunpack.c.l.b16 %v7307
    %v7442 = vunpack.c.l.b16 %v7308
    %v7443 = vunpack.c.l.b16 %v7309
    %v7444 = vunpack.c.l.b16 %v7310
    %v7445 = vunpack.c.l.b16 %v7311
    %v7446 = vunpack.c.l.b16 %v7312
    %v7447 = vunpack.c.l.b16 %v7313
    %v7448 = vunpack.c.l.b16 %v7314
    %v7449 = vunpack.c.l.b16 %v7315
    %v7450 = vunpack.c.l.b16 %v7316
    %v7451 = vunpack.c.l.b16 %v7317
    %v7452 = vunpack.c.l.b16 %v7318
    %v7453 = vunpack.c.l.b16 %v7319
    %v7454 = vunpack.c.l.b16 %v7320
    %v7455 = vunpack.c.l.b16 %v7321
    %v7456 = vpack.c.b16 %v7393, %v7392
    %v7457 = vpack.c.b16 %v7395, %v7394
    %v7458 = vpack.c.b16 %v7397, %v7396
    %v7459 = vpack.c.b16 %v7399, %v7398
    %v7460 = vpack.c.b16 %v7401, %v7400
    %v7461 = vpack.c.b16 %v7403, %v7402
    %v7462 = vpack.c.b16 %v7405, %v7404
    %v7463 = vpack.c.b16 %v7407, %v7406
    %v7464 = vpack.c.b16 %v7409, %v7408
    %v7465 = vpack.c.b16 %v7411, %v7410
    %v7466 = vpack.c.b16 %v7413, %v7412
    %v7467 = vpack.c.b16 %v7415, %v7414
    %v7468 = vpack.c.b16 %v7417, %v7416
    %v7469 = vpack.c.b16 %v7419, %v7418
    %v7470 = vpack.c.b16 %v7421, %v7420
    %v7471 = vpack.c.b16 %v7423, %v7422
    %v7472 = vpack.c.b16 %v7425, %v7424
    %v7473 = vpack.c.b16 %v7427, %v7426
    %v7474 = vpack.c.b16 %v7429, %v7428
    %v7475 = vpack.c.b16 %v7431, %v7430
    %v7476 = vpack.c.b16 %v7433, %v7432
    %v7477 = vpack.c.b16 %v7435, %v7434
    %v7478 = vpack.c.b16 %v7437, %v7436
    %v7479 = vpack.c.b16 %v7439, %v7438
    %v7480 = vpack.c.b16 %v7441, %v7440
    %v7481 = vpack.c.b16 %v7443, %v7442
    %v7482 = vpack.c.b16 %v7445, %v7444
    %v7483 = vpack.c.b16 %v7447, %v7446
    %v7484 = vpack.c.b16 %v7449, %v7448
    %v7485 = vpack.c.b16 %v7451, %v7450
    %v7486 = vpack.c.b16 %v7453, %v7452
    %v7487 = vpack.c.b16 %v7455, %v7454
    %7520 = vmatprep.subr.bf16.mxu0 0
    %7521 = vmatpush1.bf16.msra.mxu0 %v7456
    %7522 = vmatprep.subr.bf16.mxu0 0
    %7523 = vmatpush1.bf16.msra.mxu0 %v7457
    %7524 = vmatprep.subr.bf16.mxu0 0
    %7525 = vmatpush1.bf16.msra.mxu0 %v7458
    %7526 = vmatprep.subr.bf16.mxu0 0
    %7527 = vmatpush1.bf16.msra.mxu0 %v7459
    %7528 = vmatprep.subr.bf16.mxu0 0
    %7529 = vmatpush1.bf16.msra.mxu0 %v7460
    %7530 = vmatprep.subr.bf16.mxu0 0
    %7531 = vmatpush1.bf16.msra.mxu0 %v7461
    %7532 = vmatprep.subr.bf16.mxu0 0
    %7533 = vmatpush1.bf16.msra.mxu0 %v7462
    %7534 = vmatprep.subr.bf16.mxu0 0
    %7535 = vmatpush1.bf16.msra.mxu0 %v7463
    %7536 = vmatprep.subr.bf16.mxu0 0
    %7537 = vmatpush1.bf16.msra.mxu0 %v7464
    %7538 = vmatprep.subr.bf16.mxu0 0
    %7539 = vmatpush1.bf16.msra.mxu0 %v7465
    %7540 = vmatprep.subr.bf16.mxu0 0
    %7541 = vmatpush1.bf16.msra.mxu0 %v7466
    %7542 = vmatprep.subr.bf16.mxu0 0
    %7543 = vmatpush1.bf16.msra.mxu0 %v7467
    %7544 = vmatprep.subr.bf16.mxu0 0
    %7545 = vmatpush1.bf16.msra.mxu0 %v7468
    %7546 = vmatprep.subr.bf16.mxu0 0
    %7547 = vmatpush1.bf16.msra.mxu0 %v7469
    %7548 = vmatprep.subr.bf16.mxu0 0
    %7549 = vmatpush1.bf16.msra.mxu0 %v7470
    %7550 = vmatprep.subr.bf16.mxu0 0
    %7551 = vmatpush1.bf16.msra.mxu0 %v7471
    %7552 = vmatprep.mubr.bf16.mxu0 %v7255
    %7553 = vmatmul.mubr.bf16.gmra.mrb[0].mxu0 %v7254
    %v7554 = vpop.f32.mrb[0].mxu0
    %v7555 = vadd.f32 %v7327, %v7554
    %v7556 = vpop.f32.mrb[0].mxu0
    %v7557 = vpop.f32.mrb[0].mxu0
    %v7558 = vadd.f32 %v7327, %v7557
    %v7559 = vpop.f32.mrb[0].mxu0
    %7560 = vdwg.mxu0
    %7561 = vmatprep.subr.bf16.mxu0 0
    %7562 = vmatpush1.bf16.msra.mxu0 %v7472
    %7563 = vmatprep.subr.bf16.mxu0 0
    %7564 = vmatpush1.bf16.msra.mxu0 %v7473
    %7565 = vmatprep.subr.bf16.mxu0 0
    %7566 = vmatpush1.bf16.msra.mxu0 %v7474
    %7567 = vmatprep.subr.bf16.mxu0 0
    %7568 = vmatpush1.bf16.msra.mxu0 %v7475
    %7569 = vmatprep.subr.bf16.mxu0 0
    %7570 = vmatpush1.bf16.msra.mxu0 %v7476
    %7571 = vmatprep.subr.bf16.mxu0 0
    %7572 = vmatpush1.bf16.msra.mxu0 %v7477
    %7573 = vmatprep.subr.bf16.mxu0 0
    %7574 = vmatpush1.bf16.msra.mxu0 %v7478
    %7575 = vmatprep.subr.bf16.mxu0 0
    %7576 = vmatpush1.bf16.msra.mxu0 %v7479
    %7577 = vmatprep.subr.bf16.mxu0 0
    %7578 = vmatpush1.bf16.msra.mxu0 %v7480
    %7579 = vmatprep.subr.bf16.mxu0 0
    %7580 = vmatpush1.bf16.msra.mxu0 %v7481
    %7581 = vmatprep.subr.bf16.mxu0 0
    %7582 = vmatpush1.bf16.msra.mxu0 %v7482
    %7583 = vmatprep.subr.bf16.mxu0 0
    %7584 = vmatpush1.bf16.msra.mxu0 %v7483
    %7585 = vmatprep.subr.bf16.mxu0 0
    %7586 = vmatpush1.bf16.msra.mxu0 %v7484
    %7587 = vmatprep.subr.bf16.mxu0 0
    %7588 = vmatpush1.bf16.msra.mxu0 %v7485
    %7589 = vmatprep.subr.bf16.mxu0 0
    %7590 = vmatpush1.bf16.msra.mxu0 %v7486
    %7591 = vmatprep.subr.bf16.mxu0 0
    %7592 = vmatpush1.bf16.msra.mxu0 %v7487
    %7593 = vmatprep.mubr.bf16.mxu0 %v7257
    %7594 = vmatmul.mubr.bf16.gmra.mrb[0].mxu0 %v7256
    %v7595 = vpop.f32.mrb[0].mxu0
    %v7596 = vadd.f32 %v7555, %v7595
    %v7597 = vpop.f32.mrb[0].mxu0
    %v7598 = vpop.f32.mrb[0].mxu0
    %v7599 = vadd.f32 %v7558, %v7598
    %v7600 = vpop.f32.mrb[0].mxu0
    %7601 = vdwg.mxu0
    %7602 = vmax.xlane.f32.xlu0 %v7596
    %v7603 = vpop.xlane.xlu0 %7602
    %7604 = vmax.xlane.f32.xlu0 %v7599
    %v7605 = vpop.xlane.xlu0 %7604
    %v7606 = vsub.f32 %v7596, %v7603
    %v7607 = vsub.f32 %v7599, %v7605
    %v7608 = vmul.f32 %v7606, 1.442695
    %v7609 = vpow.pop %v7608
    %v7610 = vmul.f32 %v7607, 1.442695
    %v7611 = vpow.pop %v7610
    %7612 = vadd.xlane.f32.xlu0 %v7609
    %v7613 = vpop.xlane.xlu0 %7612
    %7614 = vadd.xlane.f32.xlu0 %v7611
    %v7615 = vpop.xlane.xlu0 %7614
    %v7616 = vrcp.pop %v7613
    %v7617 = vrcp.pop %v7615
    %v7618 = vmul.f32 %v7609, %v7616
    %v7619 = vmul.f32 %v7611, %v7617
    %7620 = vst [vmem:[#allocation20] sm:$0xff] %v7618
    %7621 = vst [vmem:[#allocation20 + $0x8] sm:$0xff] %v7619
    // Predicated region
    $region90: #{tpu_custom_call.1} parent=1 // pred_check
      _
    $region91: #{tpu_custom_call.1} parent=1 // pred_check_branch
      %7623 = sbr.rel (0) target = $region93
    $region92: #{tpu_custom_call.1} parent=1 // pred_region
      %s7625 = ssub.s32 256, 256
      %7626 = vsyncadd [#allocation4], %s7625
      %s7627 = sshll.u32 [#allocation20], 4
      %s7628 = int_to_ptr.vmem [resolvable:$true] %s7627
      %7633 = dma.vmem_to_hbm [thread:$0]  %s7628, 256, %s11, [#allocation4], 128, 128, 8
    $region93: #{tpu_custom_call.1} parent=1 // pred_fallthru
      _
    // Predicated region
    $region94: #{tpu_custom_call.1} parent=1 // pred_check
      _
    $region95: #{tpu_custom_call.1} parent=1 // pred_check_branch
      %7635 = sbr.rel (0) target = $region97
    $region96: #{tpu_custom_call.1} parent=1 // pred_region
      %7636 = dma.done [#allocation4], 256
    $region97: #{tpu_custom_call.1} parent=1 // pred_fallthru
      _
    %7637 = vsyncpa [#allocation3], 1
    %7638 = vsyncpa [#allocation6], 1
    %7639 = vsyncpa [#allocation9], 1
    %7640 = vsyncpa [#allocation12], 1
    %7641 = vsyncpa [#allocation15], 1
    %7642 = vsyncpa [#allocation18], 1
    %7643 = vsyncpa [#allocation4], 1

</llo_original>
